<compile_context>
chip_gen: v5e
topology: v5e:2x2
jax: 0.10.0
libtpu: 0.0.40
codegen_flags: <defaults>
</compile_context>

<pallas_src>
import functools
import math

import jax
import jax.numpy as jnp
from jax import lax
from jax.experimental import pallas as pl
from jax.experimental.pallas import tpu as pltpu


# ----------------------------- in-kernel helpers -----------------------------

def _layer_norm(x, g, b, eps=1e-5):
    mean = jnp.mean(x, axis=-1, keepdims=True)
    var = jnp.mean((x - mean) ** 2, axis=-1, keepdims=True)
    return (x - mean) * lax.rsqrt(var + eps) * g + b


def _mha_fold_o(x_q, x_kv, masked, wq, bq, wk, bk, wv, bv, wo, num_heads,
                approx_recip, attn_write=None):
    """Multi-head attention with W_o folded into the head loop.

    x_q: (Lq, D), x_kv: (Lk, D); wq/wk/wv refs: (H, D, Dh); bq/bk/bv refs: (H, 1, Dh);
    wo ref: (H, Dh, D).  The 1/sqrt(Dh) scale is pre-folded into wq/bq.
    masked: (Lq, Lk) bool, True = masked out.  Returns (Lq, D) = sum_h ctx_h @ Wo_h."""
    Lq = x_q.shape[0]
    out_d = wo.shape[-1]
    acc = jnp.zeros((Lq, out_d), jnp.float32)
    for h in range(num_heads):                      # static unroll, leading-axis ref indexing
        qh = jnp.dot(x_q, wq[h], preferred_element_type=jnp.float32) + bq[h]
        kh = jnp.dot(x_kv, wk[h], preferred_element_type=jnp.float32) + bk[h]
        vh = jnp.dot(x_kv, wv[h], preferred_element_type=jnp.float32) + bv[h]
        s = lax.dot_general(qh, kh, (((1,), (1,)), ((), ())),
                            preferred_element_type=jnp.float32)   # (Lq, Lk)
        s = jnp.where(masked, -1e15, s)                            # same fill as torch ref
        s = s - jnp.max(s, axis=-1, keepdims=True)                 # stable softmax
        e = jnp.exp(s)
        p = e * pl.reciprocal(jnp.sum(e, axis=-1, keepdims=True), approx=approx_recip)
        if attn_write is not None:
            attn_write(h, p)                                       # direct per-head writeback
        ctx_h = jnp.dot(p, vh, preferred_element_type=jnp.float32)
        acc = acc + jnp.dot(ctx_h, wo[h], preferred_element_type=jnp.float32)
    return acc


# ----------------------- fused all-layers decoder kernel ----------------------

def _decoder_stack_kernel(num_heads,
                          x_ref, enc_ref, tmask_ref, smask_ref,
                          wq_s, bq_s, wk_s, bk_s, wv_s, bv_s, wo_s, bo_s, ln1_g, ln1_b,
                          wq_c, bq_c, wk_c, bk_c, wv_c, bv_c, wo_c, bo_c, ln2_g, ln2_b,
                          ff_w1, ff_b1, ff_w2, ff_b2, ln3_g, ln3_b,
                          out_ref, attn_ref, x_scr):
    layer = pl.program_id(1)
    last_layer = pl.num_programs(1) - 1

    @pl.when(layer == 0)
    def _():                                  # load the embedding only on the first layer
        x_scr[...] = x_ref[...]

    x = x_scr[...]                            # (Lq, D) running activation (VMEM resident)
    enc = enc_ref[...]                        # (Lk_pad, D), zero-padded rows are masked
    Lq = x.shape[0]
    Lk = enc.shape[0]

    tmasked = jnp.broadcast_to(tmask_ref[...] == 0.0, (Lq, Lq))     # hoisted broadcasts
    smasked = jnp.broadcast_to(smask_ref[...] == 0.0, (Lq, Lk))

    # --- masked self-attention (scale pre-folded into Wq, Wo folded into head loop) ---
    sa = _mha_fold_o(x, x, tmasked, wq_s, bq_s, wk_s, bk_s, wv_s, bv_s, wo_s,
                     num_heads, approx_recip=True)
    x = _layer_norm(x + sa + bo_s[...], ln1_g[...], ln1_b[...])

    # --- encoder-decoder cross attention; probs written only for the last layer ---
    def write_attn(h, p):
        @pl.when(layer == last_layer)
        def _():
            attn_ref[h] = p                   # (Lq, Lk_pad) lane-dense store

    ca = _mha_fold_o(x, enc, smasked, wq_c, bq_c, wk_c, bk_c, wv_c, bv_c, wo_c,
                     num_heads, approx_recip=False, attn_write=write_attn)
    x = _layer_norm(x + ca + bo_c[...], ln2_g[...], ln2_b[...])

    # --- pointwise feed-forward ---
    h1 = jnp.maximum(
        jnp.dot(x, ff_w1[...], preferred_element_type=jnp.float32) + ff_b1[...], 0.0)
    ff = jnp.dot(h1, ff_w2[...], preferred_element_type=jnp.float32) + ff_b2[...]
    x = _layer_norm(x + ff, ln3_g[...], ln3_b[...])

    x_scr[...] = x                            # carry to the next layer (same VMEM buffer)

    @pl.when(layer == last_layer)
    def _():
        out_ref[...] = x


_WEIGHT_NAMES = (
    "wq_s", "bq_s", "wk_s", "bk_s", "wv_s", "bv_s", "wo_s", "bo_s", "ln1_g", "ln1_b",
    "wq_c", "bq_c", "wk_c", "bk_c", "wv_c", "bv_c", "wo_c", "bo_c", "ln2_g", "ln2_b",
    "ff_w1", "ff_b1", "ff_w2", "ff_b2", "ln3_g", "ln3_b",
)


def decoder_stack(stack, x_emb, enc, smask, tmask, num_heads):
    """x_emb: (B, Lq, D), enc: (B, Lk_pad, D), smask: (B, Ms, Lk_pad), tmask: (B, Mq, Lq).
    `stack` maps each weight name to a (num_layers, ...) stacked array."""
    B, Lq, D = x_emb.shape
    Lk = enc.shape[1]
    Mq = tmask.shape[1]
    Ms = smask.shape[1]
    H = num_heads
    NL = stack["wq_s"].shape[0]

    weights = tuple(stack[n] for n in _WEIGHT_NAMES)

    def wspec(arr):                               # per-layer weight block, indexed by layer
        nrest = arr.ndim - 1
        return pl.BlockSpec((None,) + arr.shape[1:],
                            lambda b, l, nrest=nrest: (l,) + (0,) * nrest)

    in_specs = [
        pl.BlockSpec((None, Lq, D), lambda b, l: (b, 0, 0)),       # embedding (per batch)
        pl.BlockSpec((None, Lk, D), lambda b, l: (b, 0, 0)),       # encoder output
        pl.BlockSpec((None, Mq, Lq), lambda b, l: (b, 0, 0)),      # target mask
        pl.BlockSpec((None, Ms, Lk), lambda b, l: (b, 0, 0)),      # source mask (padded)
    ] + [wspec(w) for w in weights]

    out_shape = (jax.ShapeDtypeStruct((B, Lq, D), jnp.float32),
                 jax.ShapeDtypeStruct((B, H, Lq, Lk), jnp.float32))
    out_specs = (pl.BlockSpec((None, Lq, D), lambda b, l: (b, 0, 0)),
                 pl.BlockSpec((None, H, Lq, Lk), lambda b, l: (b, 0, 0, 0)))

    # VMEM budget: one layer's weights (double-buffered by the pipeline) + activations.
    per_layer_w_bytes = sum(4 * math.prod(w.shape[1:]) for w in weights)
    act_bytes = 4 * (2 * Lq * D + Lk * D + Mq * Lq + Ms * Lk + H * Lq * Lk)
    vmem_limit = int(max(32 * 2 ** 20, min(48 * 2 ** 20,
                                           4 * (per_layer_w_bytes + act_bytes))))

    kernel = functools.partial(_decoder_stack_kernel, H)
    out, attn = pl.pallas_call(
        kernel,
        grid=(B, NL),
        out_shape=out_shape,
        in_specs=in_specs,
        out_specs=out_specs,
        scratch_shapes=[pltpu.VMEM((Lq, D), jnp.float32)],
        compiler_params=pltpu.CompilerParams(
            dimension_semantics=("parallel", "arbitrary"),
            vmem_limit_bytes=vmem_limit),
    )(x_emb, enc, tmask, smask, *weights)
    return out, attn


# ------------------------------ output projection -----------------------------

def _out_proj_kernel(x_ref, w_ref, b_ref, o_ref):
    o_ref[...] = (jnp.dot(x_ref[...], w_ref[...], preferred_element_type=jnp.float32)
                  + b_ref[...])


def output_projection(x2d, w_pad, b_pad):
    """x2d: (M, D); w_pad: (D, Vp), b_pad: (1, Vp) with Vp a multiple of 128."""
    M, K = x2d.shape
    Vp = w_pad.shape[1]
    tn = 512 if Vp % 512 == 0 else 128
    tm = min(256, ((M + 7) // 8) * 8)
    M_pad = ((M + tm - 1) // tm) * tm
    if M_pad != M:
        x2d = jnp.pad(x2d, ((0, M_pad - M), (0, 0)))

    out = pl.pallas_call(
        _out_proj_kernel,
        grid=(M_pad // tm, Vp // tn),
        out_shape=jax.ShapeDtypeStruct((M_pad, Vp), jnp.float32),
        in_specs=[
            pl.BlockSpec((tm, K), lambda i, j: (i, 0)),
            pl.BlockSpec((K, tn), lambda i, j: (0, j)),
            pl.BlockSpec((1, tn), lambda i, j: (0, j)),
        ],
        out_specs=pl.BlockSpec((tm, tn), lambda i, j: (i, j)),
        compiler_params=pltpu.CompilerParams(
            dimension_semantics=("parallel", "parallel"),
            vmem_limit_bytes=32 * 2 ** 20),
    )(x2d, w_pad, b_pad)
    return out[:M]


# ------------------------------- full forward ---------------------------------

@functools.partial(jax.jit, static_argnames=("num_heads", "out_dim"))
def decoder_forward(params, target_tokens, enc_src, src_mask, tgt_mask, *, num_heads, out_dim):
    B, L = target_tokens.shape
    D = params["tok_emb"].shape[1]
    Lk = enc_src.shape[1]
    Lk_pad = ((Lk + 127) // 128) * 128        # lane-dense cross-attention key dim

    # Token + positional embedding (data-dependent gather left to XLA).  sqrt(D) is
    # pre-folded into tok_emb; dropout is identity in eval mode.
    positions = jnp.arange(L)[None, :]
    x = params["tok_emb"][target_tokens] + params["pos_emb"][positions]

    tmask = tgt_mask[:, 0].astype(jnp.float32)                    # (B, Mq, L)
    smask = src_mask[:, 0].astype(jnp.float32)                    # (B, Ms, Lk)
    smask = jnp.pad(smask, ((0, 0), (0, 0), (0, Lk_pad - Lk)))    # padded keys masked (0)
    enc_p = jnp.pad(enc_src.astype(jnp.float32),
                    ((0, 0), (0, Lk_pad - Lk), (0, 0)))

    x, attn = decoder_stack(params["stack"], x, enc_p, smask, tmask, num_heads)
    attn = attn[:, :, :, :Lk]                                     # drop padded key columns

    logits = output_projection(x.reshape(B * L, D), params["w_out_p"], params["b_out_p"])
    logits = logits[:, :out_dim].reshape(B, L, out_dim)
    return logits, attn


# ------------------------------- parameter init --------------------------------

def init_params(key, vocab, hidden, num_layers, num_heads, ff_dim, max_length=100):
    D, H = hidden, num_heads
    Dh = D // H
    scale = math.sqrt(Dh)

    def nrm(k, shape, s=0.02):
        return jax.random.normal(k, shape, dtype=jnp.float32) * s

    keys = jax.random.split(key, 3 + num_layers)
    vocab_pad = ((vocab + 127) // 128) * 128
    w_out = nrm(keys[2], (D, vocab))

    params = {
        # sqrt(D) embedding scale pre-folded into the table
        "tok_emb": nrm(keys[0], (vocab, D)) * math.sqrt(float(D)),
        "pos_emb": nrm(keys[1], (max_length, D)),
        # final projection padded to a lane-dense multiple of 128; sliced back after
        "w_out_p": jnp.zeros((D, vocab_pad), jnp.float32).at[:, :vocab].set(w_out),
        "b_out_p": jnp.zeros((1, vocab_pad), jnp.float32),
    }

    def heads_in(w, b, fold_scale=False):      # x @ w + b, split to (H, D, Dh) / (H, 1, Dh)
        if fold_scale:
            w, b = w / scale, b / scale
        return w.reshape(D, H, Dh).transpose(1, 0, 2), b.reshape(H, 1, Dh)

    layers = []
    for li in range(num_layers):
        ks = jax.random.split(keys[3 + li], 18)
        blk = {}
        # self-attention (1/sqrt(Dh) folded into Wq/bq)
        wq, bq = nrm(ks[0], (D, D)), nrm(ks[1], (D,))
        wk, bk = nrm(ks[2], (D, D)), nrm(ks[3], (D,))
        wv, bv = nrm(ks[4], (D, D)), nrm(ks[5], (D,))
        wo, bo = nrm(ks[6], (D, D)), nrm(ks[7], (D,))
        blk["wq_s"], blk["bq_s"] = heads_in(wq, bq, fold_scale=True)
        blk["wk_s"], blk["bk_s"] = heads_in(wk, bk)
        blk["wv_s"], blk["bv_s"] = heads_in(wv, bv)
        blk["wo_s"], blk["bo_s"] = wo.reshape(H, Dh, D), bo.reshape(1, D)
        blk["ln1_g"], blk["ln1_b"] = jnp.ones((1, D), jnp.float32), jnp.zeros((1, D), jnp.float32)
        # cross-attention
        wq, bq = nrm(ks[8], (D, D)), nrm(ks[9], (D,))
        wk, bk = nrm(ks[10], (D, D)), nrm(ks[11], (D,))
        wv, bv = nrm(ks[12], (D, D)), nrm(ks[13], (D,))
        wo, bo = nrm(ks[14], (D, D)), nrm(ks[15], (D,))
        blk["wq_c"], blk["bq_c"] = heads_in(wq, bq, fold_scale=True)
        blk["wk_c"], blk["bk_c"] = heads_in(wk, bk)
        blk["wv_c"], blk["bv_c"] = heads_in(wv, bv)
        blk["wo_c"], blk["bo_c"] = wo.reshape(H, Dh, D), bo.reshape(1, D)
        blk["ln2_g"], blk["ln2_b"] = jnp.ones((1, D), jnp.float32), jnp.zeros((1, D), jnp.float32)
        # pointwise feed-forward
        blk["ff_w1"], blk["ff_b1"] = nrm(ks[16], (D, ff_dim)), jnp.zeros((1, ff_dim), jnp.float32)
        blk["ff_w2"], blk["ff_b2"] = nrm(ks[17], (ff_dim, D)), jnp.zeros((1, D), jnp.float32)
        blk["ln3_g"], blk["ln3_b"] = jnp.ones((1, D), jnp.float32), jnp.zeros((1, D), jnp.float32)
        layers.append(blk)

    # stack every weight kind along a leading layer axis for the fused kernel
    params["stack"] = {k: jnp.stack([blk[k] for blk in layers]) for k in layers[0]}
    return params


# ------------------------------------ main -------------------------------------

if __name__ == "__main__":
    B = 2          # batch
    L_TGT = 8      # target sequence length
    L_SRC = 10     # encoder (source) sequence length
    D = 32         # hidden_dimension
    H = 4          # num_attention_heads
    FF = 64        # pointwise_ff_dim
    LAYERS = 2     # number_decoder_layers
    VOCAB = 20     # output_dimension

    key = jax.random.PRNGKey(0)
    k_par, k_tok, k_src = jax.random.split(key, 3)

    params = init_params(k_par, VOCAB, D, LAYERS, H, FF)

    target_tokens = jax.random.randint(k_tok, (B, L_TGT), 0, VOCAB, dtype=jnp.int32)
    encoder_src = jax.random.normal(k_src, (B, L_SRC, D), dtype=jnp.float32)

    # source mask: (B, 1, 1, L_SRC); mask out the last source position of batch 1
    source_mask = jnp.ones((B, 1, 1, L_SRC), jnp.float32).at[1, 0, 0, -1].set(0.0)

    # target mask: causal (B, 1, L_TGT, L_TGT)
    causal = jnp.tril(jnp.ones((L_TGT, L_TGT), jnp.float32))
    target_mask = jnp.broadcast_to(causal[None, None], (B, 1, L_TGT, L_TGT))

    out, attn = decoder_forward(params, target_tokens, encoder_src,
                                source_mask, target_mask,
                                num_heads=H, out_dim=VOCAB)
    out = jax.block_until_ready(out)
    attn = jax.block_until_ready(attn)

    assert out.shape == (B, L_TGT, VOCAB)
    assert attn.shape == (B, H, L_TGT, L_SRC)
    assert bool(jnp.all(jnp.isfinite(out)))
    assert bool(jnp.all(jnp.isfinite(attn)))
    # cross-attention rows must sum to ~1 over the (unpadded) source positions
    row_sums = jnp.sum(attn, axis=-1)
    assert bool(jnp.all(jnp.abs(row_sums - 1.0) < 1e-3))
    print("KERNEL_OK")
</pallas_src>

<mosaic_0001>
module attributes {stable_mosaic.version = 11 : i64} {
  func.func @_out_proj_kernel(%arg0: i32, %arg1: i32, %arg2: memref<16x32xf32, #tpu.memory_space<vmem>>, %arg3: memref<32x128xf32, #tpu.memory_space<vmem>>, %arg4: memref<1x128xf32, #tpu.memory_space<vmem>>, %arg5: memref<16x128xf32, #tpu.memory_space<vmem>>) attributes {dimension_semantics = [#tpu.dimension_semantics<parallel>, #tpu.dimension_semantics<parallel>], iteration_bounds = array<i64: 1, 1>, scalar_prefetch = 0 : i64, scratch_operands = 0 : i64, tpu.core_type = #tpu.core_type<tc>, window_params = [{transform_indices = @transform_0, window_bounds = array<i64: 16, 32>}, {transform_indices = @transform_1, window_bounds = array<i64: 32, 128>}, {transform_indices = @transform_2, window_bounds = array<i64: 1, 128>}, {transform_indices = @transform_3, window_bounds = array<i64: 16, 128>}]} {
    %c0 = arith.constant 0 : index
    %c0_0 = arith.constant 0 : index
    %0 = vector.load %arg2[%c0, %c0_0] : memref<16x32xf32, #tpu.memory_space<vmem>>, vector<16x32xf32>
    %c0_1 = arith.constant 0 : index
    %c0_2 = arith.constant 0 : index
    %1 = vector.load %arg3[%c0_1, %c0_2] : memref<32x128xf32, #tpu.memory_space<vmem>>, vector<32x128xf32>
    %cst = arith.constant dense<0.000000e+00> : vector<16x128xf32>
    %2 = tpu.matmul %0, %1, %cst {dimension_numbers = #tpu.dot_dimension_numbers<[1], [0], [0], [1], [0, 0, 1, 1], [], []>} : vector<16x32xf32>, vector<32x128xf32>, vector<16x128xf32> -> vector<16x128xf32>
    %c0_3 = arith.constant 0 : index
    %c0_4 = arith.constant 0 : index
    %3 = vector.load %arg4[%c0_3, %c0_4] : memref<1x128xf32, #tpu.memory_space<vmem>>, vector<1x128xf32>
    %4 = vector.broadcast %3 : vector<1x128xf32> to vector<16x128xf32>
    %5 = arith.addf %2, %4 : vector<16x128xf32>
    %c0_5 = arith.constant 0 : index
    %c0_6 = arith.constant 0 : index
    %6 = vector.load %arg5[%c0_5, %c0_6] : memref<16x128xf32, #tpu.memory_space<vmem>>, vector<16x128xf32>
    tpu.vector_store %arg5[%c0_5, %c0_6], %5 {strides = array<i32>} : memref<16x128xf32, #tpu.memory_space<vmem>>, vector<16x128xf32>,
    return
  }
  func.func @transform_0(%arg0: i32, %arg1: i32) -> (i32, i32) {
    %c0_i32 = arith.constant 0 : i32
    %c0_i32_0 = arith.constant 0 : i32
    return %arg0, %c0_i32 : i32, i32
  }
  func.func @transform_1(%arg0: i32, %arg1: i32) -> (i32, i32) {
    %c0_i32 = arith.constant 0 : i32
    %c0_i32_0 = arith.constant 0 : i32
    return %c0_i32, %arg1 : i32, i32
  }
  func.func @transform_2(%arg0: i32, %arg1: i32) -> (i32, i32) {
    %c0_i32 = arith.constant 0 : i32
    %c0_i32_0 = arith.constant 0 : i32
    return %c0_i32, %arg1 : i32, i32
  }
  func.func @transform_3(%arg0: i32, %arg1: i32) -> (i32, i32) {
    %c0_i32 = arith.constant 0 : i32
    return %arg0, %arg1 : i32, i32
  }
}

module attributes {stable_mosaic.version = 11 : i64} {
  func.func @_decoder_stack_kernel(%arg0: i32, %arg1: i32, %arg2: memref<1x8x32xf32, #tpu.memory_space<vmem>>, %arg3: memref<1x128x32xf32, #tpu.memory_space<vmem>>, %arg4: memref<1x8x8xf32, #tpu.memory_space<vmem>>, %arg5: memref<1x1x128xf32, #tpu.memory_space<vmem>>, %arg6: memref<1x4x32x8xf32, #tpu.memory_space<vmem>>, %arg7: memref<1x4x1x8xf32, #tpu.memory_space<vmem>>, %arg8: memref<1x4x32x8xf32, #tpu.memory_space<vmem>>, %arg9: memref<1x4x1x8xf32, #tpu.memory_space<vmem>>, %arg10: memref<1x4x32x8xf32, #tpu.memory_space<vmem>>, %arg11: memref<1x4x1x8xf32, #tpu.memory_space<vmem>>, %arg12: memref<1x4x8x32xf32, #tpu.memory_space<vmem>>, %arg13: memref<1x1x32xf32, #tpu.memory_space<vmem>>, %arg14: memref<1x1x32xf32, #tpu.memory_space<vmem>>, %arg15: memref<1x1x32xf32, #tpu.memory_space<vmem>>, %arg16: memref<1x4x32x8xf32, #tpu.memory_space<vmem>>, %arg17: memref<1x4x1x8xf32, #tpu.memory_space<vmem>>, %arg18: memref<1x4x32x8xf32, #tpu.memory_space<vmem>>, %arg19: memref<1x4x1x8xf32, #tpu.memory_space<vmem>>, %arg20: memref<1x4x32x8xf32, #tpu.memory_space<vmem>>, %arg21: memref<1x4x1x8xf32, #tpu.memory_space<vmem>>, %arg22: memref<1x4x8x32xf32, #tpu.memory_space<vmem>>, %arg23: memref<1x1x32xf32, #tpu.memory_space<vmem>>, %arg24: memref<1x1x32xf32, #tpu.memory_space<vmem>>, %arg25: memref<1x1x32xf32, #tpu.memory_space<vmem>>, %arg26: memref<1x32x64xf32, #tpu.memory_space<vmem>>, %arg27: memref<1x1x64xf32, #tpu.memory_space<vmem>>, %arg28: memref<1x64x32xf32, #tpu.memory_space<vmem>>, %arg29: memref<1x1x32xf32, #tpu.memory_space<vmem>>, %arg30: memref<1x1x32xf32, #tpu.memory_space<vmem>>, %arg31: memref<1x1x32xf32, #tpu.memory_space<vmem>>, %arg32: memref<1x8x32xf32, #tpu.memory_space<vmem>>, %arg33: memref<1x4x8x128xf32, #tpu.memory_space<vmem>>, %arg34: memref<8x32xf32, #tpu.memory_space<vmem>>) attributes {dimension_semantics = [#tpu.dimension_semantics<parallel>, #tpu.dimension_semantics<arbitrary>], iteration_bounds = array<i64: 2, 2>, scalar_prefetch = 0 : i64, scratch_operands = 1 : i64, tpu.core_type = #tpu.core_type<tc>, window_params = [{transform_indices = @transform_0, window_bounds = array<i64: 1, 8, 32>}, {transform_indices = @transform_1, window_bounds = array<i64: 1, 128, 32>}, {transform_indices = @transform_2, window_bounds = array<i64: 1, 8, 8>}, {transform_indices = @transform_3, window_bounds = array<i64: 1, 1, 128>}, {transform_indices = @transform_4, window_bounds = array<i64: 1, 4, 32, 8>}, {transform_indices = @transform_5, window_bounds = array<i64: 1, 4, 1, 8>}, {transform_indices = @transform_6, window_bounds = array<i64: 1, 4, 32, 8>}, {transform_indices = @transform_7, window_bounds = array<i64: 1, 4, 1, 8>}, {transform_indices = @transform_8, window_bounds = array<i64: 1, 4, 32, 8>}, {transform_indices = @transform_9, window_bounds = array<i64: 1, 4, 1, 8>}, {transform_indices = @transform_10, window_bounds = array<i64: 1, 4, 8, 32>}, {transform_indices = @transform_11, window_bounds = array<i64: 1, 1, 32>}, {transform_indices = @transform_12, window_bounds = array<i64: 1, 1, 32>}, {transform_indices = @transform_13, window_bounds = array<i64: 1, 1, 32>}, {transform_indices = @transform_14, window_bounds = array<i64: 1, 4, 32, 8>}, {transform_indices = @transform_15, window_bounds = array<i64: 1, 4, 1, 8>}, {transform_indices = @transform_16, window_bounds = array<i64: 1, 4, 32, 8>}, {transform_indices = @transform_17, window_bounds = array<i64: 1, 4, 1, 8>}, {transform_indices = @transform_18, window_bounds = array<i64: 1, 4, 32, 8>}, {transform_indices = @transform_19, window_bounds = array<i64: 1, 4, 1, 8>}, {transform_indices = @transform_20, window_bounds = array<i64: 1, 4, 8, 32>}, {transform_indices = @transform_21, window_bounds = array<i64: 1, 1, 32>}, {transform_indices = @transform_22, window_bounds = array<i64: 1, 1, 32>}, {transform_indices = @transform_23, window_bounds = array<i64: 1, 1, 32>}, {transform_indices = @transform_24, window_bounds = array<i64: 1, 32, 64>}, {transform_indices = @transform_25, window_bounds = array<i64: 1, 1, 64>}, {transform_indices = @transform_26, window_bounds = array<i64: 1, 64, 32>}, {transform_indices = @transform_27, window_bounds = array<i64: 1, 1, 32>}, {transform_indices = @transform_28, window_bounds = array<i64: 1, 1, 32>}, {transform_indices = @transform_29, window_bounds = array<i64: 1, 1, 32>}, {transform_indices = @transform_30, window_bounds = array<i64: 1, 8, 32>}, {transform_indices = @transform_31, window_bounds = array<i64: 1, 4, 8, 128>}]} {
    %c0_i32 = arith.constant 0 : i32
    %0 = arith.cmpi eq, %arg1, %c0_i32 : i32
    %1 = arith.extui %0 : i1 to i32
    %c0_i32_0 = arith.constant 0 : i32
    %2 = arith.cmpi ne, %1, %c0_i32_0 : i32
    scf.if %2 {
      %c0_372 = arith.constant 0 : index
      %c0_373 = arith.constant 0 : index
      %c0_374 = arith.constant 0 : index
      %451 = vector.load %arg2[%c0_372, %c0_373, %c0_374] : memref<1x8x32xf32, #tpu.memory_space<vmem>>, vector<1x8x32xf32>
      %452 = vector.shape_cast %451 : vector<1x8x32xf32> to vector<8x32xf32>
      %c0_375 = arith.constant 0 : index
      %c0_376 = arith.constant 0 : index
      %453 = vector.load %arg34[%c0_375, %c0_376] : memref<8x32xf32, #tpu.memory_space<vmem>>, vector<8x32xf32>
      tpu.vector_store %arg34[%c0_375, %c0_376], %452 {strides = array<i32>} : memref<8x32xf32, #tpu.memory_space<vmem>>, vector<8x32xf32>,
    } else {
    }
    %c0 = arith.constant 0 : index
    %c0_1 = arith.constant 0 : index
    %3 = vector.load %arg34[%c0, %c0_1] : memref<8x32xf32, #tpu.memory_space<vmem>>, vector<8x32xf32>
    %c0_2 = arith.constant 0 : index
    %c0_3 = arith.constant 0 : index
    %c0_4 = arith.constant 0 : index
    %4 = vector.load %arg3[%c0_2, %c0_3, %c0_4] : memref<1x128x32xf32, #tpu.memory_space<vmem>>, vector<1x128x32xf32>
    %5 = vector.shape_cast %4 : vector<1x128x32xf32> to vector<128x32xf32>
    %c0_5 = arith.constant 0 : index
    %c0_6 = arith.constant 0 : index
    %c0_7 = arith.constant 0 : index
    %6 = vector.load %arg4[%c0_5, %c0_6, %c0_7] : memref<1x8x8xf32, #tpu.memory_space<vmem>>, vector<1x8x8xf32>
    %7 = vector.shape_cast %6 : vector<1x8x8xf32> to vector<8x8xf32>
    %cst = arith.constant 0.000000e+00 : f32
    %8 = vector.broadcast %cst : f32 to vector<8x8xf32>
    %9 = arith.cmpf oeq, %7, %8 : vector<8x8xf32>
    %c0_8 = arith.constant 0 : index
    %c0_9 = arith.constant 0 : index
    %c0_10 = arith.constant 0 : index
    %10 = vector.load %arg5[%c0_8, %c0_9, %c0_10] : memref<1x1x128xf32, #tpu.memory_space<vmem>>, vector<1x1x128xf32>
    %11 = vector.shape_cast %10 : vector<1x1x128xf32> to vector<1x128xf32>
    %cst_11 = arith.constant 0.000000e+00 : f32
    %12 = vector.broadcast %cst_11 : f32 to vector<1x128xf32>
    %13 = arith.cmpf oeq, %11, %12 : vector<1x128xf32>
    %14 = vector.shape_cast %13 : vector<1x128xi1> to vector<1x128xi1>
    %15 = vector.broadcast %14 : vector<1x128xi1> to vector<8x128xi1>
    %cst_12 = arith.constant 0.000000e+00 : f32
    %16 = vector.broadcast %cst_12 : f32 to vector<8x32xf32>
    %c0_13 = arith.constant 0 : index
    %c0_14 = arith.constant 0 : index
    %c0_15 = arith.constant 0 : index
    %c0_16 = arith.constant 0 : index
    %17 = vector.load %arg6[%c0_13, %c0_14, %c0_15, %c0_16] : memref<1x4x32x8xf32, #tpu.memory_space<vmem>>, vector<1x1x32x8xf32>
    %18 = vector.shape_cast %17 : vector<1x1x32x8xf32> to vector<32x8xf32>
    %cst_17 = arith.constant dense<0.000000e+00> : vector<8x8xf32>
    %19 = tpu.matmul %3, %18, %cst_17 {dimension_numbers = #tpu.dot_dimension_numbers<[1], [0], [0], [1], [0, 0, 1, 1], [], []>} : vector<8x32xf32>, vector<32x8xf32>, vector<8x8xf32> -> vector<8x8xf32>
    %c0_18 = arith.constant 0 : index
    %c0_19 = arith.constant 0 : index
    %c0_20 = arith.constant 0 : index
    %c0_21 = arith.constant 0 : index
    %20 = vector.load %arg7[%c0_18, %c0_19, %c0_20, %c0_21] : memref<1x4x1x8xf32, #tpu.memory_space<vmem>>, vector<1x1x1x8xf32>
    %21 = vector.shape_cast %20 : vector<1x1x1x8xf32> to vector<1x8xf32>
    %22 = vector.broadcast %21 : vector<1x8xf32> to vector<8x8xf32>
    %23 = arith.addf %19, %22 : vector<8x8xf32>
    %c0_22 = arith.constant 0 : index
    %c0_23 = arith.constant 0 : index
    %c0_24 = arith.constant 0 : index
    %c0_25 = arith.constant 0 : index
    %24 = vector.load %arg8[%c0_22, %c0_23, %c0_24, %c0_25] : memref<1x4x32x8xf32, #tpu.memory_space<vmem>>, vector<1x1x32x8xf32>
    %25 = vector.shape_cast %24 : vector<1x1x32x8xf32> to vector<32x8xf32>
    %cst_26 = arith.constant dense<0.000000e+00> : vector<8x8xf32>
    %26 = tpu.matmul %3, %25, %cst_26 {dimension_numbers = #tpu.dot_dimension_numbers<[1], [0], [0], [1], [0, 0, 1, 1], [], []>} : vector<8x32xf32>, vector<32x8xf32>, vector<8x8xf32> -> vector<8x8xf32>
    %c0_27 = arith.constant 0 : index
    %c0_28 = arith.constant 0 : index
    %c0_29 = arith.constant 0 : index
    %c0_30 = arith.constant 0 : index
    %27 = vector.load %arg9[%c0_27, %c0_28, %c0_29, %c0_30] : memref<1x4x1x8xf32, #tpu.memory_space<vmem>>, vector<1x1x1x8xf32>
    %28 = vector.shape_cast %27 : vector<1x1x1x8xf32> to vector<1x8xf32>
    %29 = vector.broadcast %28 : vector<1x8xf32> to vector<8x8xf32>
    %30 = arith.addf %26, %29 : vector<8x8xf32>
    %c0_31 = arith.constant 0 : index
    %c0_32 = arith.constant 0 : index
    %c0_33 = arith.constant 0 : index
    %c0_34 = arith.constant 0 : index
    %31 = vector.load %arg10[%c0_31, %c0_32, %c0_33, %c0_34] : memref<1x4x32x8xf32, #tpu.memory_space<vmem>>, vector<1x1x32x8xf32>
    %32 = vector.shape_cast %31 : vector<1x1x32x8xf32> to vector<32x8xf32>
    %cst_35 = arith.constant dense<0.000000e+00> : vector<8x8xf32>
    %33 = tpu.matmul %3, %32, %cst_35 {dimension_numbers = #tpu.dot_dimension_numbers<[1], [0], [0], [1], [0, 0, 1, 1], [], []>} : vector<8x32xf32>, vector<32x8xf32>, vector<8x8xf32> -> vector<8x8xf32>
    %c0_36 = arith.constant 0 : index
    %c0_37 = arith.constant 0 : index
    %c0_38 = arith.constant 0 : index
    %c0_39 = arith.constant 0 : index
    %34 = vector.load %arg11[%c0_36, %c0_37, %c0_38, %c0_39] : memref<1x4x1x8xf32, #tpu.memory_space<vmem>>, vector<1x1x1x8xf32>
    %35 = vector.shape_cast %34 : vector<1x1x1x8xf32> to vector<1x8xf32>
    %36 = vector.broadcast %35 : vector<1x8xf32> to vector<8x8xf32>
    %37 = arith.addf %33, %36 : vector<8x8xf32>
    %cst_40 = arith.constant dense<0.000000e+00> : vector<8x8xf32>
    %38 = tpu.matmul %23, %30, %cst_40 {dimension_numbers = #tpu.dot_dimension_numbers<[1], [1], [0], [0], [0, 0, 1, 0], [], []>} : vector<8x8xf32>, vector<8x8xf32>, vector<8x8xf32> -> vector<8x8xf32>
    %cst_41 = arith.constant -9.99999986E+14 : f32
    %39 = vector.broadcast %cst_41 : f32 to vector<8x8xf32>
    %40 = arith.select %9, %39, %38 : vector<8x8xi1>, vector<8x8xf32>
    %cst_42 = arith.constant dense<0xFF800000> : vector<8xf32>
    %41 = vector.multi_reduction <maximumf>, %40, %cst_42 [1] : vector<8x8xf32> to vector<8xf32>
    %42 = vector.shape_cast %41 : vector<8xf32> to vector<8x1xf32>
    %43 = vector.broadcast %42 : vector<8x1xf32> to vector<8x8xf32>
    %44 = arith.subf %40, %43 : vector<8x8xf32>
    %45 = math.exp %44 : vector<8x8xf32>
    %cst_43 = arith.constant dense<0.000000e+00> : vector<8xf32>
    %46 = vector.multi_reduction <add>, %45, %cst_43 [1] : vector<8x8xf32> to vector<8xf32>
    %47 = vector.shape_cast %46 : vector<8xf32> to vector<8x1xf32>
    %48 = tpu.reciprocal %47 {approx = true} : vector<8x1xf32> -> vector<8x1xf32>
    %49 = vector.broadcast %48 : vector<8x1xf32> to vector<8x8xf32>
    %50 = arith.mulf %45, %49 : vector<8x8xf32>
    %cst_44 = arith.constant dense<0.000000e+00> : vector<8x8xf32>
    %51 = tpu.matmul %50, %37, %cst_44 {dimension_numbers = #tpu.dot_dimension_numbers<[1], [0], [0], [1], [0, 0, 1, 1], [], []>} : vector<8x8xf32>, vector<8x8xf32>, vector<8x8xf32> -> vector<8x8xf32>
    %c0_45 = arith.constant 0 : index
    %c0_46 = arith.constant 0 : index
    %c0_47 = arith.constant 0 : index
    %c0_48 = arith.constant 0 : index
    %52 = vector.load %arg12[%c0_45, %c0_46, %c0_47, %c0_48] : memref<1x4x8x32xf32, #tpu.memory_space<vmem>>, vector<1x1x8x32xf32>
    %53 = vector.shape_cast %52 : vector<1x1x8x32xf32> to vector<8x32xf32>
    %cst_49 = arith.constant dense<0.000000e+00> : vector<8x32xf32>
    %54 = tpu.matmul %51, %53, %cst_49 {dimension_numbers = #tpu.dot_dimension_numbers<[1], [0], [0], [1], [0, 0, 1, 1], [], []>} : vector<8x8xf32>, vector<8x32xf32>, vector<8x32xf32> -> vector<8x32xf32>
    %55 = arith.addf %16, %54 : vector<8x32xf32>
    %c0_50 = arith.constant 0 : index
    %c1 = arith.constant 1 : index
    %c0_51 = arith.constant 0 : index
    %c0_52 = arith.constant 0 : index
    %56 = vector.load %arg6[%c0_50, %c1, %c0_51, %c0_52] : memref<1x4x32x8xf32, #tpu.memory_space<vmem>>, vector<1x1x32x8xf32>
    %57 = vector.shape_cast %56 : vector<1x1x32x8xf32> to vector<32x8xf32>
    %cst_53 = arith.constant dense<0.000000e+00> : vector<8x8xf32>
    %58 = tpu.matmul %3, %57, %cst_53 {dimension_numbers = #tpu.dot_dimension_numbers<[1], [0], [0], [1], [0, 0, 1, 1], [], []>} : vector<8x32xf32>, vector<32x8xf32>, vector<8x8xf32> -> vector<8x8xf32>
    %c0_54 = arith.constant 0 : index
    %c1_55 = arith.constant 1 : index
    %c0_56 = arith.constant 0 : index
    %c0_57 = arith.constant 0 : index
    %59 = vector.load %arg7[%c0_54, %c1_55, %c0_56, %c0_57] : memref<1x4x1x8xf32, #tpu.memory_space<vmem>>, vector<1x1x1x8xf32>
    %60 = vector.shape_cast %59 : vector<1x1x1x8xf32> to vector<1x8xf32>
    %61 = vector.broadcast %60 : vector<1x8xf32> to vector<8x8xf32>
    %62 = arith.addf %58, %61 : vector<8x8xf32>
    %c0_58 = arith.constant 0 : index
    %c1_59 = arith.constant 1 : index
    %c0_60 = arith.constant 0 : index
    %c0_61 = arith.constant 0 : index
    %63 = vector.load %arg8[%c0_58, %c1_59, %c0_60, %c0_61] : memref<1x4x32x8xf32, #tpu.memory_space<vmem>>, vector<1x1x32x8xf32>
    %64 = vector.shape_cast %63 : vector<1x1x32x8xf32> to vector<32x8xf32>
    %cst_62 = arith.constant dense<0.000000e+00> : vector<8x8xf32>
    %65 = tpu.matmul %3, %64, %cst_62 {dimension_numbers = #tpu.dot_dimension_numbers<[1], [0], [0], [1], [0, 0, 1, 1], [], []>} : vector<8x32xf32>, vector<32x8xf32>, vector<8x8xf32> -> vector<8x8xf32>
    %c0_63 = arith.constant 0 : index
    %c1_64 = arith.constant 1 : index
    %c0_65 = arith.constant 0 : index
    %c0_66 = arith.constant 0 : index
    %66 = vector.load %arg9[%c0_63, %c1_64, %c0_65, %c0_66] : memref<1x4x1x8xf32, #tpu.memory_space<vmem>>, vector<1x1x1x8xf32>
    %67 = vector.shape_cast %66 : vector<1x1x1x8xf32> to vector<1x8xf32>
    %68 = vector.broadcast %67 : vector<1x8xf32> to vector<8x8xf32>
    %69 = arith.addf %65, %68 : vector<8x8xf32>
    %c0_67 = arith.constant 0 : index
    %c1_68 = arith.constant 1 : index
    %c0_69 = arith.constant 0 : index
    %c0_70 = arith.constant 0 : index
    %70 = vector.load %arg10[%c0_67, %c1_68, %c0_69, %c0_70] : memref<1x4x32x8xf32, #tpu.memory_space<vmem>>, vector<1x1x32x8xf32>
    %71 = vector.shape_cast %70 : vector<1x1x32x8xf32> to vector<32x8xf32>
    %cst_71 = arith.constant dense<0.000000e+00> : vector<8x8xf32>
    %72 = tpu.matmul %3, %71, %cst_71 {dimension_numbers = #tpu.dot_dimension_numbers<[1], [0], [0], [1], [0, 0, 1, 1], [], []>} : vector<8x32xf32>, vector<32x8xf32>, vector<8x8xf32> -> vector<8x8xf32>
    %c0_72 = arith.constant 0 : index
    %c1_73 = arith.constant 1 : index
    %c0_74 = arith.constant 0 : index
    %c0_75 = arith.constant 0 : index
    %73 = vector.load %arg11[%c0_72, %c1_73, %c0_74, %c0_75] : memref<1x4x1x8xf32, #tpu.memory_space<vmem>>, vector<1x1x1x8xf32>
    %74 = vector.shape_cast %73 : vector<1x1x1x8xf32> to vector<1x8xf32>
    %75 = vector.broadcast %74 : vector<1x8xf32> to vector<8x8xf32>
    %76 = arith.addf %72, %75 : vector<8x8xf32>
    %cst_76 = arith.constant dense<0.000000e+00> : vector<8x8xf32>
    %77 = tpu.matmul %62, %69, %cst_76 {dimension_numbers = #tpu.dot_dimension_numbers<[1], [1], [0], [0], [0, 0, 1, 0], [], []>} : vector<8x8xf32>, vector<8x8xf32>, vector<8x8xf32> -> vector<8x8xf32>
    %cst_77 = arith.constant -9.99999986E+14 : f32
    %78 = vector.broadcast %cst_77 : f32 to vector<8x8xf32>
    %79 = arith.select %9, %78, %77 : vector<8x8xi1>, vector<8x8xf32>
    %cst_78 = arith.constant dense<0xFF800000> : vector<8xf32>
    %80 = vector.multi_reduction <maximumf>, %79, %cst_78 [1] : vector<8x8xf32> to vector<8xf32>
    %81 = vector.shape_cast %80 : vector<8xf32> to vector<8x1xf32>
    %82 = vector.broadcast %81 : vector<8x1xf32> to vector<8x8xf32>
    %83 = arith.subf %79, %82 : vector<8x8xf32>
    %84 = math.exp %83 : vector<8x8xf32>
    %cst_79 = arith.constant dense<0.000000e+00> : vector<8xf32>
    %85 = vector.multi_reduction <add>, %84, %cst_79 [1] : vector<8x8xf32> to vector<8xf32>
    %86 = vector.shape_cast %85 : vector<8xf32> to vector<8x1xf32>
    %87 = tpu.reciprocal %86 {approx = true} : vector<8x1xf32> -> vector<8x1xf32>
    %88 = vector.broadcast %87 : vector<8x1xf32> to vector<8x8xf32>
    %89 = arith.mulf %84, %88 : vector<8x8xf32>
    %cst_80 = arith.constant dense<0.000000e+00> : vector<8x8xf32>
    %90 = tpu.matmul %89, %76, %cst_80 {dimension_numbers = #tpu.dot_dimension_numbers<[1], [0], [0], [1], [0, 0, 1, 1], [], []>} : vector<8x8xf32>, vector<8x8xf32>, vector<8x8xf32> -> vector<8x8xf32>
    %c0_81 = arith.constant 0 : index
    %c1_82 = arith.constant 1 : index
    %c0_83 = arith.constant 0 : index
    %c0_84 = arith.constant 0 : index
    %91 = vector.load %arg12[%c0_81, %c1_82, %c0_83, %c0_84] : memref<1x4x8x32xf32, #tpu.memory_space<vmem>>, vector<1x1x8x32xf32>
    %92 = vector.shape_cast %91 : vector<1x1x8x32xf32> to vector<8x32xf32>
    %cst_85 = arith.constant dense<0.000000e+00> : vector<8x32xf32>
    %93 = tpu.matmul %90, %92, %cst_85 {dimension_numbers = #tpu.dot_dimension_numbers<[1], [0], [0], [1], [0, 0, 1, 1], [], []>} : vector<8x8xf32>, vector<8x32xf32>, vector<8x32xf32> -> vector<8x32xf32>
    %94 = arith.addf %55, %93 : vector<8x32xf32>
    %c0_86 = arith.constant 0 : index
    %c2 = arith.constant 2 : index
    %c0_87 = arith.constant 0 : index
    %c0_88 = arith.constant 0 : index
    %95 = vector.load %arg6[%c0_86, %c2, %c0_87, %c0_88] : memref<1x4x32x8xf32, #tpu.memory_space<vmem>>, vector<1x1x32x8xf32>
    %96 = vector.shape_cast %95 : vector<1x1x32x8xf32> to vector<32x8xf32>
    %cst_89 = arith.constant dense<0.000000e+00> : vector<8x8xf32>
    %97 = tpu.matmul %3, %96, %cst_89 {dimension_numbers = #tpu.dot_dimension_numbers<[1], [0], [0], [1], [0, 0, 1, 1], [], []>} : vector<8x32xf32>, vector<32x8xf32>, vector<8x8xf32> -> vector<8x8xf32>
    %c0_90 = arith.constant 0 : index
    %c2_91 = arith.constant 2 : index
    %c0_92 = arith.constant 0 : index
    %c0_93 = arith.constant 0 : index
    %98 = vector.load %arg7[%c0_90, %c2_91, %c0_92, %c0_93] : memref<1x4x1x8xf32, #tpu.memory_space<vmem>>, vector<1x1x1x8xf32>
    %99 = vector.shape_cast %98 : vector<1x1x1x8xf32> to vector<1x8xf32>
    %100 = vector.broadcast %99 : vector<1x8xf32> to vector<8x8xf32>
    %101 = arith.addf %97, %100 : vector<8x8xf32>
    %c0_94 = arith.constant 0 : index
    %c2_95 = arith.constant 2 : index
    %c0_96 = arith.constant 0 : index
    %c0_97 = arith.constant 0 : index
    %102 = vector.load %arg8[%c0_94, %c2_95, %c0_96, %c0_97] : memref<1x4x32x8xf32, #tpu.memory_space<vmem>>, vector<1x1x32x8xf32>
    %103 = vector.shape_cast %102 : vector<1x1x32x8xf32> to vector<32x8xf32>
    %cst_98 = arith.constant dense<0.000000e+00> : vector<8x8xf32>
    %104 = tpu.matmul %3, %103, %cst_98 {dimension_numbers = #tpu.dot_dimension_numbers<[1], [0], [0], [1], [0, 0, 1, 1], [], []>} : vector<8x32xf32>, vector<32x8xf32>, vector<8x8xf32> -> vector<8x8xf32>
    %c0_99 = arith.constant 0 : index
    %c2_100 = arith.constant 2 : index
    %c0_101 = arith.constant 0 : index
    %c0_102 = arith.constant 0 : index
    %105 = vector.load %arg9[%c0_99, %c2_100, %c0_101, %c0_102] : memref<1x4x1x8xf32, #tpu.memory_space<vmem>>, vector<1x1x1x8xf32>
    %106 = vector.shape_cast %105 : vector<1x1x1x8xf32> to vector<1x8xf32>
    %107 = vector.broadcast %106 : vector<1x8xf32> to vector<8x8xf32>
    %108 = arith.addf %104, %107 : vector<8x8xf32>
    %c0_103 = arith.constant 0 : index
    %c2_104 = arith.constant 2 : index
    %c0_105 = arith.constant 0 : index
    %c0_106 = arith.constant 0 : index
    %109 = vector.load %arg10[%c0_103, %c2_104, %c0_105, %c0_106] : memref<1x4x32x8xf32, #tpu.memory_space<vmem>>, vector<1x1x32x8xf32>
    %110 = vector.shape_cast %109 : vector<1x1x32x8xf32> to vector<32x8xf32>
    %cst_107 = arith.constant dense<0.000000e+00> : vector<8x8xf32>
    %111 = tpu.matmul %3, %110, %cst_107 {dimension_numbers = #tpu.dot_dimension_numbers<[1], [0], [0], [1], [0, 0, 1, 1], [], []>} : vector<8x32xf32>, vector<32x8xf32>, vector<8x8xf32> -> vector<8x8xf32>
    %c0_108 = arith.constant 0 : index
    %c2_109 = arith.constant 2 : index
    %c0_110 = arith.constant 0 : index
    %c0_111 = arith.constant 0 : index
    %112 = vector.load %arg11[%c0_108, %c2_109, %c0_110, %c0_111] : memref<1x4x1x8xf32, #tpu.memory_space<vmem>>, vector<1x1x1x8xf32>
    %113 = vector.shape_cast %112 : vector<1x1x1x8xf32> to vector<1x8xf32>
    %114 = vector.broadcast %113 : vector<1x8xf32> to vector<8x8xf32>
    %115 = arith.addf %111, %114 : vector<8x8xf32>
    %cst_112 = arith.constant dense<0.000000e+00> : vector<8x8xf32>
    %116 = tpu.matmul %101, %108, %cst_112 {dimension_numbers = #tpu.dot_dimension_numbers<[1], [1], [0], [0], [0, 0, 1, 0], [], []>} : vector<8x8xf32>, vector<8x8xf32>, vector<8x8xf32> -> vector<8x8xf32>
    %cst_113 = arith.constant -9.99999986E+14 : f32
    %117 = vector.broadcast %cst_113 : f32 to vector<8x8xf32>
    %118 = arith.select %9, %117, %116 : vector<8x8xi1>, vector<8x8xf32>
    %cst_114 = arith.constant dense<0xFF800000> : vector<8xf32>
    %119 = vector.multi_reduction <maximumf>, %118, %cst_114 [1] : vector<8x8xf32> to vector<8xf32>
    %120 = vector.shape_cast %119 : vector<8xf32> to vector<8x1xf32>
    %121 = vector.broadcast %120 : vector<8x1xf32> to vector<8x8xf32>
    %122 = arith.subf %118, %121 : vector<8x8xf32>
    %123 = math.exp %122 : vector<8x8xf32>
    %cst_115 = arith.constant dense<0.000000e+00> : vector<8xf32>
    %124 = vector.multi_reduction <add>, %123, %cst_115 [1] : vector<8x8xf32> to vector<8xf32>
    %125 = vector.shape_cast %124 : vector<8xf32> to vector<8x1xf32>
    %126 = tpu.reciprocal %125 {approx = true} : vector<8x1xf32> -> vector<8x1xf32>
    %127 = vector.broadcast %126 : vector<8x1xf32> to vector<8x8xf32>
    %128 = arith.mulf %123, %127 : vector<8x8xf32>
    %cst_116 = arith.constant dense<0.000000e+00> : vector<8x8xf32>
    %129 = tpu.matmul %128, %115, %cst_116 {dimension_numbers = #tpu.dot_dimension_numbers<[1], [0], [0], [1], [0, 0, 1, 1], [], []>} : vector<8x8xf32>, vector<8x8xf32>, vector<8x8xf32> -> vector<8x8xf32>
    %c0_117 = arith.constant 0 : index
    %c2_118 = arith.constant 2 : index
    %c0_119 = arith.constant 0 : index
    %c0_120 = arith.constant 0 : index
    %130 = vector.load %arg12[%c0_117, %c2_118, %c0_119, %c0_120] : memref<1x4x8x32xf32, #tpu.memory_space<vmem>>, vector<1x1x8x32xf32>
    %131 = vector.shape_cast %130 : vector<1x1x8x32xf32> to vector<8x32xf32>
    %cst_121 = arith.constant dense<0.000000e+00> : vector<8x32xf32>
    %132 = tpu.matmul %129, %131, %cst_121 {dimension_numbers = #tpu.dot_dimension_numbers<[1], [0], [0], [1], [0, 0, 1, 1], [], []>} : vector<8x8xf32>, vector<8x32xf32>, vector<8x32xf32> -> vector<8x32xf32>
    %133 = arith.addf %94, %132 : vector<8x32xf32>
    %c0_122 = arith.constant 0 : index
    %c3 = arith.constant 3 : index
    %c0_123 = arith.constant 0 : index
    %c0_124 = arith.constant 0 : index
    %134 = vector.load %arg6[%c0_122, %c3, %c0_123, %c0_124] : memref<1x4x32x8xf32, #tpu.memory_space<vmem>>, vector<1x1x32x8xf32>
    %135 = vector.shape_cast %134 : vector<1x1x32x8xf32> to vector<32x8xf32>
    %cst_125 = arith.constant dense<0.000000e+00> : vector<8x8xf32>
    %136 = tpu.matmul %3, %135, %cst_125 {dimension_numbers = #tpu.dot_dimension_numbers<[1], [0], [0], [1], [0, 0, 1, 1], [], []>} : vector<8x32xf32>, vector<32x8xf32>, vector<8x8xf32> -> vector<8x8xf32>
    %c0_126 = arith.constant 0 : index
    %c3_127 = arith.constant 3 : index
    %c0_128 = arith.constant 0 : index
    %c0_129 = arith.constant 0 : index
    %137 = vector.load %arg7[%c0_126, %c3_127, %c0_128, %c0_129] : memref<1x4x1x8xf32, #tpu.memory_space<vmem>>, vector<1x1x1x8xf32>
    %138 = vector.shape_cast %137 : vector<1x1x1x8xf32> to vector<1x8xf32>
    %139 = vector.broadcast %138 : vector<1x8xf32> to vector<8x8xf32>
    %140 = arith.addf %136, %139 : vector<8x8xf32>
    %c0_130 = arith.constant 0 : index
    %c3_131 = arith.constant 3 : index
    %c0_132 = arith.constant 0 : index
    %c0_133 = arith.constant 0 : index
    %141 = vector.load %arg8[%c0_130, %c3_131, %c0_132, %c0_133] : memref<1x4x32x8xf32, #tpu.memory_space<vmem>>, vector<1x1x32x8xf32>
    %142 = vector.shape_cast %141 : vector<1x1x32x8xf32> to vector<32x8xf32>
    %cst_134 = arith.constant dense<0.000000e+00> : vector<8x8xf32>
    %143 = tpu.matmul %3, %142, %cst_134 {dimension_numbers = #tpu.dot_dimension_numbers<[1], [0], [0], [1], [0, 0, 1, 1], [], []>} : vector<8x32xf32>, vector<32x8xf32>, vector<8x8xf32> -> vector<8x8xf32>
    %c0_135 = arith.constant 0 : index
    %c3_136 = arith.constant 3 : index
    %c0_137 = arith.constant 0 : index
    %c0_138 = arith.constant 0 : index
    %144 = vector.load %arg9[%c0_135, %c3_136, %c0_137, %c0_138] : memref<1x4x1x8xf32, #tpu.memory_space<vmem>>, vector<1x1x1x8xf32>
    %145 = vector.shape_cast %144 : vector<1x1x1x8xf32> to vector<1x8xf32>
    %146 = vector.broadcast %145 : vector<1x8xf32> to vector<8x8xf32>
    %147 = arith.addf %143, %146 : vector<8x8xf32>
    %c0_139 = arith.constant 0 : index
    %c3_140 = arith.constant 3 : index
    %c0_141 = arith.constant 0 : index
    %c0_142 = arith.constant 0 : index
    %148 = vector.load %arg10[%c0_139, %c3_140, %c0_141, %c0_142] : memref<1x4x32x8xf32, #tpu.memory_space<vmem>>, vector<1x1x32x8xf32>
    %149 = vector.shape_cast %148 : vector<1x1x32x8xf32> to vector<32x8xf32>
    %cst_143 = arith.constant dense<0.000000e+00> : vector<8x8xf32>
    %150 = tpu.matmul %3, %149, %cst_143 {dimension_numbers = #tpu.dot_dimension_numbers<[1], [0], [0], [1], [0, 0, 1, 1], [], []>} : vector<8x32xf32>, vector<32x8xf32>, vector<8x8xf32> -> vector<8x8xf32>
    %c0_144 = arith.constant 0 : index
    %c3_145 = arith.constant 3 : index
    %c0_146 = arith.constant 0 : index
    %c0_147 = arith.constant 0 : index
    %151 = vector.load %arg11[%c0_144, %c3_145, %c0_146, %c0_147] : memref<1x4x1x8xf32, #tpu.memory_space<vmem>>, vector<1x1x1x8xf32>
    %152 = vector.shape_cast %151 : vector<1x1x1x8xf32> to vector<1x8xf32>
    %153 = vector.broadcast %152 : vector<1x8xf32> to vector<8x8xf32>
    %154 = arith.addf %150, %153 : vector<8x8xf32>
    %cst_148 = arith.constant dense<0.000000e+00> : vector<8x8xf32>
    %155 = tpu.matmul %140, %147, %cst_148 {dimension_numbers = #tpu.dot_dimension_numbers<[1], [1], [0], [0], [0, 0, 1, 0], [], []>} : vector<8x8xf32>, vector<8x8xf32>, vector<8x8xf32> -> vector<8x8xf32>
    %cst_149 = arith.constant -9.99999986E+14 : f32
    %156 = vector.broadcast %cst_149 : f32 to vector<8x8xf32>
    %157 = arith.select %9, %156, %155 : vector<8x8xi1>, vector<8x8xf32>
    %cst_150 = arith.constant dense<0xFF800000> : vector<8xf32>
    %158 = vector.multi_reduction <maximumf>, %157, %cst_150 [1] : vector<8x8xf32> to vector<8xf32>
    %159 = vector.shape_cast %158 : vector<8xf32> to vector<8x1xf32>
    %160 = vector.broadcast %159 : vector<8x1xf32> to vector<8x8xf32>
    %161 = arith.subf %157, %160 : vector<8x8xf32>
    %162 = math.exp %161 : vector<8x8xf32>
    %cst_151 = arith.constant dense<0.000000e+00> : vector<8xf32>
    %163 = vector.multi_reduction <add>, %162, %cst_151 [1] : vector<8x8xf32> to vector<8xf32>
    %164 = vector.shape_cast %163 : vector<8xf32> to vector<8x1xf32>
    %165 = tpu.reciprocal %164 {approx = true} : vector<8x1xf32> -> vector<8x1xf32>
    %166 = vector.broadcast %165 : vector<8x1xf32> to vector<8x8xf32>
    %167 = arith.mulf %162, %166 : vector<8x8xf32>
    %cst_152 = arith.constant dense<0.000000e+00> : vector<8x8xf32>
    %168 = tpu.matmul %167, %154, %cst_152 {dimension_numbers = #tpu.dot_dimension_numbers<[1], [0], [0], [1], [0, 0, 1, 1], [], []>} : vector<8x8xf32>, vector<8x8xf32>, vector<8x8xf32> -> vector<8x8xf32>
    %c0_153 = arith.constant 0 : index
    %c3_154 = arith.constant 3 : index
    %c0_155 = arith.constant 0 : index
    %c0_156 = arith.constant 0 : index
    %169 = vector.load %arg12[%c0_153, %c3_154, %c0_155, %c0_156] : memref<1x4x8x32xf32, #tpu.memory_space<vmem>>, vector<1x1x8x32xf32>
    %170 = vector.shape_cast %169 : vector<1x1x8x32xf32> to vector<8x32xf32>
    %cst_157 = arith.constant dense<0.000000e+00> : vector<8x32xf32>
    %171 = tpu.matmul %168, %170, %cst_157 {dimension_numbers = #tpu.dot_dimension_numbers<[1], [0], [0], [1], [0, 0, 1, 1], [], []>} : vector<8x8xf32>, vector<8x32xf32>, vector<8x32xf32> -> vector<8x32xf32>
    %172 = arith.addf %133, %171 : vector<8x32xf32>
    %173 = arith.addf %3, %172 : vector<8x32xf32>
    %c0_158 = arith.constant 0 : index
    %c0_159 = arith.constant 0 : index
    %c0_160 = arith.constant 0 : index
    %174 = vector.load %arg13[%c0_158, %c0_159, %c0_160] : memref<1x1x32xf32, #tpu.memory_space<vmem>>, vector<1x1x32xf32>
    %175 = vector.shape_cast %174 : vector<1x1x32xf32> to vector<1x32xf32>
    %176 = vector.broadcast %175 : vector<1x32xf32> to vector<8x32xf32>
    %177 = arith.addf %173, %176 : vector<8x32xf32>
    %c0_161 = arith.constant 0 : index
    %c0_162 = arith.constant 0 : index
    %c0_163 = arith.constant 0 : index
    %178 = vector.load %arg14[%c0_161, %c0_162, %c0_163] : memref<1x1x32xf32, #tpu.memory_space<vmem>>, vector<1x1x32xf32>
    %179 = vector.shape_cast %178 : vector<1x1x32xf32> to vector<1x32xf32>
    %c0_164 = arith.constant 0 : index
    %c0_165 = arith.constant 0 : index
    %c0_166 = arith.constant 0 : index
    %180 = vector.load %arg15[%c0_164, %c0_165, %c0_166] : memref<1x1x32xf32, #tpu.memory_space<vmem>>, vector<1x1x32xf32>
    %181 = vector.shape_cast %180 : vector<1x1x32xf32> to vector<1x32xf32>
    %cst_167 = arith.constant dense<0.000000e+00> : vector<8xf32>
    %182 = vector.multi_reduction <add>, %177, %cst_167 [1] : vector<8x32xf32> to vector<8xf32>
    %183 = vector.shape_cast %182 : vector<8xf32> to vector<8x1xf32>
    %cst_168 = arith.constant 3.200000e+01 : f32
    %184 = vector.broadcast %cst_168 : f32 to vector<8x1xf32>
    %185 = arith.divf %183, %184 : vector<8x1xf32>
    %186 = vector.broadcast %185 : vector<8x1xf32> to vector<8x32xf32>
    %187 = arith.subf %177, %186 : vector<8x32xf32>
    %188 = arith.mulf %187, %187 : vector<8x32xf32>
    %cst_169 = arith.constant dense<0.000000e+00> : vector<8xf32>
    %189 = vector.multi_reduction <add>, %188, %cst_169 [1] : vector<8x32xf32> to vector<8xf32>
    %190 = vector.shape_cast %189 : vector<8xf32> to vector<8x1xf32>
    %cst_170 = arith.constant 3.200000e+01 : f32
    %191 = vector.broadcast %cst_170 : f32 to vector<8x1xf32>
    %192 = arith.divf %190, %191 : vector<8x1xf32>
    %193 = vector.broadcast %185 : vector<8x1xf32> to vector<8x32xf32>
    %194 = arith.subf %177, %193 : vector<8x32xf32>
    %cst_171 = arith.constant 9.99999974E-6 : f32
    %195 = vector.broadcast %cst_171 : f32 to vector<8x1xf32>
    %196 = arith.addf %192, %195 : vector<8x1xf32>
    %197 = math.rsqrt %196 : vector<8x1xf32>
    %198 = vector.broadcast %197 : vector<8x1xf32> to vector<8x32xf32>
    %199 = arith.mulf %194, %198 : vector<8x32xf32>
    %200 = vector.broadcast %179 : vector<1x32xf32> to vector<8x32xf32>
    %201 = arith.mulf %199, %200 : vector<8x32xf32>
    %202 = vector.broadcast %181 : vector<1x32xf32> to vector<8x32xf32>
    %203 = arith.addf %201, %202 : vector<8x32xf32>
    %cst_172 = arith.constant 0.000000e+00 : f32
    %204 = vector.broadcast %cst_172 : f32 to vector<8x32xf32>
    %c0_173 = arith.constant 0 : index
    %c0_174 = arith.constant 0 : index
    %c0_175 = arith.constant 0 : index
    %c0_176 = arith.constant 0 : index
    %205 = vector.load %arg16[%c0_173, %c0_174, %c0_175, %c0_176] : memref<1x4x32x8xf32, #tpu.memory_space<vmem>>, vector<1x1x32x8xf32>
    %206 = vector.shape_cast %205 : vector<1x1x32x8xf32> to vector<32x8xf32>
    %cst_177 = arith.constant dense<0.000000e+00> : vector<8x8xf32>
    %207 = tpu.matmul %203, %206, %cst_177 {dimension_numbers = #tpu.dot_dimension_numbers<[1], [0], [0], [1], [0, 0, 1, 1], [], []>} : vector<8x32xf32>, vector<32x8xf32>, vector<8x8xf32> -> vector<8x8xf32>
    %c0_178 = arith.constant 0 : index
    %c0_179 = arith.constant 0 : index
    %c0_180 = arith.constant 0 : index
    %c0_181 = arith.constant 0 : index
    %208 = vector.load %arg17[%c0_178, %c0_179, %c0_180, %c0_181] : memref<1x4x1x8xf32, #tpu.memory_space<vmem>>, vector<1x1x1x8xf32>
    %209 = vector.shape_cast %208 : vector<1x1x1x8xf32> to vector<1x8xf32>
    %210 = vector.broadcast %209 : vector<1x8xf32> to vector<8x8xf32>
    %211 = arith.addf %207, %210 : vector<8x8xf32>
    %c0_182 = arith.constant 0 : index
    %c0_183 = arith.constant 0 : index
    %c0_184 = arith.constant 0 : index
    %c0_185 = arith.constant 0 : index
    %212 = vector.load %arg18[%c0_182, %c0_183, %c0_184, %c0_185] : memref<1x4x32x8xf32, #tpu.memory_space<vmem>>, vector<1x1x32x8xf32>
    %213 = vector.shape_cast %212 : vector<1x1x32x8xf32> to vector<32x8xf32>
    %cst_186 = arith.constant dense<0.000000e+00> : vector<128x8xf32>
    %214 = tpu.matmul %5, %213, %cst_186 {dimension_numbers = #tpu.dot_dimension_numbers<[1], [0], [0], [1], [0, 0, 1, 1], [], []>} : vector<128x32xf32>, vector<32x8xf32>, vector<128x8xf32> -> vector<128x8xf32>
    %c0_187 = arith.constant 0 : index
    %c0_188 = arith.constant 0 : index
    %c0_189 = arith.constant 0 : index
    %c0_190 = arith.constant 0 : index
    %215 = vector.load %arg19[%c0_187, %c0_188, %c0_189, %c0_190] : memref<1x4x1x8xf32, #tpu.memory_space<vmem>>, vector<1x1x1x8xf32>
    %216 = vector.shape_cast %215 : vector<1x1x1x8xf32> to vector<1x8xf32>
    %217 = vector.broadcast %216 : vector<1x8xf32> to vector<128x8xf32>
    %218 = arith.addf %214, %217 : vector<128x8xf32>
    %c0_191 = arith.constant 0 : index
    %c0_192 = arith.constant 0 : index
    %c0_193 = arith.constant 0 : index
    %c0_194 = arith.constant 0 : index
    %219 = vector.load %arg20[%c0_191, %c0_192, %c0_193, %c0_194] : memref<1x4x32x8xf32, #tpu.memory_space<vmem>>, vector<1x1x32x8xf32>
    %220 = vector.shape_cast %219 : vector<1x1x32x8xf32> to vector<32x8xf32>
    %cst_195 = arith.constant dense<0.000000e+00> : vector<128x8xf32>
    %221 = tpu.matmul %5, %220, %cst_195 {dimension_numbers = #tpu.dot_dimension_numbers<[1], [0], [0], [1], [0, 0, 1, 1], [], []>} : vector<128x32xf32>, vector<32x8xf32>, vector<128x8xf32> -> vector<128x8xf32>
    %c0_196 = arith.constant 0 : index
    %c0_197 = arith.constant 0 : index
    %c0_198 = arith.constant 0 : index
    %c0_199 = arith.constant 0 : index
    %222 = vector.load %arg21[%c0_196, %c0_197, %c0_198, %c0_199] : memref<1x4x1x8xf32, #tpu.memory_space<vmem>>, vector<1x1x1x8xf32>
    %223 = vector.shape_cast %222 : vector<1x1x1x8xf32> to vector<1x8xf32>
    %224 = vector.broadcast %223 : vector<1x8xf32> to vector<128x8xf32>
    %225 = arith.addf %221, %224 : vector<128x8xf32>
    %cst_200 = arith.constant dense<0.000000e+00> : vector<8x128xf32>
    %226 = tpu.matmul %211, %218, %cst_200 {dimension_numbers = #tpu.dot_dimension_numbers<[1], [1], [0], [0], [0, 0, 1, 0], [], []>} : vector<8x8xf32>, vector<128x8xf32>, vector<8x128xf32> -> vector<8x128xf32>
    %cst_201 = arith.constant -9.99999986E+14 : f32
    %227 = vector.broadcast %cst_201 : f32 to vector<8x128xf32>
    %228 = arith.select %15, %227, %226 : vector<8x128xi1>, vector<8x128xf32>
    %cst_202 = arith.constant dense<0xFF800000> : vector<8xf32>
    %229 = vector.multi_reduction <maximumf>, %228, %cst_202 [1] : vector<8x128xf32> to vector<8xf32>
    %230 = vector.shape_cast %229 : vector<8xf32> to vector<8x1xf32>
    %231 = vector.broadcast %230 : vector<8x1xf32> to vector<8x128xf32>
    %232 = arith.subf %228, %231 : vector<8x128xf32>
    %233 = math.exp %232 : vector<8x128xf32>
    %cst_203 = arith.constant dense<0.000000e+00> : vector<8xf32>
    %234 = vector.multi_reduction <add>, %233, %cst_203 [1] : vector<8x128xf32> to vector<8xf32>
    %235 = vector.shape_cast %234 : vector<8xf32> to vector<8x1xf32>
    %236 = tpu.reciprocal %235 : vector<8x1xf32> -> vector<8x1xf32>
    %237 = vector.broadcast %236 : vector<8x1xf32> to vector<8x128xf32>
    %238 = arith.mulf %233, %237 : vector<8x128xf32>
    %c1_i32 = arith.constant 1 : i32
    %239 = arith.cmpi eq, %arg1, %c1_i32 : i32
    %240 = arith.extui %239 : i1 to i32
    %c0_i32_204 = arith.constant 0 : i32
    %241 = arith.cmpi ne, %240, %c0_i32_204 : i32
    scf.if %241 {
      %c0_372 = arith.constant 0 : index
      %c0_373 = arith.constant 0 : index
      %c0_374 = arith.constant 0 : index
      %c0_375 = arith.constant 0 : index
      %451 = vector.load %arg33[%c0_372, %c0_373, %c0_374, %c0_375] : memref<1x4x8x128xf32, #tpu.memory_space<vmem>>, vector<1x1x8x128xf32>
      %452 = vector.shape_cast %451 : vector<1x1x8x128xf32> to vector<8x128xf32>
      %453 = vector.shape_cast %238 : vector<8x128xf32> to vector<1x1x8x128xf32>
      tpu.vector_store %arg33[%c0_372, %c0_373, %c0_374, %c0_375], %453 {strides = array<i32>} : memref<1x4x8x128xf32, #tpu.memory_space<vmem>>, vector<1x1x8x128xf32>,
    } else {
    }
    %cst_205 = arith.constant dense<0.000000e+00> : vector<8x8xf32>
    %242 = tpu.matmul %238, %225, %cst_205 {dimension_numbers = #tpu.dot_dimension_numbers<[1], [0], [0], [1], [0, 0, 1, 1], [], []>} : vector<8x128xf32>, vector<128x8xf32>, vector<8x8xf32> -> vector<8x8xf32>
    %c0_206 = arith.constant 0 : index
    %c0_207 = arith.constant 0 : index
    %c0_208 = arith.constant 0 : index
    %c0_209 = arith.constant 0 : index
    %243 = vector.load %arg22[%c0_206, %c0_207, %c0_208, %c0_209] : memref<1x4x8x32xf32, #tpu.memory_space<vmem>>, vector<1x1x8x32xf32>
    %244 = vector.shape_cast %243 : vector<1x1x8x32xf32> to vector<8x32xf32>
    %cst_210 = arith.constant dense<0.000000e+00> : vector<8x32xf32>
    %245 = tpu.matmul %242, %244, %cst_210 {dimension_numbers = #tpu.dot_dimension_numbers<[1], [0], [0], [1], [0, 0, 1, 1], [], []>} : vector<8x8xf32>, vector<8x32xf32>, vector<8x32xf32> -> vector<8x32xf32>
    %246 = arith.addf %204, %245 : vector<8x32xf32>
    %c0_211 = arith.constant 0 : index
    %c1_212 = arith.constant 1 : index
    %c0_213 = arith.constant 0 : index
    %c0_214 = arith.constant 0 : index
    %247 = vector.load %arg16[%c0_211, %c1_212, %c0_213, %c0_214] : memref<1x4x32x8xf32, #tpu.memory_space<vmem>>, vector<1x1x32x8xf32>
    %248 = vector.shape_cast %247 : vector<1x1x32x8xf32> to vector<32x8xf32>
    %cst_215 = arith.constant dense<0.000000e+00> : vector<8x8xf32>
    %249 = tpu.matmul %203, %248, %cst_215 {dimension_numbers = #tpu.dot_dimension_numbers<[1], [0], [0], [1], [0, 0, 1, 1], [], []>} : vector<8x32xf32>, vector<32x8xf32>, vector<8x8xf32> -> vector<8x8xf32>
    %c0_216 = arith.constant 0 : index
    %c1_217 = arith.constant 1 : index
    %c0_218 = arith.constant 0 : index
    %c0_219 = arith.constant 0 : index
    %250 = vector.load %arg17[%c0_216, %c1_217, %c0_218, %c0_219] : memref<1x4x1x8xf32, #tpu.memory_space<vmem>>, vector<1x1x1x8xf32>
    %251 = vector.shape_cast %250 : vector<1x1x1x8xf32> to vector<1x8xf32>
    %252 = vector.broadcast %251 : vector<1x8xf32> to vector<8x8xf32>
    %253 = arith.addf %249, %252 : vector<8x8xf32>
    %c0_220 = arith.constant 0 : index
    %c1_221 = arith.constant 1 : index
    %c0_222 = arith.constant 0 : index
    %c0_223 = arith.constant 0 : index
    %254 = vector.load %arg18[%c0_220, %c1_221, %c0_222, %c0_223] : memref<1x4x32x8xf32, #tpu.memory_space<vmem>>, vector<1x1x32x8xf32>
    %255 = vector.shape_cast %254 : vector<1x1x32x8xf32> to vector<32x8xf32>
    %cst_224 = arith.constant dense<0.000000e+00> : vector<128x8xf32>
    %256 = tpu.matmul %5, %255, %cst_224 {dimension_numbers = #tpu.dot_dimension_numbers<[1], [0], [0], [1], [0, 0, 1, 1], [], []>} : vector<128x32xf32>, vector<32x8xf32>, vector<128x8xf32> -> vector<128x8xf32>
    %c0_225 = arith.constant 0 : index
    %c1_226 = arith.constant 1 : index
    %c0_227 = arith.constant 0 : index
    %c0_228 = arith.constant 0 : index
    %257 = vector.load %arg19[%c0_225, %c1_226, %c0_227, %c0_228] : memref<1x4x1x8xf32, #tpu.memory_space<vmem>>, vector<1x1x1x8xf32>
    %258 = vector.shape_cast %257 : vector<1x1x1x8xf32> to vector<1x8xf32>
    %259 = vector.broadcast %258 : vector<1x8xf32> to vector<128x8xf32>
    %260 = arith.addf %256, %259 : vector<128x8xf32>
    %c0_229 = arith.constant 0 : index
    %c1_230 = arith.constant 1 : index
    %c0_231 = arith.constant 0 : index
    %c0_232 = arith.constant 0 : index
    %261 = vector.load %arg20[%c0_229, %c1_230, %c0_231, %c0_232] : memref<1x4x32x8xf32, #tpu.memory_space<vmem>>, vector<1x1x32x8xf32>
    %262 = vector.shape_cast %261 : vector<1x1x32x8xf32> to vector<32x8xf32>
    %cst_233 = arith.constant dense<0.000000e+00> : vector<128x8xf32>
    %263 = tpu.matmul %5, %262, %cst_233 {dimension_numbers = #tpu.dot_dimension_numbers<[1], [0], [0], [1], [0, 0, 1, 1], [], []>} : vector<128x32xf32>, vector<32x8xf32>, vector<128x8xf32> -> vector<128x8xf32>
    %c0_234 = arith.constant 0 : index
    %c1_235 = arith.constant 1 : index
    %c0_236 = arith.constant 0 : index
    %c0_237 = arith.constant 0 : index
    %264 = vector.load %arg21[%c0_234, %c1_235, %c0_236, %c0_237] : memref<1x4x1x8xf32, #tpu.memory_space<vmem>>, vector<1x1x1x8xf32>
    %265 = vector.shape_cast %264 : vector<1x1x1x8xf32> to vector<1x8xf32>
    %266 = vector.broadcast %265 : vector<1x8xf32> to vector<128x8xf32>
    %267 = arith.addf %263, %266 : vector<128x8xf32>
    %cst_238 = arith.constant dense<0.000000e+00> : vector<8x128xf32>
    %268 = tpu.matmul %253, %260, %cst_238 {dimension_numbers = #tpu.dot_dimension_numbers<[1], [1], [0], [0], [0, 0, 1, 0], [], []>} : vector<8x8xf32>, vector<128x8xf32>, vector<8x128xf32> -> vector<8x128xf32>
    %cst_239 = arith.constant -9.99999986E+14 : f32
    %269 = vector.broadcast %cst_239 : f32 to vector<8x128xf32>
    %270 = arith.select %15, %269, %268 : vector<8x128xi1>, vector<8x128xf32>
    %cst_240 = arith.constant dense<0xFF800000> : vector<8xf32>
    %271 = vector.multi_reduction <maximumf>, %270, %cst_240 [1] : vector<8x128xf32> to vector<8xf32>
    %272 = vector.shape_cast %271 : vector<8xf32> to vector<8x1xf32>
    %273 = vector.broadcast %272 : vector<8x1xf32> to vector<8x128xf32>
    %274 = arith.subf %270, %273 : vector<8x128xf32>
    %275 = math.exp %274 : vector<8x128xf32>
    %cst_241 = arith.constant dense<0.000000e+00> : vector<8xf32>
    %276 = vector.multi_reduction <add>, %275, %cst_241 [1] : vector<8x128xf32> to vector<8xf32>
    %277 = vector.shape_cast %276 : vector<8xf32> to vector<8x1xf32>
    %278 = tpu.reciprocal %277 : vector<8x1xf32> -> vector<8x1xf32>
    %279 = vector.broadcast %278 : vector<8x1xf32> to vector<8x128xf32>
    %280 = arith.mulf %275, %279 : vector<8x128xf32>
    %c1_i32_242 = arith.constant 1 : i32
    %281 = arith.cmpi eq, %arg1, %c1_i32_242 : i32
    %282 = arith.extui %281 : i1 to i32
    %c0_i32_243 = arith.constant 0 : i32
    %283 = arith.cmpi ne, %282, %c0_i32_243 : i32
    scf.if %283 {
      %c0_372 = arith.constant 0 : index
      %c1_373 = arith.constant 1 : index
      %c0_374 = arith.constant 0 : index
      %c0_375 = arith.constant 0 : index
      %451 = vector.load %arg33[%c0_372, %c1_373, %c0_374, %c0_375] : memref<1x4x8x128xf32, #tpu.memory_space<vmem>>, vector<1x1x8x128xf32>
      %452 = vector.shape_cast %451 : vector<1x1x8x128xf32> to vector<8x128xf32>
      %453 = vector.shape_cast %280 : vector<8x128xf32> to vector<1x1x8x128xf32>
      tpu.vector_store %arg33[%c0_372, %c1_373, %c0_374, %c0_375], %453 {strides = array<i32>} : memref<1x4x8x128xf32, #tpu.memory_space<vmem>>, vector<1x1x8x128xf32>,
    } else {
    }
    %cst_244 = arith.constant dense<0.000000e+00> : vector<8x8xf32>
    %284 = tpu.matmul %280, %267, %cst_244 {dimension_numbers = #tpu.dot_dimension_numbers<[1], [0], [0], [1], [0, 0, 1, 1], [], []>} : vector<8x128xf32>, vector<128x8xf32>, vector<8x8xf32> -> vector<8x8xf32>
    %c0_245 = arith.constant 0 : index
    %c1_246 = arith.constant 1 : index
    %c0_247 = arith.constant 0 : index
    %c0_248 = arith.constant 0 : index
    %285 = vector.load %arg22[%c0_245, %c1_246, %c0_247, %c0_248] : memref<1x4x8x32xf32, #tpu.memory_space<vmem>>, vector<1x1x8x32xf32>
    %286 = vector.shape_cast %285 : vector<1x1x8x32xf32> to vector<8x32xf32>
    %cst_249 = arith.constant dense<0.000000e+00> : vector<8x32xf32>
    %287 = tpu.matmul %284, %286, %cst_249 {dimension_numbers = #tpu.dot_dimension_numbers<[1], [0], [0], [1], [0, 0, 1, 1], [], []>} : vector<8x8xf32>, vector<8x32xf32>, vector<8x32xf32> -> vector<8x32xf32>
    %288 = arith.addf %246, %287 : vector<8x32xf32>
    %c0_250 = arith.constant 0 : index
    %c2_251 = arith.constant 2 : index
    %c0_252 = arith.constant 0 : index
    %c0_253 = arith.constant 0 : index
    %289 = vector.load %arg16[%c0_250, %c2_251, %c0_252, %c0_253] : memref<1x4x32x8xf32, #tpu.memory_space<vmem>>, vector<1x1x32x8xf32>
    %290 = vector.shape_cast %289 : vector<1x1x32x8xf32> to vector<32x8xf32>
    %cst_254 = arith.constant dense<0.000000e+00> : vector<8x8xf32>
    %291 = tpu.matmul %203, %290, %cst_254 {dimension_numbers = #tpu.dot_dimension_numbers<[1], [0], [0], [1], [0, 0, 1, 1], [], []>} : vector<8x32xf32>, vector<32x8xf32>, vector<8x8xf32> -> vector<8x8xf32>
    %c0_255 = arith.constant 0 : index
    %c2_256 = arith.constant 2 : index
    %c0_257 = arith.constant 0 : index
    %c0_258 = arith.constant 0 : index
    %292 = vector.load %arg17[%c0_255, %c2_256, %c0_257, %c0_258] : memref<1x4x1x8xf32, #tpu.memory_space<vmem>>, vector<1x1x1x8xf32>
    %293 = vector.shape_cast %292 : vector<1x1x1x8xf32> to vector<1x8xf32>
    %294 = vector.broadcast %293 : vector<1x8xf32> to vector<8x8xf32>
    %295 = arith.addf %291, %294 : vector<8x8xf32>
    %c0_259 = arith.constant 0 : index
    %c2_260 = arith.constant 2 : index
    %c0_261 = arith.constant 0 : index
    %c0_262 = arith.constant 0 : index
    %296 = vector.load %arg18[%c0_259, %c2_260, %c0_261, %c0_262] : memref<1x4x32x8xf32, #tpu.memory_space<vmem>>, vector<1x1x32x8xf32>
    %297 = vector.shape_cast %296 : vector<1x1x32x8xf32> to vector<32x8xf32>
    %cst_263 = arith.constant dense<0.000000e+00> : vector<128x8xf32>
    %298 = tpu.matmul %5, %297, %cst_263 {dimension_numbers = #tpu.dot_dimension_numbers<[1], [0], [0], [1], [0, 0, 1, 1], [], []>} : vector<128x32xf32>, vector<32x8xf32>, vector<128x8xf32> -> vector<128x8xf32>
    %c0_264 = arith.constant 0 : index
    %c2_265 = arith.constant 2 : index
    %c0_266 = arith.constant 0 : index
    %c0_267 = arith.constant 0 : index
    %299 = vector.load %arg19[%c0_264, %c2_265, %c0_266, %c0_267] : memref<1x4x1x8xf32, #tpu.memory_space<vmem>>, vector<1x1x1x8xf32>
    %300 = vector.shape_cast %299 : vector<1x1x1x8xf32> to vector<1x8xf32>
    %301 = vector.broadcast %300 : vector<1x8xf32> to vector<128x8xf32>
    %302 = arith.addf %298, %301 : vector<128x8xf32>
    %c0_268 = arith.constant 0 : index
    %c2_269 = arith.constant 2 : index
    %c0_270 = arith.constant 0 : index
    %c0_271 = arith.constant 0 : index
    %303 = vector.load %arg20[%c0_268, %c2_269, %c0_270, %c0_271] : memref<1x4x32x8xf32, #tpu.memory_space<vmem>>, vector<1x1x32x8xf32>
    %304 = vector.shape_cast %303 : vector<1x1x32x8xf32> to vector<32x8xf32>
    %cst_272 = arith.constant dense<0.000000e+00> : vector<128x8xf32>
    %305 = tpu.matmul %5, %304, %cst_272 {dimension_numbers = #tpu.dot_dimension_numbers<[1], [0], [0], [1], [0, 0, 1, 1], [], []>} : vector<128x32xf32>, vector<32x8xf32>, vector<128x8xf32> -> vector<128x8xf32>
    %c0_273 = arith.constant 0 : index
    %c2_274 = arith.constant 2 : index
    %c0_275 = arith.constant 0 : index
    %c0_276 = arith.constant 0 : index
    %306 = vector.load %arg21[%c0_273, %c2_274, %c0_275, %c0_276] : memref<1x4x1x8xf32, #tpu.memory_space<vmem>>, vector<1x1x1x8xf32>
    %307 = vector.shape_cast %306 : vector<1x1x1x8xf32> to vector<1x8xf32>
    %308 = vector.broadcast %307 : vector<1x8xf32> to vector<128x8xf32>
    %309 = arith.addf %305, %308 : vector<128x8xf32>
    %cst_277 = arith.constant dense<0.000000e+00> : vector<8x128xf32>
    %310 = tpu.matmul %295, %302, %cst_277 {dimension_numbers = #tpu.dot_dimension_numbers<[1], [1], [0], [0], [0, 0, 1, 0], [], []>} : vector<8x8xf32>, vector<128x8xf32>, vector<8x128xf32> -> vector<8x128xf32>
    %cst_278 = arith.constant -9.99999986E+14 : f32
    %311 = vector.broadcast %cst_278 : f32 to vector<8x128xf32>
    %312 = arith.select %15, %311, %310 : vector<8x128xi1>, vector<8x128xf32>
    %cst_279 = arith.constant dense<0xFF800000> : vector<8xf32>
    %313 = vector.multi_reduction <maximumf>, %312, %cst_279 [1] : vector<8x128xf32> to vector<8xf32>
    %314 = vector.shape_cast %313 : vector<8xf32> to vector<8x1xf32>
    %315 = vector.broadcast %314 : vector<8x1xf32> to vector<8x128xf32>
    %316 = arith.subf %312, %315 : vector<8x128xf32>
    %317 = math.exp %316 : vector<8x128xf32>
    %cst_280 = arith.constant dense<0.000000e+00> : vector<8xf32>
    %318 = vector.multi_reduction <add>, %317, %cst_280 [1] : vector<8x128xf32> to vector<8xf32>
    %319 = vector.shape_cast %318 : vector<8xf32> to vector<8x1xf32>
    %320 = tpu.reciprocal %319 : vector<8x1xf32> -> vector<8x1xf32>
    %321 = vector.broadcast %320 : vector<8x1xf32> to vector<8x128xf32>
    %322 = arith.mulf %317, %321 : vector<8x128xf32>
    %c1_i32_281 = arith.constant 1 : i32
    %323 = arith.cmpi eq, %arg1, %c1_i32_281 : i32
    %324 = arith.extui %323 : i1 to i32
    %c0_i32_282 = arith.constant 0 : i32
    %325 = arith.cmpi ne, %324, %c0_i32_282 : i32
    scf.if %325 {
      %c0_372 = arith.constant 0 : index
      %c2_373 = arith.constant 2 : index
      %c0_374 = arith.constant 0 : index
      %c0_375 = arith.constant 0 : index
      %451 = vector.load %arg33[%c0_372, %c2_373, %c0_374, %c0_375] : memref<1x4x8x128xf32, #tpu.memory_space<vmem>>, vector<1x1x8x128xf32>
      %452 = vector.shape_cast %451 : vector<1x1x8x128xf32> to vector<8x128xf32>
      %453 = vector.shape_cast %322 : vector<8x128xf32> to vector<1x1x8x128xf32>
      tpu.vector_store %arg33[%c0_372, %c2_373, %c0_374, %c0_375], %453 {strides = array<i32>} : memref<1x4x8x128xf32, #tpu.memory_space<vmem>>, vector<1x1x8x128xf32>,
    } else {
    }
    %cst_283 = arith.constant dense<0.000000e+00> : vector<8x8xf32>
    %326 = tpu.matmul %322, %309, %cst_283 {dimension_numbers = #tpu.dot_dimension_numbers<[1], [0], [0], [1], [0, 0, 1, 1], [], []>} : vector<8x128xf32>, vector<128x8xf32>, vector<8x8xf32> -> vector<8x8xf32>
    %c0_284 = arith.constant 0 : index
    %c2_285 = arith.constant 2 : index
    %c0_286 = arith.constant 0 : index
    %c0_287 = arith.constant 0 : index
    %327 = vector.load %arg22[%c0_284, %c2_285, %c0_286, %c0_287] : memref<1x4x8x32xf32, #tpu.memory_space<vmem>>, vector<1x1x8x32xf32>
    %328 = vector.shape_cast %327 : vector<1x1x8x32xf32> to vector<8x32xf32>
    %cst_288 = arith.constant dense<0.000000e+00> : vector<8x32xf32>
    %329 = tpu.matmul %326, %328, %cst_288 {dimension_numbers = #tpu.dot_dimension_numbers<[1], [0], [0], [1], [0, 0, 1, 1], [], []>} : vector<8x8xf32>, vector<8x32xf32>, vector<8x32xf32> -> vector<8x32xf32>
    %330 = arith.addf %288, %329 : vector<8x32xf32>
    %c0_289 = arith.constant 0 : index
    %c3_290 = arith.constant 3 : index
    %c0_291 = arith.constant 0 : index
    %c0_292 = arith.constant 0 : index
    %331 = vector.load %arg16[%c0_289, %c3_290, %c0_291, %c0_292] : memref<1x4x32x8xf32, #tpu.memory_space<vmem>>, vector<1x1x32x8xf32>
    %332 = vector.shape_cast %331 : vector<1x1x32x8xf32> to vector<32x8xf32>
    %cst_293 = arith.constant dense<0.000000e+00> : vector<8x8xf32>
    %333 = tpu.matmul %203, %332, %cst_293 {dimension_numbers = #tpu.dot_dimension_numbers<[1], [0], [0], [1], [0, 0, 1, 1], [], []>} : vector<8x32xf32>, vector<32x8xf32>, vector<8x8xf32> -> vector<8x8xf32>
    %c0_294 = arith.constant 0 : index
    %c3_295 = arith.constant 3 : index
    %c0_296 = arith.constant 0 : index
    %c0_297 = arith.constant 0 : index
    %334 = vector.load %arg17[%c0_294, %c3_295, %c0_296, %c0_297] : memref<1x4x1x8xf32, #tpu.memory_space<vmem>>, vector<1x1x1x8xf32>
    %335 = vector.shape_cast %334 : vector<1x1x1x8xf32> to vector<1x8xf32>
    %336 = vector.broadcast %335 : vector<1x8xf32> to vector<8x8xf32>
    %337 = arith.addf %333, %336 : vector<8x8xf32>
    %c0_298 = arith.constant 0 : index
    %c3_299 = arith.constant 3 : index
    %c0_300 = arith.constant 0 : index
    %c0_301 = arith.constant 0 : index
    %338 = vector.load %arg18[%c0_298, %c3_299, %c0_300, %c0_301] : memref<1x4x32x8xf32, #tpu.memory_space<vmem>>, vector<1x1x32x8xf32>
    %339 = vector.shape_cast %338 : vector<1x1x32x8xf32> to vector<32x8xf32>
    %cst_302 = arith.constant dense<0.000000e+00> : vector<128x8xf32>
    %340 = tpu.matmul %5, %339, %cst_302 {dimension_numbers = #tpu.dot_dimension_numbers<[1], [0], [0], [1], [0, 0, 1, 1], [], []>} : vector<128x32xf32>, vector<32x8xf32>, vector<128x8xf32> -> vector<128x8xf32>
    %c0_303 = arith.constant 0 : index
    %c3_304 = arith.constant 3 : index
    %c0_305 = arith.constant 0 : index
    %c0_306 = arith.constant 0 : index
    %341 = vector.load %arg19[%c0_303, %c3_304, %c0_305, %c0_306] : memref<1x4x1x8xf32, #tpu.memory_space<vmem>>, vector<1x1x1x8xf32>
    %342 = vector.shape_cast %341 : vector<1x1x1x8xf32> to vector<1x8xf32>
    %343 = vector.broadcast %342 : vector<1x8xf32> to vector<128x8xf32>
    %344 = arith.addf %340, %343 : vector<128x8xf32>
    %c0_307 = arith.constant 0 : index
    %c3_308 = arith.constant 3 : index
    %c0_309 = arith.constant 0 : index
    %c0_310 = arith.constant 0 : index
    %345 = vector.load %arg20[%c0_307, %c3_308, %c0_309, %c0_310] : memref<1x4x32x8xf32, #tpu.memory_space<vmem>>, vector<1x1x32x8xf32>
    %346 = vector.shape_cast %345 : vector<1x1x32x8xf32> to vector<32x8xf32>
    %cst_311 = arith.constant dense<0.000000e+00> : vector<128x8xf32>
    %347 = tpu.matmul %5, %346, %cst_311 {dimension_numbers = #tpu.dot_dimension_numbers<[1], [0], [0], [1], [0, 0, 1, 1], [], []>} : vector<128x32xf32>, vector<32x8xf32>, vector<128x8xf32> -> vector<128x8xf32>
    %c0_312 = arith.constant 0 : index
    %c3_313 = arith.constant 3 : index
    %c0_314 = arith.constant 0 : index
    %c0_315 = arith.constant 0 : index
    %348 = vector.load %arg21[%c0_312, %c3_313, %c0_314, %c0_315] : memref<1x4x1x8xf32, #tpu.memory_space<vmem>>, vector<1x1x1x8xf32>
    %349 = vector.shape_cast %348 : vector<1x1x1x8xf32> to vector<1x8xf32>
    %350 = vector.broadcast %349 : vector<1x8xf32> to vector<128x8xf32>
    %351 = arith.addf %347, %350 : vector<128x8xf32>
    %cst_316 = arith.constant dense<0.000000e+00> : vector<8x128xf32>
    %352 = tpu.matmul %337, %344, %cst_316 {dimension_numbers = #tpu.dot_dimension_numbers<[1], [1], [0], [0], [0, 0, 1, 0], [], []>} : vector<8x8xf32>, vector<128x8xf32>, vector<8x128xf32> -> vector<8x128xf32>
    %cst_317 = arith.constant -9.99999986E+14 : f32
    %353 = vector.broadcast %cst_317 : f32 to vector<8x128xf32>
    %354 = arith.select %15, %353, %352 : vector<8x128xi1>, vector<8x128xf32>
    %cst_318 = arith.constant dense<0xFF800000> : vector<8xf32>
    %355 = vector.multi_reduction <maximumf>, %354, %cst_318 [1] : vector<8x128xf32> to vector<8xf32>
    %356 = vector.shape_cast %355 : vector<8xf32> to vector<8x1xf32>
    %357 = vector.broadcast %356 : vector<8x1xf32> to vector<8x128xf32>
    %358 = arith.subf %354, %357 : vector<8x128xf32>
    %359 = math.exp %358 : vector<8x128xf32>
    %cst_319 = arith.constant dense<0.000000e+00> : vector<8xf32>
    %360 = vector.multi_reduction <add>, %359, %cst_319 [1] : vector<8x128xf32> to vector<8xf32>
    %361 = vector.shape_cast %360 : vector<8xf32> to vector<8x1xf32>
    %362 = tpu.reciprocal %361 : vector<8x1xf32> -> vector<8x1xf32>
    %363 = vector.broadcast %362 : vector<8x1xf32> to vector<8x128xf32>
    %364 = arith.mulf %359, %363 : vector<8x128xf32>
    %c1_i32_320 = arith.constant 1 : i32
    %365 = arith.cmpi eq, %arg1, %c1_i32_320 : i32
    %366 = arith.extui %365 : i1 to i32
    %c0_i32_321 = arith.constant 0 : i32
    %367 = arith.cmpi ne, %366, %c0_i32_321 : i32
    scf.if %367 {
      %c0_372 = arith.constant 0 : index
      %c3_373 = arith.constant 3 : index
      %c0_374 = arith.constant 0 : index
      %c0_375 = arith.constant 0 : index
      %451 = vector.load %arg33[%c0_372, %c3_373, %c0_374, %c0_375] : memref<1x4x8x128xf32, #tpu.memory_space<vmem>>, vector<1x1x8x128xf32>
      %452 = vector.shape_cast %451 : vector<1x1x8x128xf32> to vector<8x128xf32>
      %453 = vector.shape_cast %364 : vector<8x128xf32> to vector<1x1x8x128xf32>
      tpu.vector_store %arg33[%c0_372, %c3_373, %c0_374, %c0_375], %453 {strides = array<i32>} : memref<1x4x8x128xf32, #tpu.memory_space<vmem>>, vector<1x1x8x128xf32>,
    } else {
    }
    %cst_322 = arith.constant dense<0.000000e+00> : vector<8x8xf32>
    %368 = tpu.matmul %364, %351, %cst_322 {dimension_numbers = #tpu.dot_dimension_numbers<[1], [0], [0], [1], [0, 0, 1, 1], [], []>} : vector<8x128xf32>, vector<128x8xf32>, vector<8x8xf32> -> vector<8x8xf32>
    %c0_323 = arith.constant 0 : index
    %c3_324 = arith.constant 3 : index
    %c0_325 = arith.constant 0 : index
    %c0_326 = arith.constant 0 : index
    %369 = vector.load %arg22[%c0_323, %c3_324, %c0_325, %c0_326] : memref<1x4x8x32xf32, #tpu.memory_space<vmem>>, vector<1x1x8x32xf32>
    %370 = vector.shape_cast %369 : vector<1x1x8x32xf32> to vector<8x32xf32>
    %cst_327 = arith.constant dense<0.000000e+00> : vector<8x32xf32>
    %371 = tpu.matmul %368, %370, %cst_327 {dimension_numbers = #tpu.dot_dimension_numbers<[1], [0], [0], [1], [0, 0, 1, 1], [], []>} : vector<8x8xf32>, vector<8x32xf32>, vector<8x32xf32> -> vector<8x32xf32>
    %372 = arith.addf %330, %371 : vector<8x32xf32>
    %373 = arith.addf %203, %372 : vector<8x32xf32>
    %c0_328 = arith.constant 0 : index
    %c0_329 = arith.constant 0 : index
    %c0_330 = arith.constant 0 : index
    %374 = vector.load %arg23[%c0_328, %c0_329, %c0_330] : memref<1x1x32xf32, #tpu.memory_space<vmem>>, vector<1x1x32xf32>
    %375 = vector.shape_cast %374 : vector<1x1x32xf32> to vector<1x32xf32>
    %376 = vector.broadcast %375 : vector<1x32xf32> to vector<8x32xf32>
    %377 = arith.addf %373, %376 : vector<8x32xf32>
    %c0_331 = arith.constant 0 : index
    %c0_332 = arith.constant 0 : index
    %c0_333 = arith.constant 0 : index
    %378 = vector.load %arg24[%c0_331, %c0_332, %c0_333] : memref<1x1x32xf32, #tpu.memory_space<vmem>>, vector<1x1x32xf32>
    %379 = vector.shape_cast %378 : vector<1x1x32xf32> to vector<1x32xf32>
    %c0_334 = arith.constant 0 : index
    %c0_335 = arith.constant 0 : index
    %c0_336 = arith.constant 0 : index
    %380 = vector.load %arg25[%c0_334, %c0_335, %c0_336] : memref<1x1x32xf32, #tpu.memory_space<vmem>>, vector<1x1x32xf32>
    %381 = vector.shape_cast %380 : vector<1x1x32xf32> to vector<1x32xf32>
    %cst_337 = arith.constant dense<0.000000e+00> : vector<8xf32>
    %382 = vector.multi_reduction <add>, %377, %cst_337 [1] : vector<8x32xf32> to vector<8xf32>
    %383 = vector.shape_cast %382 : vector<8xf32> to vector<8x1xf32>
    %cst_338 = arith.constant 3.200000e+01 : f32
    %384 = vector.broadcast %cst_338 : f32 to vector<8x1xf32>
    %385 = arith.divf %383, %384 : vector<8x1xf32>
    %386 = vector.broadcast %385 : vector<8x1xf32> to vector<8x32xf32>
    %387 = arith.subf %377, %386 : vector<8x32xf32>
    %388 = arith.mulf %387, %387 : vector<8x32xf32>
    %cst_339 = arith.constant dense<0.000000e+00> : vector<8xf32>
    %389 = vector.multi_reduction <add>, %388, %cst_339 [1] : vector<8x32xf32> to vector<8xf32>
    %390 = vector.shape_cast %389 : vector<8xf32> to vector<8x1xf32>
    %cst_340 = arith.constant 3.200000e+01 : f32
    %391 = vector.broadcast %cst_340 : f32 to vector<8x1xf32>
    %392 = arith.divf %390, %391 : vector<8x1xf32>
    %393 = vector.broadcast %385 : vector<8x1xf32> to vector<8x32xf32>
    %394 = arith.subf %377, %393 : vector<8x32xf32>
    %cst_341 = arith.constant 9.99999974E-6 : f32
    %395 = vector.broadcast %cst_341 : f32 to vector<8x1xf32>
    %396 = arith.addf %392, %395 : vector<8x1xf32>
    %397 = math.rsqrt %396 : vector<8x1xf32>
    %398 = vector.broadcast %397 : vector<8x1xf32> to vector<8x32xf32>
    %399 = arith.mulf %394, %398 : vector<8x32xf32>
    %400 = vector.broadcast %379 : vector<1x32xf32> to vector<8x32xf32>
    %401 = arith.mulf %399, %400 : vector<8x32xf32>
    %402 = vector.broadcast %381 : vector<1x32xf32> to vector<8x32xf32>
    %403 = arith.addf %401, %402 : vector<8x32xf32>
    %c0_342 = arith.constant 0 : index
    %c0_343 = arith.constant 0 : index
    %c0_344 = arith.constant 0 : index
    %404 = vector.load %arg26[%c0_342, %c0_343, %c0_344] : memref<1x32x64xf32, #tpu.memory_space<vmem>>, vector<1x32x64xf32>
    %405 = vector.shape_cast %404 : vector<1x32x64xf32> to vector<32x64xf32>
    %cst_345 = arith.constant dense<0.000000e+00> : vector<8x64xf32>
    %406 = tpu.matmul %403, %405, %cst_345 {dimension_numbers = #tpu.dot_dimension_numbers<[1], [0], [0], [1], [0, 0, 1, 1], [], []>} : vector<8x32xf32>, vector<32x64xf32>, vector<8x64xf32> -> vector<8x64xf32>
    %c0_346 = arith.constant 0 : index
    %c0_347 = arith.constant 0 : index
    %c0_348 = arith.constant 0 : index
    %407 = vector.load %arg27[%c0_346, %c0_347, %c0_348] : memref<1x1x64xf32, #tpu.memory_space<vmem>>, vector<1x1x64xf32>
    %408 = vector.shape_cast %407 : vector<1x1x64xf32> to vector<1x64xf32>
    %409 = vector.broadcast %408 : vector<1x64xf32> to vector<8x64xf32>
    %410 = arith.addf %406, %409 : vector<8x64xf32>
    %cst_349 = arith.constant 0.000000e+00 : f32
    %411 = vector.broadcast %cst_349 : f32 to vector<8x64xf32>
    %412 = arith.maximumf %410, %411 : vector<8x64xf32>
    %c0_350 = arith.constant 0 : index
    %c0_351 = arith.constant 0 : index
    %c0_352 = arith.constant 0 : index
    %413 = vector.load %arg28[%c0_350, %c0_351, %c0_352] : memref<1x64x32xf32, #tpu.memory_space<vmem>>, vector<1x64x32xf32>
    %414 = vector.shape_cast %413 : vector<1x64x32xf32> to vector<64x32xf32>
    %cst_353 = arith.constant dense<0.000000e+00> : vector<8x32xf32>
    %415 = tpu.matmul %412, %414, %cst_353 {dimension_numbers = #tpu.dot_dimension_numbers<[1], [0], [0], [1], [0, 0, 1, 1], [], []>} : vector<8x64xf32>, vector<64x32xf32>, vector<8x32xf32> -> vector<8x32xf32>
    %c0_354 = arith.constant 0 : index
    %c0_355 = arith.constant 0 : index
    %c0_356 = arith.constant 0 : index
    %416 = vector.load %arg29[%c0_354, %c0_355, %c0_356] : memref<1x1x32xf32, #tpu.memory_space<vmem>>, vector<1x1x32xf32>
    %417 = vector.shape_cast %416 : vector<1x1x32xf32> to vector<1x32xf32>
    %418 = vector.broadcast %417 : vector<1x32xf32> to vector<8x32xf32>
    %419 = arith.addf %415, %418 : vector<8x32xf32>
    %420 = arith.addf %403, %419 : vector<8x32xf32>
    %c0_357 = arith.constant 0 : index
    %c0_358 = arith.constant 0 : index
    %c0_359 = arith.constant 0 : index
    %421 = vector.load %arg30[%c0_357, %c0_358, %c0_359] : memref<1x1x32xf32, #tpu.memory_space<vmem>>, vector<1x1x32xf32>
    %422 = vector.shape_cast %421 : vector<1x1x32xf32> to vector<1x32xf32>
    %c0_360 = arith.constant 0 : index
    %c0_361 = arith.constant 0 : index
    %c0_362 = arith.constant 0 : index
    %423 = vector.load %arg31[%c0_360, %c0_361, %c0_362] : memref<1x1x32xf32, #tpu.memory_space<vmem>>, vector<1x1x32xf32>
    %424 = vector.shape_cast %423 : vector<1x1x32xf32> to vector<1x32xf32>
    %cst_363 = arith.constant dense<0.000000e+00> : vector<8xf32>
    %425 = vector.multi_reduction <add>, %420, %cst_363 [1] : vector<8x32xf32> to vector<8xf32>
    %426 = vector.shape_cast %425 : vector<8xf32> to vector<8x1xf32>
    %cst_364 = arith.constant 3.200000e+01 : f32
    %427 = vector.broadcast %cst_364 : f32 to vector<8x1xf32>
    %428 = arith.divf %426, %427 : vector<8x1xf32>
    %429 = vector.broadcast %428 : vector<8x1xf32> to vector<8x32xf32>
    %430 = arith.subf %420, %429 : vector<8x32xf32>
    %431 = arith.mulf %430, %430 : vector<8x32xf32>
    %cst_365 = arith.constant dense<0.000000e+00> : vector<8xf32>
    %432 = vector.multi_reduction <add>, %431, %cst_365 [1] : vector<8x32xf32> to vector<8xf32>
    %433 = vector.shape_cast %432 : vector<8xf32> to vector<8x1xf32>
    %cst_366 = arith.constant 3.200000e+01 : f32
    %434 = vector.broadcast %cst_366 : f32 to vector<8x1xf32>
    %435 = arith.divf %433, %434 : vector<8x1xf32>
    %436 = vector.broadcast %428 : vector<8x1xf32> to vector<8x32xf32>
    %437 = arith.subf %420, %436 : vector<8x32xf32>
    %cst_367 = arith.constant 9.99999974E-6 : f32
    %438 = vector.broadcast %cst_367 : f32 to vector<8x1xf32>
    %439 = arith.addf %435, %438 : vector<8x1xf32>
    %440 = math.rsqrt %439 : vector<8x1xf32>
    %441 = vector.broadcast %440 : vector<8x1xf32> to vector<8x32xf32>
    %442 = arith.mulf %437, %441 : vector<8x32xf32>
    %443 = vector.broadcast %422 : vector<1x32xf32> to vector<8x32xf32>
    %444 = arith.mulf %442, %443 : vector<8x32xf32>
    %445 = vector.broadcast %424 : vector<1x32xf32> to vector<8x32xf32>
    %446 = arith.addf %444, %445 : vector<8x32xf32>
    %c0_368 = arith.constant 0 : index
    %c0_369 = arith.constant 0 : index
    %447 = vector.load %arg34[%c0_368, %c0_369] : memref<8x32xf32, #tpu.memory_space<vmem>>, vector<8x32xf32>
    tpu.vector_store %arg34[%c0_368, %c0_369], %446 {strides = array<i32>} : memref<8x32xf32, #tpu.memory_space<vmem>>, vector<8x32xf32>,
    %c1_i32_370 = arith.constant 1 : i32
    %448 = arith.cmpi eq, %arg1, %c1_i32_370 : i32
    %449 = arith.extui %448 : i1 to i32
    %c0_i32_371 = arith.constant 0 : i32
    %450 = arith.cmpi ne, %449, %c0_i32_371 : i32
    scf.if %450 {
      %c0_372 = arith.constant 0 : index
      %c0_373 = arith.constant 0 : index
      %c0_374 = arith.constant 0 : index
      %451 = vector.load %arg32[%c0_372, %c0_373, %c0_374] : memref<1x8x32xf32, #tpu.memory_space<vmem>>, vector<1x8x32xf32>
      %452 = vector.shape_cast %451 : vector<1x8x32xf32> to vector<8x32xf32>
      %453 = vector.shape_cast %446 : vector<8x32xf32> to vector<1x8x32xf32>
      tpu.vector_store %arg32[%c0_372, %c0_373, %c0_374], %453 {strides = array<i32>} : memref<1x8x32xf32, #tpu.memory_space<vmem>>, vector<1x8x32xf32>,
    } else {
    }
    return
  }
  func.func @transform_0(%arg0: i32, %arg1: i32) -> (i32, i32, i32) {
    %c0_i32 = arith.constant 0 : i32
    %c0_i32_0 = arith.constant 0 : i32
    %c0_i32_1 = arith.constant 0 : i32
    return %arg0, %c0_i32, %c0_i32_0 : i32, i32, i32
  }
  func.func @transform_1(%arg0: i32, %arg1: i32) -> (i32, i32, i32) {
    %c0_i32 = arith.constant 0 : i32
    %c0_i32_0 = arith.constant 0 : i32
    %c0_i32_1 = arith.constant 0 : i32
    return %arg0, %c0_i32, %c0_i32_0 : i32, i32, i32
  }
  func.func @transform_2(%arg0: i32, %arg1: i32) -> (i32, i32, i32) {
    %c0_i32 = arith.constant 0 : i32
    %c0_i32_0 = arith.constant 0 : i32
    %c0_i32_1 = arith.constant 0 : i32
    return %arg0, %c0_i32, %c0_i32_0 : i32, i32, i32
  }
  func.func @transform_3(%arg0: i32, %arg1: i32) -> (i32, i32, i32) {
    %c0_i32 = arith.constant 0 : i32
    %c0_i32_0 = arith.constant 0 : i32
    %c0_i32_1 = arith.constant 0 : i32
    return %arg0, %c0_i32, %c0_i32_0 : i32, i32, i32
  }
  func.func @transform_4(%arg0: i32, %arg1: i32) -> (i32, i32, i32, i32) {
    %c0_i32 = arith.constant 0 : i32
    %c0_i32_0 = arith.constant 0 : i32
    %c0_i32_1 = arith.constant 0 : i32
    %c0_i32_2 = arith.constant 0 : i32
    return %arg1, %c0_i32, %c0_i32_0, %c0_i32_1 : i32, i32, i32, i32
  }
  func.func @transform_5(%arg0: i32, %arg1: i32) -> (i32, i32, i32, i32) {
    %c0_i32 = arith.constant 0 : i32
    %c0_i32_0 = arith.constant 0 : i32
    %c0_i32_1 = arith.constant 0 : i32
    %c0_i32_2 = arith.constant 0 : i32
    return %arg1, %c0_i32, %c0_i32_0, %c0_i32_1 : i32, i32, i32, i32
  }
  func.func @transform_6(%arg0: i32, %arg1: i32) -> (i32, i32, i32, i32) {
    %c0_i32 = arith.constant 0 : i32
    %c0_i32_0 = arith.constant 0 : i32
    %c0_i32_1 = arith.constant 0 : i32
    %c0_i32_2 = arith.constant 0 : i32
    return %arg1, %c0_i32, %c0_i32_0, %c0_i32_1 : i32, i32, i32, i32
  }
  func.func @transform_7(%arg0: i32, %arg1: i32) -> (i32, i32, i32, i32) {
    %c0_i32 = arith.constant 0 : i32
    %c0_i32_0 = arith.constant 0 : i32
    %c0_i32_1 = arith.constant 0 : i32
    %c0_i32_2 = arith.constant 0 : i32
    return %arg1, %c0_i32, %c0_i32_0, %c0_i32_1 : i32, i32, i32, i32
  }
  func.func @transform_8(%arg0: i32, %arg1: i32) -> (i32, i32, i32, i32) {
    %c0_i32 = arith.constant 0 : i32
    %c0_i32_0 = arith.constant 0 : i32
    %c0_i32_1 = arith.constant 0 : i32
    %c0_i32_2 = arith.constant 0 : i32
    return %arg1, %c0_i32, %c0_i32_0, %c0_i32_1 : i32, i32, i32, i32
  }
  func.func @transform_9(%arg0: i32, %arg1: i32) -> (i32, i32, i32, i32) {
    %c0_i32 = arith.constant 0 : i32
    %c0_i32_0 = arith.constant 0 : i32
    %c0_i32_1 = arith.constant 0 : i32
    %c0_i32_2 = arith.constant 0 : i32
    return %arg1, %c0_i32, %c0_i32_0, %c0_i32_1 : i32, i32, i32, i32
  }
  func.func @transform_10(%arg0: i32, %arg1: i32) -> (i32, i32, i32, i32) {
    %c0_i32 = arith.constant 0 : i32
    %c0_i32_0 = arith.constant 0 : i32
    %c0_i32_1 = arith.constant 0 : i32
    %c0_i32_2 = arith.constant 0 : i32
    return %arg1, %c0_i32, %c0_i32_0, %c0_i32_1 : i32, i32, i32, i32
  }
  func.func @transform_11(%arg0: i32, %arg1: i32) -> (i32, i32, i32) {
    %c0_i32 = arith.constant 0 : i32
    %c0_i32_0 = arith.constant 0 : i32
    %c0_i32_1 = arith.constant 0 : i32
    return %arg1, %c0_i32, %c0_i32_0 : i32, i32, i32
  }
  func.func @transform_12(%arg0: i32, %arg1: i32) -> (i32, i32, i32) {
    %c0_i32 = arith.constant 0 : i32
    %c0_i32_0 = arith.constant 0 : i32
    %c0_i32_1 = arith.constant 0 : i32
    return %arg1, %c0_i32, %c0_i32_0 : i32, i32, i32
  }
  func.func @transform_13(%arg0: i32, %arg1: i32) -> (i32, i32, i32) {
    %c0_i32 = arith.constant 0 : i32
    %c0_i32_0 = arith.constant 0 : i32
    %c0_i32_1 = arith.constant 0 : i32
    return %arg1, %c0_i32, %c0_i32_0 : i32, i32, i32
  }
  func.func @transform_14(%arg0: i32, %arg1: i32) -> (i32, i32, i32, i32) {
    %c0_i32 = arith.constant 0 : i32
    %c0_i32_0 = arith.constant 0 : i32
    %c0_i32_1 = arith.constant 0 : i32
    %c0_i32_2 = arith.constant 0 : i32
    return %arg1, %c0_i32, %c0_i32_0, %c0_i32_1 : i32, i32, i32, i32
  }
  func.func @transform_15(%arg0: i32, %arg1: i32) -> (i32, i32, i32, i32) {
    %c0_i32 = arith.constant 0 : i32
    %c0_i32_0 = arith.constant 0 : i32
    %c0_i32_1 = arith.constant 0 : i32
    %c0_i32_2 = arith.constant 0 : i32
    return %arg1, %c0_i32, %c0_i32_0, %c0_i32_1 : i32, i32, i32, i32
  }
  func.func @transform_16(%arg0: i32, %arg1: i32) -> (i32, i32, i32, i32) {
    %c0_i32 = arith.constant 0 : i32
    %c0_i32_0 = arith.constant 0 : i32
    %c0_i32_1 = arith.constant 0 : i32
    %c0_i32_2 = arith.constant 0 : i32
    return %arg1, %c0_i32, %c0_i32_0, %c0_i32_1 : i32, i32, i32, i32
  }
  func.func @transform_17(%arg0: i32, %arg1: i32) -> (i32, i32, i32, i32) {
    %c0_i32 = arith.constant 0 : i32
    %c0_i32_0 = arith.constant 0 : i32
    %c0_i32_1 = arith.constant 0 : i32
    %c0_i32_2 = arith.constant 0 : i32
    return %arg1, %c0_i32, %c0_i32_0, %c0_i32_1 : i32, i32, i32, i32
  }
  func.func @transform_18(%arg0: i32, %arg1: i32) -> (i32, i32, i32, i32) {
    %c0_i32 = arith.constant 0 : i32
    %c0_i32_0 = arith.constant 0 : i32
    %c0_i32_1 = arith.constant 0 : i32
    %c0_i32_2 = arith.constant 0 : i32
    return %arg1, %c0_i32, %c0_i32_0, %c0_i32_1 : i32, i32, i32, i32
  }
  func.func @transform_19(%arg0: i32, %arg1: i32) -> (i32, i32, i32, i32) {
    %c0_i32 = arith.constant 0 : i32
    %c0_i32_0 = arith.constant 0 : i32
    %c0_i32_1 = arith.constant 0 : i32
    %c0_i32_2 = arith.constant 0 : i32
    return %arg1, %c0_i32, %c0_i32_0, %c0_i32_1 : i32, i32, i32, i32
  }
  func.func @transform_20(%arg0: i32, %arg1: i32) -> (i32, i32, i32, i32) {
    %c0_i32 = arith.constant 0 : i32
    %c0_i32_0 = arith.constant 0 : i32
    %c0_i32_1 = arith.constant 0 : i32
    %c0_i32_2 = arith.constant 0 : i32
    return %arg1, %c0_i32, %c0_i32_0, %c0_i32_1 : i32, i32, i32, i32
  }
  func.func @transform_21(%arg0: i32, %arg1: i32) -> (i32, i32, i32) {
    %c0_i32 = arith.constant 0 : i32
    %c0_i32_0 = arith.constant 0 : i32
    %c0_i32_1 = arith.constant 0 : i32
    return %arg1, %c0_i32, %c0_i32_0 : i32, i32, i32
  }
  func.func @transform_22(%arg0: i32, %arg1: i32) -> (i32, i32, i32) {
    %c0_i32 = arith.constant 0 : i32
    %c0_i32_0 = arith.constant 0 : i32
    %c0_i32_1 = arith.constant 0 : i32
    return %arg1, %c0_i32, %c0_i32_0 : i32, i32, i32
  }
  func.func @transform_23(%arg0: i32, %arg1: i32) -> (i32, i32, i32) {
    %c0_i32 = arith.constant 0 : i32
    %c0_i32_0 = arith.constant 0 : i32
    %c0_i32_1 = arith.constant 0 : i32
    return %arg1, %c0_i32, %c0_i32_0 : i32, i32, i32
  }
  func.func @transform_24(%arg0: i32, %arg1: i32) -> (i32, i32, i32) {
    %c0_i32 = arith.constant 0 : i32
    %c0_i32_0 = arith.constant 0 : i32
    %c0_i32_1 = arith.constant 0 : i32
    return %arg1, %c0_i32, %c0_i32_0 : i32, i32, i32
  }
  func.func @transform_25(%arg0: i32, %arg1: i32) -> (i32, i32, i32) {
    %c0_i32 = arith.constant 0 : i32
    %c0_i32_0 = arith.constant 0 : i32
    %c0_i32_1 = arith.constant 0 : i32
    return %arg1, %c0_i32, %c0_i32_0 : i32, i32, i32
  }
  func.func @transform_26(%arg0: i32, %arg1: i32) -> (i32, i32, i32) {
    %c0_i32 = arith.constant 0 : i32
    %c0_i32_0 = arith.constant 0 : i32
    %c0_i32_1 = arith.constant 0 : i32
    return %arg1, %c0_i32, %c0_i32_0 : i32, i32, i32
  }
  func.func @transform_27(%arg0: i32, %arg1: i32) -> (i32, i32, i32) {
    %c0_i32 = arith.constant 0 : i32
    %c0_i32_0 = arith.constant 0 : i32
    %c0_i32_1 = arith.constant 0 : i32
    return %arg1, %c0_i32, %c0_i32_0 : i32, i32, i32
  }
  func.func @transform_28(%arg0: i32, %arg1: i32) -> (i32, i32, i32) {
    %c0_i32 = arith.constant 0 : i32
    %c0_i32_0 = arith.constant 0 : i32
    %c0_i32_1 = arith.constant 0 : i32
    return %arg1, %c0_i32, %c0_i32_0 : i32, i32, i32
  }
  func.func @transform_29(%arg0: i32, %arg1: i32) -> (i32, i32, i32) {
    %c0_i32 = arith.constant 0 : i32
    %c0_i32_0 = arith.constant 0 : i32
    %c0_i32_1 = arith.constant 0 : i32
    return %arg1, %c0_i32, %c0_i32_0 : i32, i32, i32
  }
  func.func @transform_30(%arg0: i32, %arg1: i32) -> (i32, i32, i32) {
    %c0_i32 = arith.constant 0 : i32
    %c0_i32_0 = arith.constant 0 : i32
    %c0_i32_1 = arith.constant 0 : i32
    return %arg0, %c0_i32, %c0_i32_0 : i32, i32, i32
  }
  func.func @transform_31(%arg0: i32, %arg1: i32) -> (i32, i32, i32, i32) {
    %c0_i32 = arith.constant 0 : i32
    %c0_i32_0 = arith.constant 0 : i32
    %c0_i32_1 = arith.constant 0 : i32
    %c0_i32_2 = arith.constant 0 : i32
    return %arg0, %c0_i32, %c0_i32_0, %c0_i32_1 : i32, i32, i32, i32
  }
}

</mosaic_0001>

<llo_original>
// kernel: decoder_forward.3
$region0: #{decoder_forward.3}
  #allocation0 [shape = 'u32[]', space=smem, size = 0x4, offset = 0x4, fixed_abs, tag = 'smem constant byte address 0x4 - core index']
  #allocation1 [shape = 'u32[72,128]{1,0:T(1,128)}', space=vmem, size = 0x9000, scoped, tag = 'internal scratch']
  %s0 = inlined_call_operand.vmem [shape: f32[16,32], index: 0, kind: input, shape index: {}]
  %s1 = inlined_call_operand.vmem [shape: f32[32,128], index: 1, kind: input, shape index: {}]
  %s2 = inlined_call_operand.vmem [shape: f32[1,128], index: 2, kind: input, shape index: {}]
  %s3 = inlined_call_operand.vmem [shape: f32[16,128], index: 3, kind: output, shape index: {}]
  %s4 = sld [smem:[#allocation0]]
  $region22: #{decoder_forward.3} parent=0
    _
  %s6 = ssub.s32 1, %s4
  %s7 = scalar_select 0, %s6, %s4
  // Predicated region
  $region2: #{decoder_forward.3} parent=0 // pred_check
    _
  $region3: #{decoder_forward.3} parent=0 // pred_check_branch
    %9 = sbr.rel (0) target = $region5
  $region4: #{decoder_forward.3} parent=0 // pred_region
    _
  $region5: #{decoder_forward.3} parent=0 // pred_fallthru
    _
  // Predicated region
  $region6: #{decoder_forward.3} parent=0 // pred_check
    _
  $region7: #{decoder_forward.3} parent=0 // pred_check_branch
    %11 = sbr.rel (0) target = $region9
  $region8: #{decoder_forward.3} parent=0 // pred_region
    _
  $region9: #{decoder_forward.3} parent=0 // pred_fallthru
    _
  // Predicated region
  $region10: #{decoder_forward.3} parent=0 // pred_check
    _
  $region11: #{decoder_forward.3} parent=0 // pred_check_branch
    %13 = sbr.rel (0) target = $region13
  $region12: #{decoder_forward.3} parent=0 // pred_region
    _
  $region13: #{decoder_forward.3} parent=0 // pred_fallthru
    _
  %v14 = vld [vmem:[%s0] sm:$0xff]
  %v15 = vld [vmem:[%s0 + $0x8] sm:$0xff]
  %v16 = vld [vmem:[%s1] sm:$0xff]
  %v17 = vld [vmem:[%s1 + $0x8] sm:$0xff]
  %v18 = vld [vmem:[%s1 + $0x10] sm:$0xff]
  %v19 = vld [vmem:[%s1 + $0x18] sm:$0xff]
  %v20 = vld [vmem:[%s2] sm:$0x1]
  %v22 = vperm.slane %v20, 0
  %vm24 = vcmask 261120
  %v26 = vsel %vm24, %v14, 0
  %v29 = vsel %vm24, %v15, 0
  %31 = vmatpush.msra.mxu0 0.0
  %32 = vmatpush.msra.mxu0 0.0
  %33 = vmatpush.msra.mxu0 0.0
  %34 = vmatpush.msra.mxu0 0.0
  %35 = vmatpush.msra.mxu0 0.0
  %36 = vmatpush.msra.mxu0 0.0
  %37 = vmatpush.msra.mxu0 0.0
  %38 = vmatpush.msra.mxu0 0.0
  %39 = vmatpush.msra.mxu0 0.0
  %40 = vmatpush.msra.mxu0 0.0
  %41 = vmatpush.msra.mxu0 0.0
  %42 = vmatpush.msra.mxu0 0.0
  %43 = vmatpush.msra.mxu0 %v19
  %44 = vmatpush.msra.mxu0 %v18
  %45 = vmatpush.msra.mxu0 %v17
  %46 = vmatpush.msra.mxu0 %v16
  %47 = vmatmul.f32.gmra.mxu0 %v26
  %v48 = vpop.f32.mrf.mxu0
  %v49 = vadd.f32 %v22, %v48
  %50 = vmatmul.f32.gmra.mxu0 %v29
  %v51 = vpop.f32.mrf.mxu0
  %v52 = vadd.f32 %v22, %v51
  %53 = vdwg.mxu0
  %54 = vst [vmem:[%s3] sm:$0xff] %v49
  %55 = vst [vmem:[%s3 + $0x8] sm:$0xff] %v52
  // Predicated region
  $region14: #{decoder_forward.3} parent=0 // pred_check
    _
  $region15: #{decoder_forward.3} parent=0 // pred_check_branch
    %57 = sbr.rel (0) target = $region17
  $region16: #{decoder_forward.3} parent=0 // pred_region
    _
  $region17: #{decoder_forward.3} parent=0 // pred_fallthru
    _
  // Predicated region
  $region18: #{decoder_forward.3} parent=0 // pred_check
    _
  $region19: #{decoder_forward.3} parent=0 // pred_check_branch
    %59 = sbr.rel (0) target = $region21
  $region20: #{decoder_forward.3} parent=0 // pred_region
    _
  $region21: #{decoder_forward.3} parent=0 // pred_fallthru
    _

// kernel: decoder_forward.2
$region0: #{decoder_forward.2}
  #allocation0 [shape = 'u32[]', space=smem, size = 0x4, offset = 0x4, fixed_abs, tag = 'smem constant byte address 0x4 - core index']
  #allocation1 [shape = 'u32[72,128]{1,0:T(1,128)}', space=vmem, size = 0x9000, scoped, tag = 'internal scratch']
  #allocation2 [shape = 'f32[8,32]{1,0:T(8,128)}', space=vmem, size = 0x1000, scoped, tag = 'scratch operand']
  %s0 = inlined_call_operand.smem [shape: u32[32], index: -1, kind: input, shape index: {}]
  %s1 = sld [smem:[%s0]]
  %s2 = scalar_lea.smem %s0, 1
  %s3 = sld [smem:[%s2]]
  %s4 = scalar_lea.smem %s0, 2
  %s5 = sld [smem:[%s4]]
  %s6 = scalar_lea.smem %s0, 3
  %s7 = sld [smem:[%s6]]
  %s8 = scalar_lea.smem %s0, 4
  %s9 = sld [smem:[%s8]]
  %s10 = scalar_lea.smem %s0, 5
  %s11 = sld [smem:[%s10]]
  %s12 = scalar_lea.smem %s0, 6
  %s13 = sld [smem:[%s12]]
  %s14 = scalar_lea.smem %s0, 7
  %s15 = sld [smem:[%s14]]
  %s16 = scalar_lea.smem %s0, 8
  %s17 = sld [smem:[%s16]]
  %s18 = scalar_lea.smem %s0, 9
  %s19 = sld [smem:[%s18]]
  %s20 = scalar_lea.smem %s0, 10
  %s21 = sld [smem:[%s20]]
  %s22 = scalar_lea.smem %s0, 11
  %s23 = sld [smem:[%s22]]
  %s24 = scalar_lea.smem %s0, 12
  %s25 = sld [smem:[%s24]]
  %s26 = scalar_lea.smem %s0, 13
  %s27 = sld [smem:[%s26]]
  %s28 = scalar_lea.smem %s0, 14
  %s29 = sld [smem:[%s28]]
  %s30 = scalar_lea.smem %s0, 15
  %s31 = sld [smem:[%s30]]
  %s32 = scalar_lea.smem %s0, 16
  %s33 = sld [smem:[%s32]]
  %s34 = scalar_lea.smem %s0, 17
  %s35 = sld [smem:[%s34]]
  %s36 = scalar_lea.smem %s0, 18
  %s37 = sld [smem:[%s36]]
  %s38 = scalar_lea.smem %s0, 19
  %s39 = sld [smem:[%s38]]
  %s40 = scalar_lea.smem %s0, 20
  %s41 = sld [smem:[%s40]]
  %s42 = scalar_lea.smem %s0, 21
  %s43 = sld [smem:[%s42]]
  %s44 = scalar_lea.smem %s0, 22
  %s45 = sld [smem:[%s44]]
  %s46 = scalar_lea.smem %s0, 23
  %s47 = sld [smem:[%s46]]
  %s48 = scalar_lea.smem %s0, 24
  %s49 = sld [smem:[%s48]]
  %s50 = scalar_lea.smem %s0, 25
  %s51 = sld [smem:[%s50]]
  %s52 = scalar_lea.smem %s0, 26
  %s53 = sld [smem:[%s52]]
  %s54 = scalar_lea.smem %s0, 27
  %s55 = sld [smem:[%s54]]
  %s56 = scalar_lea.smem %s0, 28
  %s57 = sld [smem:[%s56]]
  %s58 = scalar_lea.smem %s0, 29
  %s59 = sld [smem:[%s58]]
  %s60 = scalar_lea.smem %s0, 30
  %s61 = sld [smem:[%s60]]
  %s62 = scalar_lea.smem %s0, 31
  %s63 = sld [smem:[%s62]]
  %64 = xla_tuple %s61, %s63
  %s65 = sld [smem:[#allocation0]]
  $region185: #{decoder_forward.2} parent=0
    _
  %s67 = ssub.s32 1, %s65
  %s68 = scalar_select 0, %s67, %s65
  $region1: #{decoder_forward.2} parent=0
    #allocation3 [shape = 'u8[32768]{0}', space=vmem, size = 0x8000, scoped, tag = 'output window, operand 1']
    #allocation4 [shape = 's32[2]{0}', space=sflag, size = 0x8, scoped, tag = 'scoped memory for decoder_forward.2']
    %69 = vsyncpa [#allocation4], 0
    %s70 = scalar_lea.sflag [#allocation4], 1
    %71 = vsyncpa %s70, 0
    loop: start=0, step=1, limit=6
    $region2: #{decoder_forward.2} parent=1 // loop_pre_header
      _
    $region3: #{decoder_forward.2} parent=1 // loop_header
      %s73 = sphi 0, %s77
      %p74 = scmp.ge.s32.totalorder %s73, 6
      %s80 = sphi 0, %s92
      %s81 = sphi 0, %s88
      %s82 = sphi 0, %s80
      %s83 = sphi 0, %s81
      %s84 = sphi 0, %s82
      %s85 = sphi 0, %s83
      %s95 = sphi 0, %s97
      %s98 = sphi 0, %s95
      %s99 = sphi 0, %s98
      %s115 = sphi 0, %s99
      %s121 = sphi 0, %s123
      %s124 = sphi 0, %s121
      %s125 = sphi 0, %s124
      %s141 = sphi 0, %s125
      %s147 = sphi 0, %s149
      %s150 = sphi 0, %s147
      %s151 = sphi 0, %s150
      %s167 = sphi 0, %s151
      %s173 = sphi 0, %s175
      %s176 = sphi 0, %s173
      %s177 = sphi 0, %s176
      %s193 = sphi 0, %s177
      %s199 = sphi 0, %s201
      %s202 = sphi 0, %s199
      %s203 = sphi 0, %s202
      %s219 = sphi 0, %s203
      %s225 = sphi 0, %s227
      %s228 = sphi 0, %s225
      %s229 = sphi 0, %s228
      %s245 = sphi 0, %s229
      %s251 = sphi 0, %s253
      %s254 = sphi 0, %s251
      %s255 = sphi 0, %s254
      %s271 = sphi 0, %s255
      %s277 = sphi 0, %s279
      %s280 = sphi 0, %s277
      %s281 = sphi 0, %s280
      %s297 = sphi 0, %s281
      %s303 = sphi 0, %s305
      %s306 = sphi 0, %s303
      %s307 = sphi 0, %s306
      %s323 = sphi 0, %s307
      %s329 = sphi 0, %s331
      %s332 = sphi 0, %s329
      %s333 = sphi 0, %s332
      %s349 = sphi 0, %s333
      %s355 = sphi 0, %s357
      %s358 = sphi 0, %s355
      %s359 = sphi 0, %s358
      %s375 = sphi 0, %s359
      %s381 = sphi 0, %s383
      %s384 = sphi 0, %s381
      %s385 = sphi 0, %s384
      %s401 = sphi 0, %s385
      %s407 = sphi 0, %s409
      %s410 = sphi 0, %s407
      %s411 = sphi 0, %s410
      %s427 = sphi 0, %s411
      %s433 = sphi 0, %s435
      %s436 = sphi 0, %s433
      %s437 = sphi 0, %s436
      %s453 = sphi 0, %s437
      %s459 = sphi 0, %s461
      %s462 = sphi 0, %s459
      %s463 = sphi 0, %s462
      %s479 = sphi 0, %s463
      %s485 = sphi 0, %s487
      %s488 = sphi 0, %s485
      %s489 = sphi 0, %s488
      %s505 = sphi 0, %s489
      %s511 = sphi 0, %s513
      %s514 = sphi 0, %s511
      %s515 = sphi 0, %s514
      %s531 = sphi 0, %s515
      %s537 = sphi 0, %s539
      %s540 = sphi 0, %s537
      %s541 = sphi 0, %s540
      %s557 = sphi 0, %s541
      %s563 = sphi 0, %s565
      %s566 = sphi 0, %s563
      %s567 = sphi 0, %s566
      %s583 = sphi 0, %s567
      %s589 = sphi 0, %s591
      %s592 = sphi 0, %s589
      %s593 = sphi 0, %s592
      %s609 = sphi 0, %s593
      %s615 = sphi 0, %s617
      %s618 = sphi 0, %s615
      %s619 = sphi 0, %s618
      %s635 = sphi 0, %s619
      %s641 = sphi 0, %s643
      %s644 = sphi 0, %s641
      %s645 = sphi 0, %s644
      %s661 = sphi 0, %s645
      %s667 = sphi 0, %s669
      %s670 = sphi 0, %s667
      %s671 = sphi 0, %s670
      %s687 = sphi 0, %s671
      %s693 = sphi 0, %s695
      %s696 = sphi 0, %s693
      %s697 = sphi 0, %s696
      %s713 = sphi 0, %s697
      %s719 = sphi 0, %s721
      %s722 = sphi 0, %s719
      %s723 = sphi 0, %s722
      %s739 = sphi 0, %s723
      %s745 = sphi 0, %s747
      %s748 = sphi 0, %s745
      %s749 = sphi 0, %s748
      %s765 = sphi 0, %s749
      %s771 = sphi 0, %s773
      %s774 = sphi 0, %s771
      %s775 = sphi 0, %s774
      %s791 = sphi 0, %s775
      %s797 = sphi 0, %s799
      %s800 = sphi 0, %s797
      %s801 = sphi 0, %s800
      %s817 = sphi 0, %s801
      %s823 = sphi 0, %s825
      %s826 = sphi 0, %s823
      %s827 = sphi 0, %s826
      %s843 = sphi 0, %s827
      %s849 = sphi 0, %s851
      %s852 = sphi 0, %s849
      %s853 = sphi 0, %s852
      %s869 = sphi 0, %s853
      %s875 = sphi 0, %s877
      %s878 = sphi 0, %s875
      %s879 = sphi 0, %s878
      %s895 = sphi 0, %s879
      %s901 = sphi 0, %s903
      %s904 = sphi 0, %s901
      %s905 = sphi 0, %s904
      %s921 = sphi 0, %s905
    $region4: #{decoder_forward.2} parent=1 // loop_header_branch
      %76 = sbr.rel (%p74) target = $region8
    $region5: #{decoder_forward.2} parent=1 // loop_body
      %s78 = ssub.s32 %s73, 1
      %s79 = ssub.s32 %s73, 2
      %s86 = sadd.s32 1, %s81
      %p87 = scmp.ge.s32.totalorder %s86, 2
      %s88 = scalar_select %p87, 0, %s86
      %s89 = sadd.s32 1, %s80
      %s90 = scalar_select %p87, %s89, %s80
      %p91 = scmp.ge.s32.totalorder %s90, 2
      %s92 = scalar_select %p91, 0, %s90
      %s93 = ssub.s32 %s80, %s92
      %p94 = scmp.eq.s32.totalorder %s93, 0
      %s96 = sadd.s32 %s95, 1
      %s97 = scalar_select %p94, %s95, %s96
      %p100 = pneg %p94
      %p101 = scmp.eq.s32.totalorder %s73, 3
      %p102 = por %p100, %p101
      %p103 = scmp.ne.s32.totalorder %s95, %s98
      %p104 = scmp.eq.s32.totalorder %s73, 0
      %p105 = por %p103, %p104
      %p106 = scmp.ne.s32.totalorder %s95, %s98
      %p107 = scmp.eq.s32.totalorder %s78, 3
      %p108 = por %p106, %p107
      %p109 = scmp.ne.s32.totalorder %s98, %s99
      %p110 = scmp.eq.s32.totalorder %s78, 0
      %p111 = por %p109, %p110
      %p112 = scmp.ne.s32.totalorder %s98, %s99
      %p113 = scmp.eq.s32.totalorder %s79, 3
      %p114 = por %p112, %p113
      %p116 = scmp.ne.s32.totalorder %s99, %s115
      %p117 = scmp.eq.s32.totalorder %s79, 0
      %p118 = por %p116, %p117
      %s119 = ssub.s32 %s80, %s92
      %p120 = scmp.eq.s32.totalorder %s119, 0
      %s122 = sadd.s32 %s121, 1
      %s123 = scalar_select %p120, %s121, %s122
      %p126 = pneg %p120
      %p127 = scmp.eq.s32.totalorder %s73, 3
      %p128 = por %p126, %p127
      %p129 = scmp.ne.s32.totalorder %s121, %s124
      %p130 = scmp.eq.s32.totalorder %s73, 0
      %p131 = por %p129, %p130
      %p132 = scmp.ne.s32.totalorder %s121, %s124
      %p133 = scmp.eq.s32.totalorder %s78, 3
      %p134 = por %p132, %p133
      %p135 = scmp.ne.s32.totalorder %s124, %s125
      %p136 = scmp.eq.s32.totalorder %s78, 0
      %p137 = por %p135, %p136
      %p138 = scmp.ne.s32.totalorder %s124, %s125
      %p139 = scmp.eq.s32.totalorder %s79, 3
      %p140 = por %p138, %p139
      %p142 = scmp.ne.s32.totalorder %s125, %s141
      %p143 = scmp.eq.s32.totalorder %s79, 0
      %p144 = por %p142, %p143
      %s145 = ssub.s32 %s80, %s92
      %p146 = scmp.eq.s32.totalorder %s145, 0
      %s148 = sadd.s32 %s147, 1
      %s149 = scalar_select %p146, %s147, %s148
      %p152 = pneg %p146
      %p153 = scmp.eq.s32.totalorder %s73, 3
      %p154 = por %p152, %p153
      %p155 = scmp.ne.s32.totalorder %s147, %s150
      %p156 = scmp.eq.s32.totalorder %s73, 0
      %p157 = por %p155, %p156
      %p158 = scmp.ne.s32.totalorder %s147, %s150
      %p159 = scmp.eq.s32.totalorder %s78, 3
      %p160 = por %p158, %p159
      %p161 = scmp.ne.s32.totalorder %s150, %s151
      %p162 = scmp.eq.s32.totalorder %s78, 0
      %p163 = por %p161, %p162
      %p164 = scmp.ne.s32.totalorder %s150, %s151
      %p165 = scmp.eq.s32.totalorder %s79, 3
      %p166 = por %p164, %p165
      %p168 = scmp.ne.s32.totalorder %s151, %s167
      %p169 = scmp.eq.s32.totalorder %s79, 0
      %p170 = por %p168, %p169
      %s171 = ssub.s32 %s80, %s92
      %p172 = scmp.eq.s32.totalorder %s171, 0
      %s174 = sadd.s32 %s173, 1
      %s175 = scalar_select %p172, %s173, %s174
      %p178 = pneg %p172
      %p179 = scmp.eq.s32.totalorder %s73, 3
      %p180 = por %p178, %p179
      %p181 = scmp.ne.s32.totalorder %s173, %s176
      %p182 = scmp.eq.s32.totalorder %s73, 0
      %p183 = por %p181, %p182
      %p184 = scmp.ne.s32.totalorder %s173, %s176
      %p185 = scmp.eq.s32.totalorder %s78, 3
      %p186 = por %p184, %p185
      %p187 = scmp.ne.s32.totalorder %s176, %s177
      %p188 = scmp.eq.s32.totalorder %s78, 0
      %p189 = por %p187, %p188
      %p190 = scmp.ne.s32.totalorder %s176, %s177
      %p191 = scmp.eq.s32.totalorder %s79, 3
      %p192 = por %p190, %p191
      %p194 = scmp.ne.s32.totalorder %s177, %s193
      %p195 = scmp.eq.s32.totalorder %s79, 0
      %p196 = por %p194, %p195
      %s197 = ssub.s32 %s81, %s88
      %p198 = scmp.eq.s32.totalorder %s197, 0
      %s200 = sadd.s32 %s199, 1
      %s201 = scalar_select %p198, %s199, %s200
      %p204 = pneg %p198
      %p205 = scmp.eq.s32.totalorder %s73, 3
      %p206 = por %p204, %p205
      %p207 = scmp.ne.s32.totalorder %s199, %s202
      %p208 = scmp.eq.s32.totalorder %s73, 0
      %p209 = por %p207, %p208
      %p210 = scmp.ne.s32.totalorder %s199, %s202
      %p211 = scmp.eq.s32.totalorder %s78, 3
      %p212 = por %p210, %p211
      %p213 = scmp.ne.s32.totalorder %s202, %s203
      %p214 = scmp.eq.s32.totalorder %s78, 0
      %p215 = por %p213, %p214
      %p216 = scmp.ne.s32.totalorder %s202, %s203
      %p217 = scmp.eq.s32.totalorder %s79, 3
      %p218 = por %p216, %p217
      %p220 = scmp.ne.s32.totalorder %s203, %s219
      %p221 = scmp.eq.s32.totalorder %s79, 0
      %p222 = por %p220, %p221
      %s223 = ssub.s32 %s81, %s88
      %p224 = scmp.eq.s32.totalorder %s223, 0
      %s226 = sadd.s32 %s225, 1
      %s227 = scalar_select %p224, %s225, %s226
      %p230 = pneg %p224
      %p231 = scmp.eq.s32.totalorder %s73, 3
      %p232 = por %p230, %p231
      %p233 = scmp.ne.s32.totalorder %s225, %s228
      %p234 = scmp.eq.s32.totalorder %s73, 0
      %p235 = por %p233, %p234
      %p236 = scmp.ne.s32.totalorder %s225, %s228
      %p237 = scmp.eq.s32.totalorder %s78, 3
      %p238 = por %p236, %p237
      %p239 = scmp.ne.s32.totalorder %s228, %s229
      %p240 = scmp.eq.s32.totalorder %s78, 0
      %p241 = por %p239, %p240
      %p242 = scmp.ne.s32.totalorder %s228, %s229
      %p243 = scmp.eq.s32.totalorder %s79, 3
      %p244 = por %p242, %p243
      %p246 = scmp.ne.s32.totalorder %s229, %s245
      %p247 = scmp.eq.s32.totalorder %s79, 0
      %p248 = por %p246, %p247
      %s249 = ssub.s32 %s81, %s88
      %p250 = scmp.eq.s32.totalorder %s249, 0
      %s252 = sadd.s32 %s251, 1
      %s253 = scalar_select %p250, %s251, %s252
      %p256 = pneg %p250
      %p257 = scmp.eq.s32.totalorder %s73, 3
      %p258 = por %p256, %p257
      %p259 = scmp.ne.s32.totalorder %s251, %s254
      %p260 = scmp.eq.s32.totalorder %s73, 0
      %p261 = por %p259, %p260
      %p262 = scmp.ne.s32.totalorder %s251, %s254
      %p263 = scmp.eq.s32.totalorder %s78, 3
      %p264 = por %p262, %p263
      %p265 = scmp.ne.s32.totalorder %s254, %s255
      %p266 = scmp.eq.s32.totalorder %s78, 0
      %p267 = por %p265, %p266
      %p268 = scmp.ne.s32.totalorder %s254, %s255
      %p269 = scmp.eq.s32.totalorder %s79, 3
      %p270 = por %p268, %p269
      %p272 = scmp.ne.s32.totalorder %s255, %s271
      %p273 = scmp.eq.s32.totalorder %s79, 0
      %p274 = por %p272, %p273
      %s275 = ssub.s32 %s81, %s88
      %p276 = scmp.eq.s32.totalorder %s275, 0
      %s278 = sadd.s32 %s277, 1
      %s279 = scalar_select %p276, %s277, %s278
      %p282 = pneg %p276
      %p283 = scmp.eq.s32.totalorder %s73, 3
      %p284 = por %p282, %p283
      %p285 = scmp.ne.s32.totalorder %s277, %s280
      %p286 = scmp.eq.s32.totalorder %s73, 0
      %p287 = por %p285, %p286
      %p288 = scmp.ne.s32.totalorder %s277, %s280
      %p289 = scmp.eq.s32.totalorder %s78, 3
      %p290 = por %p288, %p289
      %p291 = scmp.ne.s32.totalorder %s280, %s281
      %p292 = scmp.eq.s32.totalorder %s78, 0
      %p293 = por %p291, %p292
      %p294 = scmp.ne.s32.totalorder %s280, %s281
      %p295 = scmp.eq.s32.totalorder %s79, 3
      %p296 = por %p294, %p295
      %p298 = scmp.ne.s32.totalorder %s281, %s297
      %p299 = scmp.eq.s32.totalorder %s79, 0
      %p300 = por %p298, %p299
      %s301 = ssub.s32 %s81, %s88
      %p302 = scmp.eq.s32.totalorder %s301, 0
      %s304 = sadd.s32 %s303, 1
      %s305 = scalar_select %p302, %s303, %s304
      %p308 = pneg %p302
      %p309 = scmp.eq.s32.totalorder %s73, 3
      %p310 = por %p308, %p309
      %p311 = scmp.ne.s32.totalorder %s303, %s306
      %p312 = scmp.eq.s32.totalorder %s73, 0
      %p313 = por %p311, %p312
      %p314 = scmp.ne.s32.totalorder %s303, %s306
      %p315 = scmp.eq.s32.totalorder %s78, 3
      %p316 = por %p314, %p315
      %p317 = scmp.ne.s32.totalorder %s306, %s307
      %p318 = scmp.eq.s32.totalorder %s78, 0
      %p319 = por %p317, %p318
      %p320 = scmp.ne.s32.totalorder %s306, %s307
      %p321 = scmp.eq.s32.totalorder %s79, 3
      %p322 = por %p320, %p321
      %p324 = scmp.ne.s32.totalorder %s307, %s323
      %p325 = scmp.eq.s32.totalorder %s79, 0
      %p326 = por %p324, %p325
      %s327 = ssub.s32 %s81, %s88
      %p328 = scmp.eq.s32.totalorder %s327, 0
      %s330 = sadd.s32 %s329, 1
      %s331 = scalar_select %p328, %s329, %s330
      %p334 = pneg %p328
      %p335 = scmp.eq.s32.totalorder %s73, 3
      %p336 = por %p334, %p335
      %p337 = scmp.ne.s32.totalorder %s329, %s332
      %p338 = scmp.eq.s32.totalorder %s73, 0
      %p339 = por %p337, %p338
      %p340 = scmp.ne.s32.totalorder %s329, %s332
      %p341 = scmp.eq.s32.totalorder %s78, 3
      %p342 = por %p340, %p341
      %p343 = scmp.ne.s32.totalorder %s332, %s333
      %p344 = scmp.eq.s32.totalorder %s78, 0
      %p345 = por %p343, %p344
      %p346 = scmp.ne.s32.totalorder %s332, %s333
      %p347 = scmp.eq.s32.totalorder %s79, 3
      %p348 = por %p346, %p347
      %p350 = scmp.ne.s32.totalorder %s333, %s349
      %p351 = scmp.eq.s32.totalorder %s79, 0
      %p352 = por %p350, %p351
      %s353 = ssub.s32 %s81, %s88
      %p354 = scmp.eq.s32.totalorder %s353, 0
      %s356 = sadd.s32 %s355, 1
      %s357 = scalar_select %p354, %s355, %s356
      %p360 = pneg %p354
      %p361 = scmp.eq.s32.totalorder %s73, 3
      %p362 = por %p360, %p361
      %p363 = scmp.ne.s32.totalorder %s355, %s358
      %p364 = scmp.eq.s32.totalorder %s73, 0
      %p365 = por %p363, %p364
      %p366 = scmp.ne.s32.totalorder %s355, %s358
      %p367 = scmp.eq.s32.totalorder %s78, 3
      %p368 = por %p366, %p367
      %p369 = scmp.ne.s32.totalorder %s358, %s359
      %p370 = scmp.eq.s32.totalorder %s78, 0
      %p371 = por %p369, %p370
      %p372 = scmp.ne.s32.totalorder %s358, %s359
      %p373 = scmp.eq.s32.totalorder %s79, 3
      %p374 = por %p372, %p373
      %p376 = scmp.ne.s32.totalorder %s359, %s375
      %p377 = scmp.eq.s32.totalorder %s79, 0
      %p378 = por %p376, %p377
      %s379 = ssub.s32 %s81, %s88
      %p380 = scmp.eq.s32.totalorder %s379, 0
      %s382 = sadd.s32 %s381, 1
      %s383 = scalar_select %p380, %s381, %s382
      %p386 = pneg %p380
      %p387 = scmp.eq.s32.totalorder %s73, 3
      %p388 = por %p386, %p387
      %p389 = scmp.ne.s32.totalorder %s381, %s384
      %p390 = scmp.eq.s32.totalorder %s73, 0
      %p391 = por %p389, %p390
      %p392 = scmp.ne.s32.totalorder %s381, %s384
      %p393 = scmp.eq.s32.totalorder %s78, 3
      %p394 = por %p392, %p393
      %p395 = scmp.ne.s32.totalorder %s384, %s385
      %p396 = scmp.eq.s32.totalorder %s78, 0
      %p397 = por %p395, %p396
      %p398 = scmp.ne.s32.totalorder %s384, %s385
      %p399 = scmp.eq.s32.totalorder %s79, 3
      %p400 = por %p398, %p399
      %p402 = scmp.ne.s32.totalorder %s385, %s401
      %p403 = scmp.eq.s32.totalorder %s79, 0
      %p404 = por %p402, %p403
      %s405 = ssub.s32 %s81, %s88
      %p406 = scmp.eq.s32.totalorder %s405, 0
      %s408 = sadd.s32 %s407, 1
      %s409 = scalar_select %p406, %s407, %s408
      %p412 = pneg %p406
      %p413 = scmp.eq.s32.totalorder %s73, 3
      %p414 = por %p412, %p413
      %p415 = scmp.ne.s32.totalorder %s407, %s410
      %p416 = scmp.eq.s32.totalorder %s73, 0
      %p417 = por %p415, %p416
      %p418 = scmp.ne.s32.totalorder %s407, %s410
      %p419 = scmp.eq.s32.totalorder %s78, 3
      %p420 = por %p418, %p419
      %p421 = scmp.ne.s32.totalorder %s410, %s411
      %p422 = scmp.eq.s32.totalorder %s78, 0
      %p423 = por %p421, %p422
      %p424 = scmp.ne.s32.totalorder %s410, %s411
      %p425 = scmp.eq.s32.totalorder %s79, 3
      %p426 = por %p424, %p425
      %p428 = scmp.ne.s32.totalorder %s411, %s427
      %p429 = scmp.eq.s32.totalorder %s79, 0
      %p430 = por %p428, %p429
      %s431 = ssub.s32 %s81, %s88
      %p432 = scmp.eq.s32.totalorder %s431, 0
      %s434 = sadd.s32 %s433, 1
      %s435 = scalar_select %p432, %s433, %s434
      %p438 = pneg %p432
      %p439 = scmp.eq.s32.totalorder %s73, 3
      %p440 = por %p438, %p439
      %p441 = scmp.ne.s32.totalorder %s433, %s436
      %p442 = scmp.eq.s32.totalorder %s73, 0
      %p443 = por %p441, %p442
      %p444 = scmp.ne.s32.totalorder %s433, %s436
      %p445 = scmp.eq.s32.totalorder %s78, 3
      %p446 = por %p444, %p445
      %p447 = scmp.ne.s32.totalorder %s436, %s437
      %p448 = scmp.eq.s32.totalorder %s78, 0
      %p449 = por %p447, %p448
      %p450 = scmp.ne.s32.totalorder %s436, %s437
      %p451 = scmp.eq.s32.totalorder %s79, 3
      %p452 = por %p450, %p451
      %p454 = scmp.ne.s32.totalorder %s437, %s453
      %p455 = scmp.eq.s32.totalorder %s79, 0
      %p456 = por %p454, %p455
      %s457 = ssub.s32 %s81, %s88
      %p458 = scmp.eq.s32.totalorder %s457, 0
      %s460 = sadd.s32 %s459, 1
      %s461 = scalar_select %p458, %s459, %s460
      %p464 = pneg %p458
      %p465 = scmp.eq.s32.totalorder %s73, 3
      %p466 = por %p464, %p465
      %p467 = scmp.ne.s32.totalorder %s459, %s462
      %p468 = scmp.eq.s32.totalorder %s73, 0
      %p469 = por %p467, %p468
      %p470 = scmp.ne.s32.totalorder %s459, %s462
      %p471 = scmp.eq.s32.totalorder %s78, 3
      %p472 = por %p470, %p471
      %p473 = scmp.ne.s32.totalorder %s462, %s463
      %p474 = scmp.eq.s32.totalorder %s78, 0
      %p475 = por %p473, %p474
      %p476 = scmp.ne.s32.totalorder %s462, %s463
      %p477 = scmp.eq.s32.totalorder %s79, 3
      %p478 = por %p476, %p477
      %p480 = scmp.ne.s32.totalorder %s463, %s479
      %p481 = scmp.eq.s32.totalorder %s79, 0
      %p482 = por %p480, %p481
      %s483 = ssub.s32 %s81, %s88
      %p484 = scmp.eq.s32.totalorder %s483, 0
      %s486 = sadd.s32 %s485, 1
      %s487 = scalar_select %p484, %s485, %s486
      %p490 = pneg %p484
      %p491 = scmp.eq.s32.totalorder %s73, 3
      %p492 = por %p490, %p491
      %p493 = scmp.ne.s32.totalorder %s485, %s488
      %p494 = scmp.eq.s32.totalorder %s73, 0
      %p495 = por %p493, %p494
      %p496 = scmp.ne.s32.totalorder %s485, %s488
      %p497 = scmp.eq.s32.totalorder %s78, 3
      %p498 = por %p496, %p497
      %p499 = scmp.ne.s32.totalorder %s488, %s489
      %p500 = scmp.eq.s32.totalorder %s78, 0
      %p501 = por %p499, %p500
      %p502 = scmp.ne.s32.totalorder %s488, %s489
      %p503 = scmp.eq.s32.totalorder %s79, 3
      %p504 = por %p502, %p503
      %p506 = scmp.ne.s32.totalorder %s489, %s505
      %p507 = scmp.eq.s32.totalorder %s79, 0
      %p508 = por %p506, %p507
      %s509 = ssub.s32 %s81, %s88
      %p510 = scmp.eq.s32.totalorder %s509, 0
      %s512 = sadd.s32 %s511, 1
      %s513 = scalar_select %p510, %s511, %s512
      %p516 = pneg %p510
      %p517 = scmp.eq.s32.totalorder %s73, 3
      %p518 = por %p516, %p517
      %p519 = scmp.ne.s32.totalorder %s511, %s514
      %p520 = scmp.eq.s32.totalorder %s73, 0
      %p521 = por %p519, %p520
      %p522 = scmp.ne.s32.totalorder %s511, %s514
      %p523 = scmp.eq.s32.totalorder %s78, 3
      %p524 = por %p522, %p523
      %p525 = scmp.ne.s32.totalorder %s514, %s515
      %p526 = scmp.eq.s32.totalorder %s78, 0
      %p527 = por %p525, %p526
      %p528 = scmp.ne.s32.totalorder %s514, %s515
      %p529 = scmp.eq.s32.totalorder %s79, 3
      %p530 = por %p528, %p529
      %p532 = scmp.ne.s32.totalorder %s515, %s531
      %p533 = scmp.eq.s32.totalorder %s79, 0
      %p534 = por %p532, %p533
      %s535 = ssub.s32 %s81, %s88
      %p536 = scmp.eq.s32.totalorder %s535, 0
      %s538 = sadd.s32 %s537, 1
      %s539 = scalar_select %p536, %s537, %s538
      %p542 = pneg %p536
      %p543 = scmp.eq.s32.totalorder %s73, 3
      %p544 = por %p542, %p543
      %p545 = scmp.ne.s32.totalorder %s537, %s540
      %p546 = scmp.eq.s32.totalorder %s73, 0
      %p547 = por %p545, %p546
      %p548 = scmp.ne.s32.totalorder %s537, %s540
      %p549 = scmp.eq.s32.totalorder %s78, 3
      %p550 = por %p548, %p549
      %p551 = scmp.ne.s32.totalorder %s540, %s541
      %p552 = scmp.eq.s32.totalorder %s78, 0
      %p553 = por %p551, %p552
      %p554 = scmp.ne.s32.totalorder %s540, %s541
      %p555 = scmp.eq.s32.totalorder %s79, 3
      %p556 = por %p554, %p555
      %p558 = scmp.ne.s32.totalorder %s541, %s557
      %p559 = scmp.eq.s32.totalorder %s79, 0
      %p560 = por %p558, %p559
      %s561 = ssub.s32 %s81, %s88
      %p562 = scmp.eq.s32.totalorder %s561, 0
      %s564 = sadd.s32 %s563, 1
      %s565 = scalar_select %p562, %s563, %s564
      %p568 = pneg %p562
      %p569 = scmp.eq.s32.totalorder %s73, 3
      %p570 = por %p568, %p569
      %p571 = scmp.ne.s32.totalorder %s563, %s566
      %p572 = scmp.eq.s32.totalorder %s73, 0
      %p573 = por %p571, %p572
      %p574 = scmp.ne.s32.totalorder %s563, %s566
      %p575 = scmp.eq.s32.totalorder %s78, 3
      %p576 = por %p574, %p575
      %p577 = scmp.ne.s32.totalorder %s566, %s567
      %p578 = scmp.eq.s32.totalorder %s78, 0
      %p579 = por %p577, %p578
      %p580 = scmp.ne.s32.totalorder %s566, %s567
      %p581 = scmp.eq.s32.totalorder %s79, 3
      %p582 = por %p580, %p581
      %p584 = scmp.ne.s32.totalorder %s567, %s583
      %p585 = scmp.eq.s32.totalorder %s79, 0
      %p586 = por %p584, %p585
      %s587 = ssub.s32 %s81, %s88
      %p588 = scmp.eq.s32.totalorder %s587, 0
      %s590 = sadd.s32 %s589, 1
      %s591 = scalar_select %p588, %s589, %s590
      %p594 = pneg %p588
      %p595 = scmp.eq.s32.totalorder %s73, 3
      %p596 = por %p594, %p595
      %p597 = scmp.ne.s32.totalorder %s589, %s592
      %p598 = scmp.eq.s32.totalorder %s73, 0
      %p599 = por %p597, %p598
      %p600 = scmp.ne.s32.totalorder %s589, %s592
      %p601 = scmp.eq.s32.totalorder %s78, 3
      %p602 = por %p600, %p601
      %p603 = scmp.ne.s32.totalorder %s592, %s593
      %p604 = scmp.eq.s32.totalorder %s78, 0
      %p605 = por %p603, %p604
      %p606 = scmp.ne.s32.totalorder %s592, %s593
      %p607 = scmp.eq.s32.totalorder %s79, 3
      %p608 = por %p606, %p607
      %p610 = scmp.ne.s32.totalorder %s593, %s609
      %p611 = scmp.eq.s32.totalorder %s79, 0
      %p612 = por %p610, %p611
      %s613 = ssub.s32 %s81, %s88
      %p614 = scmp.eq.s32.totalorder %s613, 0
      %s616 = sadd.s32 %s615, 1
      %s617 = scalar_select %p614, %s615, %s616
      %p620 = pneg %p614
      %p621 = scmp.eq.s32.totalorder %s73, 3
      %p622 = por %p620, %p621
      %p623 = scmp.ne.s32.totalorder %s615, %s618
      %p624 = scmp.eq.s32.totalorder %s73, 0
      %p625 = por %p623, %p624
      %p626 = scmp.ne.s32.totalorder %s615, %s618
      %p627 = scmp.eq.s32.totalorder %s78, 3
      %p628 = por %p626, %p627
      %p629 = scmp.ne.s32.totalorder %s618, %s619
      %p630 = scmp.eq.s32.totalorder %s78, 0
      %p631 = por %p629, %p630
      %p632 = scmp.ne.s32.totalorder %s618, %s619
      %p633 = scmp.eq.s32.totalorder %s79, 3
      %p634 = por %p632, %p633
      %p636 = scmp.ne.s32.totalorder %s619, %s635
      %p637 = scmp.eq.s32.totalorder %s79, 0
      %p638 = por %p636, %p637
      %s639 = ssub.s32 %s81, %s88
      %p640 = scmp.eq.s32.totalorder %s639, 0
      %s642 = sadd.s32 %s641, 1
      %s643 = scalar_select %p640, %s641, %s642
      %p646 = pneg %p640
      %p647 = scmp.eq.s32.totalorder %s73, 3
      %p648 = por %p646, %p647
      %p649 = scmp.ne.s32.totalorder %s641, %s644
      %p650 = scmp.eq.s32.totalorder %s73, 0
      %p651 = por %p649, %p650
      %p652 = scmp.ne.s32.totalorder %s641, %s644
      %p653 = scmp.eq.s32.totalorder %s78, 3
      %p654 = por %p652, %p653
      %p655 = scmp.ne.s32.totalorder %s644, %s645
      %p656 = scmp.eq.s32.totalorder %s78, 0
      %p657 = por %p655, %p656
      %p658 = scmp.ne.s32.totalorder %s644, %s645
      %p659 = scmp.eq.s32.totalorder %s79, 3
      %p660 = por %p658, %p659
      %p662 = scmp.ne.s32.totalorder %s645, %s661
      %p663 = scmp.eq.s32.totalorder %s79, 0
      %p664 = por %p662, %p663
      %s665 = ssub.s32 %s81, %s88
      %p666 = scmp.eq.s32.totalorder %s665, 0
      %s668 = sadd.s32 %s667, 1
      %s669 = scalar_select %p666, %s667, %s668
      %p672 = pneg %p666
      %p673 = scmp.eq.s32.totalorder %s73, 3
      %p674 = por %p672, %p673
      %p675 = scmp.ne.s32.totalorder %s667, %s670
      %p676 = scmp.eq.s32.totalorder %s73, 0
      %p677 = por %p675, %p676
      %p678 = scmp.ne.s32.totalorder %s667, %s670
      %p679 = scmp.eq.s32.totalorder %s78, 3
      %p680 = por %p678, %p679
      %p681 = scmp.ne.s32.totalorder %s670, %s671
      %p682 = scmp.eq.s32.totalorder %s78, 0
      %p683 = por %p681, %p682
      %p684 = scmp.ne.s32.totalorder %s670, %s671
      %p685 = scmp.eq.s32.totalorder %s79, 3
      %p686 = por %p684, %p685
      %p688 = scmp.ne.s32.totalorder %s671, %s687
      %p689 = scmp.eq.s32.totalorder %s79, 0
      %p690 = por %p688, %p689
      %s691 = ssub.s32 %s81, %s88
      %p692 = scmp.eq.s32.totalorder %s691, 0
      %s694 = sadd.s32 %s693, 1
      %s695 = scalar_select %p692, %s693, %s694
      %p698 = pneg %p692
      %p699 = scmp.eq.s32.totalorder %s73, 3
      %p700 = por %p698, %p699
      %p701 = scmp.ne.s32.totalorder %s693, %s696
      %p702 = scmp.eq.s32.totalorder %s73, 0
      %p703 = por %p701, %p702
      %p704 = scmp.ne.s32.totalorder %s693, %s696
      %p705 = scmp.eq.s32.totalorder %s78, 3
      %p706 = por %p704, %p705
      %p707 = scmp.ne.s32.totalorder %s696, %s697
      %p708 = scmp.eq.s32.totalorder %s78, 0
      %p709 = por %p707, %p708
      %p710 = scmp.ne.s32.totalorder %s696, %s697
      %p711 = scmp.eq.s32.totalorder %s79, 3
      %p712 = por %p710, %p711
      %p714 = scmp.ne.s32.totalorder %s697, %s713
      %p715 = scmp.eq.s32.totalorder %s79, 0
      %p716 = por %p714, %p715
      %s717 = ssub.s32 %s81, %s88
      %p718 = scmp.eq.s32.totalorder %s717, 0
      %s720 = sadd.s32 %s719, 1
      %s721 = scalar_select %p718, %s719, %s720
      %p724 = pneg %p718
      %p725 = scmp.eq.s32.totalorder %s73, 3
      %p726 = por %p724, %p725
      %p727 = scmp.ne.s32.totalorder %s719, %s722
      %p728 = scmp.eq.s32.totalorder %s73, 0
      %p729 = por %p727, %p728
      %p730 = scmp.ne.s32.totalorder %s719, %s722
      %p731 = scmp.eq.s32.totalorder %s78, 3
      %p732 = por %p730, %p731
      %p733 = scmp.ne.s32.totalorder %s722, %s723
      %p734 = scmp.eq.s32.totalorder %s78, 0
      %p735 = por %p733, %p734
      %p736 = scmp.ne.s32.totalorder %s722, %s723
      %p737 = scmp.eq.s32.totalorder %s79, 3
      %p738 = por %p736, %p737
      %p740 = scmp.ne.s32.totalorder %s723, %s739
      %p741 = scmp.eq.s32.totalorder %s79, 0
      %p742 = por %p740, %p741
      %s743 = ssub.s32 %s81, %s88
      %p744 = scmp.eq.s32.totalorder %s743, 0
      %s746 = sadd.s32 %s745, 1
      %s747 = scalar_select %p744, %s745, %s746
      %p750 = pneg %p744
      %p751 = scmp.eq.s32.totalorder %s73, 3
      %p752 = por %p750, %p751
      %p753 = scmp.ne.s32.totalorder %s745, %s748
      %p754 = scmp.eq.s32.totalorder %s73, 0
      %p755 = por %p753, %p754
      %p756 = scmp.ne.s32.totalorder %s745, %s748
      %p757 = scmp.eq.s32.totalorder %s78, 3
      %p758 = por %p756, %p757
      %p759 = scmp.ne.s32.totalorder %s748, %s749
      %p760 = scmp.eq.s32.totalorder %s78, 0
      %p761 = por %p759, %p760
      %p762 = scmp.ne.s32.totalorder %s748, %s749
      %p763 = scmp.eq.s32.totalorder %s79, 3
      %p764 = por %p762, %p763
      %p766 = scmp.ne.s32.totalorder %s749, %s765
      %p767 = scmp.eq.s32.totalorder %s79, 0
      %p768 = por %p766, %p767
      %s769 = ssub.s32 %s81, %s88
      %p770 = scmp.eq.s32.totalorder %s769, 0
      %s772 = sadd.s32 %s771, 1
      %s773 = scalar_select %p770, %s771, %s772
      %p776 = pneg %p770
      %p777 = scmp.eq.s32.totalorder %s73, 3
      %p778 = por %p776, %p777
      %p779 = scmp.ne.s32.totalorder %s771, %s774
      %p780 = scmp.eq.s32.totalorder %s73, 0
      %p781 = por %p779, %p780
      %p782 = scmp.ne.s32.totalorder %s771, %s774
      %p783 = scmp.eq.s32.totalorder %s78, 3
      %p784 = por %p782, %p783
      %p785 = scmp.ne.s32.totalorder %s774, %s775
      %p786 = scmp.eq.s32.totalorder %s78, 0
      %p787 = por %p785, %p786
      %p788 = scmp.ne.s32.totalorder %s774, %s775
      %p789 = scmp.eq.s32.totalorder %s79, 3
      %p790 = por %p788, %p789
      %p792 = scmp.ne.s32.totalorder %s775, %s791
      %p793 = scmp.eq.s32.totalorder %s79, 0
      %p794 = por %p792, %p793
      %s795 = ssub.s32 %s81, %s88
      %p796 = scmp.eq.s32.totalorder %s795, 0
      %s798 = sadd.s32 %s797, 1
      %s799 = scalar_select %p796, %s797, %s798
      %p802 = pneg %p796
      %p803 = scmp.eq.s32.totalorder %s73, 3
      %p804 = por %p802, %p803
      %p805 = scmp.ne.s32.totalorder %s797, %s800
      %p806 = scmp.eq.s32.totalorder %s73, 0
      %p807 = por %p805, %p806
      %p808 = scmp.ne.s32.totalorder %s797, %s800
      %p809 = scmp.eq.s32.totalorder %s78, 3
      %p810 = por %p808, %p809
      %p811 = scmp.ne.s32.totalorder %s800, %s801
      %p812 = scmp.eq.s32.totalorder %s78, 0
      %p813 = por %p811, %p812
      %p814 = scmp.ne.s32.totalorder %s800, %s801
      %p815 = scmp.eq.s32.totalorder %s79, 3
      %p816 = por %p814, %p815
      %p818 = scmp.ne.s32.totalorder %s801, %s817
      %p819 = scmp.eq.s32.totalorder %s79, 0
      %p820 = por %p818, %p819
      %s821 = ssub.s32 %s81, %s88
      %p822 = scmp.eq.s32.totalorder %s821, 0
      %s824 = sadd.s32 %s823, 1
      %s825 = scalar_select %p822, %s823, %s824
      %p828 = pneg %p822
      %p829 = scmp.eq.s32.totalorder %s73, 3
      %p830 = por %p828, %p829
      %p831 = scmp.ne.s32.totalorder %s823, %s826
      %p832 = scmp.eq.s32.totalorder %s73, 0
      %p833 = por %p831, %p832
      %p834 = scmp.ne.s32.totalorder %s823, %s826
      %p835 = scmp.eq.s32.totalorder %s78, 3
      %p836 = por %p834, %p835
      %p837 = scmp.ne.s32.totalorder %s826, %s827
      %p838 = scmp.eq.s32.totalorder %s78, 0
      %p839 = por %p837, %p838
      %p840 = scmp.ne.s32.totalorder %s826, %s827
      %p841 = scmp.eq.s32.totalorder %s79, 3
      %p842 = por %p840, %p841
      %p844 = scmp.ne.s32.totalorder %s827, %s843
      %p845 = scmp.eq.s32.totalorder %s79, 0
      %p846 = por %p844, %p845
      %s847 = ssub.s32 %s81, %s88
      %p848 = scmp.eq.s32.totalorder %s847, 0
      %s850 = sadd.s32 %s849, 1
      %s851 = scalar_select %p848, %s849, %s850
      %p854 = pneg %p848
      %p855 = scmp.eq.s32.totalorder %s73, 3
      %p856 = por %p854, %p855
      %p857 = scmp.ne.s32.totalorder %s849, %s852
      %p858 = scmp.eq.s32.totalorder %s73, 0
      %p859 = por %p857, %p858
      %p860 = scmp.ne.s32.totalorder %s849, %s852
      %p861 = scmp.eq.s32.totalorder %s78, 3
      %p862 = por %p860, %p861
      %p863 = scmp.ne.s32.totalorder %s852, %s853
      %p864 = scmp.eq.s32.totalorder %s78, 0
      %p865 = por %p863, %p864
      %p866 = scmp.ne.s32.totalorder %s852, %s853
      %p867 = scmp.eq.s32.totalorder %s79, 3
      %p868 = por %p866, %p867
      %p870 = scmp.ne.s32.totalorder %s853, %s869
      %p871 = scmp.eq.s32.totalorder %s79, 0
      %p872 = por %p870, %p871
      %s873 = ssub.s32 %s80, %s92
      %p874 = scmp.eq.s32.totalorder %s873, 0
      %s876 = sadd.s32 %s875, 1
      %s877 = scalar_select %p874, %s875, %s876
      %p880 = pneg %p874
      %p881 = scmp.eq.s32.totalorder %s73, 3
      %p882 = por %p880, %p881
      %p883 = scmp.ne.s32.totalorder %s875, %s878
      %p884 = scmp.eq.s32.totalorder %s73, 0
      %p885 = por %p883, %p884
      %p886 = scmp.ne.s32.totalorder %s875, %s878
      %p887 = scmp.eq.s32.totalorder %s78, 3
      %p888 = por %p886, %p887
      %p889 = scmp.ne.s32.totalorder %s878, %s879
      %p890 = scmp.eq.s32.totalorder %s78, 0
      %p891 = por %p889, %p890
      %p892 = scmp.ne.s32.totalorder %s878, %s879
      %p893 = scmp.eq.s32.totalorder %s79, 3
      %p894 = por %p892, %p893
      %p896 = scmp.ne.s32.totalorder %s879, %s895
      %p897 = scmp.eq.s32.totalorder %s79, 0
      %p898 = por %p896, %p897
      %s899 = ssub.s32 %s80, %s92
      %p900 = scmp.eq.s32.totalorder %s899, 0
      %s902 = sadd.s32 %s901, 1
      %s903 = scalar_select %p900, %s901, %s902
      %p906 = pneg %p900
      %p907 = scmp.eq.s32.totalorder %s73, 3
      %p908 = por %p906, %p907
      %p909 = scmp.ne.s32.totalorder %s901, %s904
      %p910 = scmp.eq.s32.totalorder %s73, 0
      %p911 = por %p909, %p910
      %p912 = scmp.ne.s32.totalorder %s901, %s904
      %p913 = scmp.eq.s32.totalorder %s78, 3
      %p914 = por %p912, %p913
      %p915 = scmp.ne.s32.totalorder %s904, %s905
      %p916 = scmp.eq.s32.totalorder %s78, 0
      %p917 = por %p915, %p916
      %p918 = scmp.ne.s32.totalorder %s904, %s905
      %p919 = scmp.eq.s32.totalorder %s79, 3
      %p920 = por %p918, %p919
      %p922 = scmp.ne.s32.totalorder %s905, %s921
      %p923 = scmp.eq.s32.totalorder %s79, 0
      %p924 = por %p922, %p923
      %p925 = scmp.le.s32.totalorder 1, %s73
      %p926 = scmp.lt.s32.totalorder %s73, 5
      %p927 = pnand %p925, %p926
      %p928 = pneg %p927
      // Predicated region
      $region9: #{decoder_forward.2} parent=5 // pred_check
        _
      $region10: #{decoder_forward.2} parent=5 // pred_check_branch
        %930 = sbr.rel (%p927) target = $region12
      $region11: #{decoder_forward.2} parent=5 // pred_region
        %s931 = ssub.s32 %s73, 1
      $region12: #{decoder_forward.2} parent=5 // pred_fallthru
        _
      %p932 = scmp.lt.s32.totalorder %s73, 4
      // Predicated region
      $region13: #{decoder_forward.2} parent=5 // pred_check
        %p933 = pneg %p932
      $region14: #{decoder_forward.2} parent=5 // pred_check_branch
        %935 = sbr.rel (%p933) target = $region16
      $region15: #{decoder_forward.2} parent=5 // pred_region
        // Predicated region
        $region17: #{decoder_forward.2} parent=15 // pred_check
          %p936 = pneg %p105
        $region18: #{decoder_forward.2} parent=15 // pred_check_branch
          %938 = sbr.rel (%p936) target = $region20
        $region19: #{decoder_forward.2} parent=15 // pred_region
          %p939 = scmp.lt.s32.totalorder %s80, 1
          %s940 = scalar_select %p939, %s80, 1
          %s941 = smul.addr %s940, 8
          %s942 = scalar_lea.vmem %s1, %s941
        $region20: #{decoder_forward.2} parent=15 // pred_fallthru
          _
        // Predicated region
        $region21: #{decoder_forward.2} parent=15 // pred_check
          %p943 = pneg %p131
        $region22: #{decoder_forward.2} parent=15 // pred_check_branch
          %945 = sbr.rel (%p943) target = $region24
        $region23: #{decoder_forward.2} parent=15 // pred_region
          %p946 = scmp.lt.s32.totalorder %s80, 1
          %s947 = scalar_select %p946, %s80, 1
          %s948 = smul.addr %s947, 16
          %s949 = smul.addr %s948, 8
          %s950 = scalar_lea.vmem %s3, %s949
        $region24: #{decoder_forward.2} parent=15 // pred_fallthru
          _
        // Predicated region
        $region25: #{decoder_forward.2} parent=15 // pred_check
          %p951 = pneg %p157
        $region26: #{decoder_forward.2} parent=15 // pred_check_branch
          %953 = sbr.rel (%p951) target = $region28
        $region27: #{decoder_forward.2} parent=15 // pred_region
          %p954 = scmp.lt.s32.totalorder %s80, 1
          %s955 = scalar_select %p954, %s80, 1
          %s956 = smul.addr %s955, 8
          %s957 = scalar_lea.vmem %s5, %s956
        $region28: #{decoder_forward.2} parent=15 // pred_fallthru
          _
        // Predicated region
        $region29: #{decoder_forward.2} parent=15 // pred_check
          %p958 = pneg %p183
        $region30: #{decoder_forward.2} parent=15 // pred_check_branch
          %960 = sbr.rel (%p958) target = $region32
        $region31: #{decoder_forward.2} parent=15 // pred_region
          %p961 = scmp.lt.s32.totalorder %s80, 1
          %s962 = scalar_select %p961, %s80, 1
          %s963 = scalar_lea.vmem %s7, %s962
        $region32: #{decoder_forward.2} parent=15 // pred_fallthru
          _
        // Predicated region
        $region33: #{decoder_forward.2} parent=15 // pred_check
          %p964 = pneg %p209
        $region34: #{decoder_forward.2} parent=15 // pred_check_branch
          %966 = sbr.rel (%p964) target = $region36
        $region35: #{decoder_forward.2} parent=15 // pred_region
          %p967 = scmp.lt.s32.totalorder %s81, 1
          %s968 = scalar_select %p967, %s81, 1
          %s969 = smul.addr %s968, 16
          %s970 = smul.addr %s969, 8
          %s971 = scalar_lea.vmem %s9, %s970
        $region36: #{decoder_forward.2} parent=15 // pred_fallthru
          _
        // Predicated region
        $region37: #{decoder_forward.2} parent=15 // pred_check
          %p972 = pneg %p235
        $region38: #{decoder_forward.2} parent=15 // pred_check_branch
          %974 = sbr.rel (%p972) target = $region40
        $region39: #{decoder_forward.2} parent=15 // pred_region
          %p975 = scmp.lt.s32.totalorder %s81, 1
          %s976 = scalar_select %p975, %s81, 1
          %s977 = smul.addr %s976, 4
          %s978 = scalar_lea.vmem %s11, %s977
        $region40: #{decoder_forward.2} parent=15 // pred_fallthru
          _
        // Predicated region
        $region41: #{decoder_forward.2} parent=15 // pred_check
          %p979 = pneg %p261
        $region42: #{decoder_forward.2} parent=15 // pred_check_branch
          %981 = sbr.rel (%p979) target = $region44
        $region43: #{decoder_forward.2} parent=15 // pred_region
          %p982 = scmp.lt.s32.totalorder %s81, 1
          %s983 = scalar_select %p982, %s81, 1
          %s984 = smul.addr %s983, 16
          %s985 = smul.addr %s984, 8
          %s986 = scalar_lea.vmem %s13, %s985
        $region44: #{decoder_forward.2} parent=15 // pred_fallthru
          _
        // Predicated region
        $region45: #{decoder_forward.2} parent=15 // pred_check
          %p987 = pneg %p287
        $region46: #{decoder_forward.2} parent=15 // pred_check_branch
          %989 = sbr.rel (%p987) target = $region48
        $region47: #{decoder_forward.2} parent=15 // pred_region
          %p990 = scmp.lt.s32.totalorder %s81, 1
          %s991 = scalar_select %p990, %s81, 1
          %s992 = smul.addr %s991, 4
          %s993 = scalar_lea.vmem %s15, %s992
        $region48: #{decoder_forward.2} parent=15 // pred_fallthru
          _
        // Predicated region
        $region49: #{decoder_forward.2} parent=15 // pred_check
          %p994 = pneg %p313
        $region50: #{decoder_forward.2} parent=15 // pred_check_branch
          %996 = sbr.rel (%p994) target = $region52
        $region51: #{decoder_forward.2} parent=15 // pred_region
          %p997 = scmp.lt.s32.totalorder %s81, 1
          %s998 = scalar_select %p997, %s81, 1
          %s999 = smul.addr %s998, 16
          %s1000 = smul.addr %s999, 8
          %s1001 = scalar_lea.vmem %s17, %s1000
        $region52: #{decoder_forward.2} parent=15 // pred_fallthru
          _
        // Predicated region
        $region53: #{decoder_forward.2} parent=15 // pred_check
          %p1002 = pneg %p339
        $region54: #{decoder_forward.2} parent=15 // pred_check_branch
          %1004 = sbr.rel (%p1002) target = $region56
        $region55: #{decoder_forward.2} parent=15 // pred_region
          %p1005 = scmp.lt.s32.totalorder %s81, 1
          %s1006 = scalar_select %p1005, %s81, 1
          %s1007 = smul.addr %s1006, 4
          %s1008 = scalar_lea.vmem %s19, %s1007
        $region56: #{decoder_forward.2} parent=15 // pred_fallthru
          _
        // Predicated region
        $region57: #{decoder_forward.2} parent=15 // pred_check
          %p1009 = pneg %p365
        $region58: #{decoder_forward.2} parent=15 // pred_check_branch
          %1011 = sbr.rel (%p1009) target = $region60
        $region59: #{decoder_forward.2} parent=15 // pred_region
          %p1012 = scmp.lt.s32.totalorder %s81, 1
          %s1013 = scalar_select %p1012, %s81, 1
          %s1014 = smul.addr %s1013, 4
          %s1015 = smul.addr %s1014, 8
          %s1016 = scalar_lea.vmem %s21, %s1015
        $region60: #{decoder_forward.2} parent=15 // pred_fallthru
          _
        // Predicated region
        $region61: #{decoder_forward.2} parent=15 // pred_check
          %p1017 = pneg %p391
        $region62: #{decoder_forward.2} parent=15 // pred_check_branch
          %1019 = sbr.rel (%p1017) target = $region64
        $region63: #{decoder_forward.2} parent=15 // pred_region
          %p1020 = scmp.lt.s32.totalorder %s81, 1
          %s1021 = scalar_select %p1020, %s81, 1
          %s1022 = scalar_lea.vmem %s23, %s1021
        $region64: #{decoder_forward.2} parent=15 // pred_fallthru
          _
        // Predicated region
        $region65: #{decoder_forward.2} parent=15 // pred_check
          %p1023 = pneg %p417
        $region66: #{decoder_forward.2} parent=15 // pred_check_branch
          %1025 = sbr.rel (%p1023) target = $region68
        $region67: #{decoder_forward.2} parent=15 // pred_region
          %p1026 = scmp.lt.s32.totalorder %s81, 1
          %s1027 = scalar_select %p1026, %s81, 1
          %s1028 = scalar_lea.vmem %s25, %s1027
        $region68: #{decoder_forward.2} parent=15 // pred_fallthru
          _
        // Predicated region
        $region69: #{decoder_forward.2} parent=15 // pred_check
          %p1029 = pneg %p443
        $region70: #{decoder_forward.2} parent=15 // pred_check_branch
          %1031 = sbr.rel (%p1029) target = $region72
        $region71: #{decoder_forward.2} parent=15 // pred_region
          %p1032 = scmp.lt.s32.totalorder %s81, 1
          %s1033 = scalar_select %p1032, %s81, 1
          %s1034 = scalar_lea.vmem %s27, %s1033
        $region72: #{decoder_forward.2} parent=15 // pred_fallthru
          _
        // Predicated region
        $region73: #{decoder_forward.2} parent=15 // pred_check
          %p1035 = pneg %p469
        $region74: #{decoder_forward.2} parent=15 // pred_check_branch
          %1037 = sbr.rel (%p1035) target = $region76
        $region75: #{decoder_forward.2} parent=15 // pred_region
          %p1038 = scmp.lt.s32.totalorder %s81, 1
          %s1039 = scalar_select %p1038, %s81, 1
          %s1040 = smul.addr %s1039, 16
          %s1041 = smul.addr %s1040, 8
          %s1042 = scalar_lea.vmem %s29, %s1041
        $region76: #{decoder_forward.2} parent=15 // pred_fallthru
          _
        // Predicated region
        $region77: #{decoder_forward.2} parent=15 // pred_check
          %p1043 = pneg %p495
        $region78: #{decoder_forward.2} parent=15 // pred_check_branch
          %1045 = sbr.rel (%p1043) target = $region80
        $region79: #{decoder_forward.2} parent=15 // pred_region
          %p1046 = scmp.lt.s32.totalorder %s81, 1
          %s1047 = scalar_select %p1046, %s81, 1
          %s1048 = smul.addr %s1047, 4
          %s1049 = scalar_lea.vmem %s31, %s1048
        $region80: #{decoder_forward.2} parent=15 // pred_fallthru
          _
        // Predicated region
        $region81: #{decoder_forward.2} parent=15 // pred_check
          %p1050 = pneg %p521
        $region82: #{decoder_forward.2} parent=15 // pred_check_branch
          %1052 = sbr.rel (%p1050) target = $region84
        $region83: #{decoder_forward.2} parent=15 // pred_region
          %p1053 = scmp.lt.s32.totalorder %s81, 1
          %s1054 = scalar_select %p1053, %s81, 1
          %s1055 = smul.addr %s1054, 16
          %s1056 = smul.addr %s1055, 8
          %s1057 = scalar_lea.vmem %s33, %s1056
        $region84: #{decoder_forward.2} parent=15 // pred_fallthru
          _
        // Predicated region
        $region85: #{decoder_forward.2} parent=15 // pred_check
          %p1058 = pneg %p547
        $region86: #{decoder_forward.2} parent=15 // pred_check_branch
          %1060 = sbr.rel (%p1058) target = $region88
        $region87: #{decoder_forward.2} parent=15 // pred_region
          %p1061 = scmp.lt.s32.totalorder %s81, 1
          %s1062 = scalar_select %p1061, %s81, 1
          %s1063 = smul.addr %s1062, 4
          %s1064 = scalar_lea.vmem %s35, %s1063
        $region88: #{decoder_forward.2} parent=15 // pred_fallthru
          _
        // Predicated region
        $region89: #{decoder_forward.2} parent=15 // pred_check
          %p1065 = pneg %p573
        $region90: #{decoder_forward.2} parent=15 // pred_check_branch
          %1067 = sbr.rel (%p1065) target = $region92
        $region91: #{decoder_forward.2} parent=15 // pred_region
          %p1068 = scmp.lt.s32.totalorder %s81, 1
          %s1069 = scalar_select %p1068, %s81, 1
          %s1070 = smul.addr %s1069, 16
          %s1071 = smul.addr %s1070, 8
          %s1072 = scalar_lea.vmem %s37, %s1071
        $region92: #{decoder_forward.2} parent=15 // pred_fallthru
          _
        // Predicated region
        $region93: #{decoder_forward.2} parent=15 // pred_check
          %p1073 = pneg %p599
        $region94: #{decoder_forward.2} parent=15 // pred_check_branch
          %1075 = sbr.rel (%p1073) target = $region96
        $region95: #{decoder_forward.2} parent=15 // pred_region
          %p1076 = scmp.lt.s32.totalorder %s81, 1
          %s1077 = scalar_select %p1076, %s81, 1
          %s1078 = smul.addr %s1077, 4
          %s1079 = scalar_lea.vmem %s39, %s1078
        $region96: #{decoder_forward.2} parent=15 // pred_fallthru
          _
        // Predicated region
        $region97: #{decoder_forward.2} parent=15 // pred_check
          %p1080 = pneg %p625
        $region98: #{decoder_forward.2} parent=15 // pred_check_branch
          %1082 = sbr.rel (%p1080) target = $region100
        $region99: #{decoder_forward.2} parent=15 // pred_region
          %p1083 = scmp.lt.s32.totalorder %s81, 1
          %s1084 = scalar_select %p1083, %s81, 1
          %s1085 = smul.addr %s1084, 4
          %s1086 = smul.addr %s1085, 8
          %s1087 = scalar_lea.vmem %s41, %s1086
        $region100: #{decoder_forward.2} parent=15 // pred_fallthru
          _
        // Predicated region
        $region101: #{decoder_forward.2} parent=15 // pred_check
          %p1088 = pneg %p651
        $region102: #{decoder_forward.2} parent=15 // pred_check_branch
          %1090 = sbr.rel (%p1088) target = $region104
        $region103: #{decoder_forward.2} parent=15 // pred_region
          %p1091 = scmp.lt.s32.totalorder %s81, 1
          %s1092 = scalar_select %p1091, %s81, 1
          %s1093 = scalar_lea.vmem %s43, %s1092
        $region104: #{decoder_forward.2} parent=15 // pred_fallthru
          _
        // Predicated region
        $region105: #{decoder_forward.2} parent=15 // pred_check
          %p1094 = pneg %p677
        $region106: #{decoder_forward.2} parent=15 // pred_check_branch
          %1096 = sbr.rel (%p1094) target = $region108
        $region107: #{decoder_forward.2} parent=15 // pred_region
          %p1097 = scmp.lt.s32.totalorder %s81, 1
          %s1098 = scalar_select %p1097, %s81, 1
          %s1099 = scalar_lea.vmem %s45, %s1098
        $region108: #{decoder_forward.2} parent=15 // pred_fallthru
          _
        // Predicated region
        $region109: #{decoder_forward.2} parent=15 // pred_check
          %p1100 = pneg %p703
        $region110: #{decoder_forward.2} parent=15 // pred_check_branch
          %1102 = sbr.rel (%p1100) target = $region112
        $region111: #{decoder_forward.2} parent=15 // pred_region
          %p1103 = scmp.lt.s32.totalorder %s81, 1
          %s1104 = scalar_select %p1103, %s81, 1
          %s1105 = scalar_lea.vmem %s47, %s1104
        $region112: #{decoder_forward.2} parent=15 // pred_fallthru
          _
        // Predicated region
        $region113: #{decoder_forward.2} parent=15 // pred_check
          %p1106 = pneg %p729
        $region114: #{decoder_forward.2} parent=15 // pred_check_branch
          %1108 = sbr.rel (%p1106) target = $region116
        $region115: #{decoder_forward.2} parent=15 // pred_region
          %p1109 = scmp.lt.s32.totalorder %s81, 1
          %s1110 = scalar_select %p1109, %s81, 1
          %s1111 = smul.addr %s1110, 4
          %s1112 = smul.addr %s1111, 8
          %s1113 = scalar_lea.vmem %s49, %s1112
        $region116: #{decoder_forward.2} parent=15 // pred_fallthru
          _
        // Predicated region
        $region117: #{decoder_forward.2} parent=15 // pred_check
          %p1114 = pneg %p755
        $region118: #{decoder_forward.2} parent=15 // pred_check_branch
          %1116 = sbr.rel (%p1114) target = $region120
        $region119: #{decoder_forward.2} parent=15 // pred_region
          %p1117 = scmp.lt.s32.totalorder %s81, 1
          %s1118 = scalar_select %p1117, %s81, 1
          %s1119 = scalar_lea.vmem %s51, %s1118
        $region120: #{decoder_forward.2} parent=15 // pred_fallthru
          _
        // Predicated region
        $region121: #{decoder_forward.2} parent=15 // pred_check
          %p1120 = pneg %p781
        $region122: #{decoder_forward.2} parent=15 // pred_check_branch
          %1122 = sbr.rel (%p1120) target = $region124
        $region123: #{decoder_forward.2} parent=15 // pred_region
          %p1123 = scmp.lt.s32.totalorder %s81, 1
          %s1124 = scalar_select %p1123, %s81, 1
          %s1125 = smul.addr %s1124, 8
          %s1126 = smul.addr %s1125, 8
          %s1127 = scalar_lea.vmem %s53, %s1126
        $region124: #{decoder_forward.2} parent=15 // pred_fallthru
          _
        // Predicated region
        $region125: #{decoder_forward.2} parent=15 // pred_check
          %p1128 = pneg %p807
        $region126: #{decoder_forward.2} parent=15 // pred_check_branch
          %1130 = sbr.rel (%p1128) target = $region128
        $region127: #{decoder_forward.2} parent=15 // pred_region
          %p1131 = scmp.lt.s32.totalorder %s81, 1
          %s1132 = scalar_select %p1131, %s81, 1
          %s1133 = scalar_lea.vmem %s55, %s1132
        $region128: #{decoder_forward.2} parent=15 // pred_fallthru
          _
        // Predicated region
        $region129: #{decoder_forward.2} parent=15 // pred_check
          %p1134 = pneg %p833
        $region130: #{decoder_forward.2} parent=15 // pred_check_branch
          %1136 = sbr.rel (%p1134) target = $region132
        $region131: #{decoder_forward.2} parent=15 // pred_region
          %p1137 = scmp.lt.s32.totalorder %s81, 1
          %s1138 = scalar_select %p1137, %s81, 1
          %s1139 = scalar_lea.vmem %s57, %s1138
        $region132: #{decoder_forward.2} parent=15 // pred_fallthru
          _
        // Predicated region
        $region133: #{decoder_forward.2} parent=15 // pred_check
          %p1140 = pneg %p859
        $region134: #{decoder_forward.2} parent=15 // pred_check_branch
          %1142 = sbr.rel (%p1140) target = $region136
        $region135: #{decoder_forward.2} parent=15 // pred_region
          %p1143 = scmp.lt.s32.totalorder %s81, 1
          %s1144 = scalar_select %p1143, %s81, 1
          %s1145 = scalar_lea.vmem %s59, %s1144
        $region136: #{decoder_forward.2} parent=15 // pred_fallthru
          _
      $region16: #{decoder_forward.2} parent=5 // pred_fallthru
        _
      %p1146 = scmp.le.s32.totalorder 1, %s73
      %p1147 = scmp.lt.s32.totalorder %s73, 5
      %p1148 = pnand %p1146, %p1147
      %p1149 = pneg %p1148
      // Predicated region
      $region137: #{decoder_forward.2} parent=5 // pred_check
        _
      $region138: #{decoder_forward.2} parent=5 // pred_check_branch
        %1151 = sbr.rel (%p1148) target = $region140
      $region139: #{decoder_forward.2} parent=5 // pred_region
        %s1152 = ssub.s32 %s73, 1
        %p1153 = scmp.lt.s32.totalorder %s82, 1
        %s1154 = scalar_select %p1153, %s82, 1
        %s1155 = smul.addr %s1154, 8
        %s1156 = scalar_lea.vmem %s1, %s1155
        %p1157 = pneg %p111
        %p1158 = pneg %p108
        %p1159 = scmp.lt.s32.totalorder %s82, 1
        %s1160 = scalar_select %p1159, %s82, 1
        %s1161 = smul.addr %s1160, 16
        %s1162 = smul.addr %s1161, 8
        %s1163 = scalar_lea.vmem %s3, %s1162
        %p1164 = pneg %p137
        %p1165 = pneg %p134
        %p1166 = scmp.lt.s32.totalorder %s82, 1
        %s1167 = scalar_select %p1166, %s82, 1
        %s1168 = smul.addr %s1167, 8
        %s1169 = scalar_lea.vmem %s5, %s1168
        %p1170 = pneg %p163
        %p1171 = pneg %p160
        %p1172 = scmp.lt.s32.totalorder %s82, 1
        %s1173 = scalar_select %p1172, %s82, 1
        %s1174 = scalar_lea.vmem %s7, %s1173
        %p1175 = pneg %p189
        %p1176 = pneg %p186
        %p1177 = scmp.lt.s32.totalorder %s83, 1
        %s1178 = scalar_select %p1177, %s83, 1
        %s1179 = smul.addr %s1178, 16
        %s1180 = smul.addr %s1179, 8
        %s1181 = scalar_lea.vmem %s9, %s1180
        %p1182 = pneg %p215
        %p1183 = pneg %p212
        %p1184 = scmp.lt.s32.totalorder %s83, 1
        %s1185 = scalar_select %p1184, %s83, 1
        %s1186 = smul.addr %s1185, 4
        %s1187 = scalar_lea.vmem %s11, %s1186
        %p1188 = pneg %p241
        %p1189 = pneg %p238
        %p1190 = scmp.lt.s32.totalorder %s83, 1
        %s1191 = scalar_select %p1190, %s83, 1
        %s1192 = smul.addr %s1191, 16
        %s1193 = smul.addr %s1192, 8
        %s1194 = scalar_lea.vmem %s13, %s1193
        %p1195 = pneg %p267
        %p1196 = pneg %p264
        %p1197 = scmp.lt.s32.totalorder %s83, 1
        %s1198 = scalar_select %p1197, %s83, 1
        %s1199 = smul.addr %s1198, 4
        %s1200 = scalar_lea.vmem %s15, %s1199
        %p1201 = pneg %p293
        %p1202 = pneg %p290
        %p1203 = scmp.lt.s32.totalorder %s83, 1
        %s1204 = scalar_select %p1203, %s83, 1
        %s1205 = smul.addr %s1204, 16
        %s1206 = smul.addr %s1205, 8
        %s1207 = scalar_lea.vmem %s17, %s1206
        %p1208 = pneg %p319
        %p1209 = pneg %p316
        %p1210 = scmp.lt.s32.totalorder %s83, 1
        %s1211 = scalar_select %p1210, %s83, 1
        %s1212 = smul.addr %s1211, 4
        %s1213 = scalar_lea.vmem %s19, %s1212
        %p1214 = pneg %p345
        %p1215 = pneg %p342
        %p1216 = scmp.lt.s32.totalorder %s83, 1
        %s1217 = scalar_select %p1216, %s83, 1
        %s1218 = smul.addr %s1217, 4
        %s1219 = smul.addr %s1218, 8
        %s1220 = scalar_lea.vmem %s21, %s1219
        %p1221 = pneg %p371
        %p1222 = pneg %p368
        %p1223 = scmp.lt.s32.totalorder %s83, 1
        %s1224 = scalar_select %p1223, %s83, 1
        %s1225 = scalar_lea.vmem %s23, %s1224
        %p1226 = pneg %p397
        %p1227 = pneg %p394
        %p1228 = scmp.lt.s32.totalorder %s83, 1
        %s1229 = scalar_select %p1228, %s83, 1
        %s1230 = scalar_lea.vmem %s25, %s1229
        %p1231 = pneg %p423
        %p1232 = pneg %p420
        %p1233 = scmp.lt.s32.totalorder %s83, 1
        %s1234 = scalar_select %p1233, %s83, 1
        %s1235 = scalar_lea.vmem %s27, %s1234
        %p1236 = pneg %p449
        %p1237 = pneg %p446
        %p1238 = scmp.lt.s32.totalorder %s83, 1
        %s1239 = scalar_select %p1238, %s83, 1
        %s1240 = smul.addr %s1239, 16
        %s1241 = smul.addr %s1240, 8
        %s1242 = scalar_lea.vmem %s29, %s1241
        %p1243 = pneg %p475
        %p1244 = pneg %p472
        %p1245 = scmp.lt.s32.totalorder %s83, 1
        %s1246 = scalar_select %p1245, %s83, 1
        %s1247 = smul.addr %s1246, 4
        %s1248 = scalar_lea.vmem %s31, %s1247
        %p1249 = pneg %p501
        %p1250 = pneg %p498
        %p1251 = scmp.lt.s32.totalorder %s83, 1
        %s1252 = scalar_select %p1251, %s83, 1
        %s1253 = smul.addr %s1252, 16
        %s1254 = smul.addr %s1253, 8
        %s1255 = scalar_lea.vmem %s33, %s1254
        %p1256 = pneg %p527
        %p1257 = pneg %p524
        %p1258 = scmp.lt.s32.totalorder %s83, 1
        %s1259 = scalar_select %p1258, %s83, 1
        %s1260 = smul.addr %s1259, 4
        %s1261 = scalar_lea.vmem %s35, %s1260
        %p1262 = pneg %p553
        %p1263 = pneg %p550
        %p1264 = scmp.lt.s32.totalorder %s83, 1
        %s1265 = scalar_select %p1264, %s83, 1
        %s1266 = smul.addr %s1265, 16
        %s1267 = smul.addr %s1266, 8
        %s1268 = scalar_lea.vmem %s37, %s1267
        %p1269 = pneg %p579
        %p1270 = pneg %p576
        %p1271 = scmp.lt.s32.totalorder %s83, 1
        %s1272 = scalar_select %p1271, %s83, 1
        %s1273 = smul.addr %s1272, 4
        %s1274 = scalar_lea.vmem %s39, %s1273
        %p1275 = pneg %p605
        %p1276 = pneg %p602
        %p1277 = scmp.lt.s32.totalorder %s83, 1
        %s1278 = scalar_select %p1277, %s83, 1
        %s1279 = smul.addr %s1278, 4
        %s1280 = smul.addr %s1279, 8
        %s1281 = scalar_lea.vmem %s41, %s1280
        %p1282 = pneg %p631
        %p1283 = pneg %p628
        %p1284 = scmp.lt.s32.totalorder %s83, 1
        %s1285 = scalar_select %p1284, %s83, 1
        %s1286 = scalar_lea.vmem %s43, %s1285
        %p1287 = pneg %p657
        %p1288 = pneg %p654
        %p1289 = scmp.lt.s32.totalorder %s83, 1
        %s1290 = scalar_select %p1289, %s83, 1
        %s1291 = scalar_lea.vmem %s45, %s1290
        %p1292 = pneg %p683
        %p1293 = pneg %p680
        %p1294 = scmp.lt.s32.totalorder %s83, 1
        %s1295 = scalar_select %p1294, %s83, 1
        %s1296 = scalar_lea.vmem %s47, %s1295
        %p1297 = pneg %p709
        %p1298 = pneg %p706
        %p1299 = scmp.lt.s32.totalorder %s83, 1
        %s1300 = scalar_select %p1299, %s83, 1
        %s1301 = smul.addr %s1300, 4
        %s1302 = smul.addr %s1301, 8
        %s1303 = scalar_lea.vmem %s49, %s1302
        %p1304 = pneg %p735
        %p1305 = pneg %p732
        %p1306 = scmp.lt.s32.totalorder %s83, 1
        %s1307 = scalar_select %p1306, %s83, 1
        %s1308 = scalar_lea.vmem %s51, %s1307
        %p1309 = pneg %p761
        %p1310 = pneg %p758
        %p1311 = scmp.lt.s32.totalorder %s83, 1
        %s1312 = scalar_select %p1311, %s83, 1
        %s1313 = smul.addr %s1312, 8
        %s1314 = smul.addr %s1313, 8
        %s1315 = scalar_lea.vmem %s53, %s1314
        %p1316 = pneg %p787
        %p1317 = pneg %p784
        %p1318 = scmp.lt.s32.totalorder %s83, 1
        %s1319 = scalar_select %p1318, %s83, 1
        %s1320 = scalar_lea.vmem %s55, %s1319
        %p1321 = pneg %p813
        %p1322 = pneg %p810
        %p1323 = scmp.lt.s32.totalorder %s83, 1
        %s1324 = scalar_select %p1323, %s83, 1
        %s1325 = scalar_lea.vmem %s57, %s1324
        %p1326 = pneg %p839
        %p1327 = pneg %p836
        %p1328 = scmp.lt.s32.totalorder %s83, 1
        %s1329 = scalar_select %p1328, %s83, 1
        %s1330 = scalar_lea.vmem %s59, %s1329
        %p1331 = pneg %p865
        %p1332 = pneg %p862
        %p1333 = pneg %p891
        %p1334 = pneg %p888
        %p1335 = scmp.lt.s32.totalorder %s82, 1
        %s1336 = scalar_select %p1335, %s82, 1
        %s1337 = smul.addr %s1336, 8
        %s1338 = scalar_lea.vmem %s61, %s1337
        %p1339 = pneg %p917
        %p1340 = pneg %p914
        %s1341 = sand.u32 %s904, 1
        %s1342 = scalar_lea.sflag [#allocation4], %s1341
        %s1343 = sand.u32 %s904, 1
        %s1344 = smul.addr %s1343, 32
        %s1345 = scalar_lea.vmem [#allocation3], %s1344
        %p1346 = scmp.lt.s32.totalorder %s82, 1
        %s1347 = scalar_select %p1346, %s82, 1
        %s1348 = smul.addr %s1347, 8
        %s1349 = scalar_lea.vmem %s1, %s1348
        %p1350 = scmp.lt.s32.totalorder %s82, 1
        %s1351 = scalar_select %p1350, %s82, 1
        %s1352 = smul.addr %s1351, 16
        %s1353 = smul.addr %s1352, 8
        %s1354 = scalar_lea.vmem %s3, %s1353
        %p1355 = scmp.lt.s32.totalorder %s82, 1
        %s1356 = scalar_select %p1355, %s82, 1
        %s1357 = smul.addr %s1356, 8
        %s1358 = scalar_lea.vmem %s5, %s1357
        %p1359 = scmp.lt.s32.totalorder %s82, 1
        %s1360 = scalar_select %p1359, %s82, 1
        %s1361 = scalar_lea.vmem %s7, %s1360
        %p1362 = scmp.lt.s32.totalorder %s83, 1
        %s1363 = scalar_select %p1362, %s83, 1
        %s1364 = smul.addr %s1363, 16
        %s1365 = smul.addr %s1364, 8
        %s1366 = scalar_lea.vmem %s9, %s1365
        %p1367 = scmp.lt.s32.totalorder %s83, 1
        %s1368 = scalar_select %p1367, %s83, 1
        %s1369 = smul.addr %s1368, 4
        %s1370 = scalar_lea.vmem %s11, %s1369
        %p1371 = scmp.lt.s32.totalorder %s83, 1
        %s1372 = scalar_select %p1371, %s83, 1
        %s1373 = smul.addr %s1372, 16
        %s1374 = smul.addr %s1373, 8
        %s1375 = scalar_lea.vmem %s13, %s1374
        %p1376 = scmp.lt.s32.totalorder %s83, 1
        %s1377 = scalar_select %p1376, %s83, 1
        %s1378 = smul.addr %s1377, 4
        %s1379 = scalar_lea.vmem %s15, %s1378
        %p1380 = scmp.lt.s32.totalorder %s83, 1
        %s1381 = scalar_select %p1380, %s83, 1
        %s1382 = smul.addr %s1381, 16
        %s1383 = smul.addr %s1382, 8
        %s1384 = scalar_lea.vmem %s17, %s1383
        %p1385 = scmp.lt.s32.totalorder %s83, 1
        %s1386 = scalar_select %p1385, %s83, 1
        %s1387 = smul.addr %s1386, 4
        %s1388 = scalar_lea.vmem %s19, %s1387
        %p1389 = scmp.lt.s32.totalorder %s83, 1
        %s1390 = scalar_select %p1389, %s83, 1
        %s1391 = smul.addr %s1390, 4
        %s1392 = smul.addr %s1391, 8
        %s1393 = scalar_lea.vmem %s21, %s1392
        %p1394 = scmp.lt.s32.totalorder %s83, 1
        %s1395 = scalar_select %p1394, %s83, 1
        %s1396 = scalar_lea.vmem %s23, %s1395
        %p1397 = scmp.lt.s32.totalorder %s83, 1
        %s1398 = scalar_select %p1397, %s83, 1
        %s1399 = scalar_lea.vmem %s25, %s1398
        %p1400 = scmp.lt.s32.totalorder %s83, 1
        %s1401 = scalar_select %p1400, %s83, 1
        %s1402 = scalar_lea.vmem %s27, %s1401
        %p1403 = scmp.lt.s32.totalorder %s83, 1
        %s1404 = scalar_select %p1403, %s83, 1
        %s1405 = smul.addr %s1404, 16
        %s1406 = smul.addr %s1405, 8
        %s1407 = scalar_lea.vmem %s29, %s1406
        %p1408 = scmp.lt.s32.totalorder %s83, 1
        %s1409 = scalar_select %p1408, %s83, 1
        %s1410 = smul.addr %s1409, 4
        %s1411 = scalar_lea.vmem %s31, %s1410
        %p1412 = scmp.lt.s32.totalorder %s83, 1
        %s1413 = scalar_select %p1412, %s83, 1
        %s1414 = smul.addr %s1413, 16
        %s1415 = smul.addr %s1414, 8
        %s1416 = scalar_lea.vmem %s33, %s1415
        %p1417 = scmp.lt.s32.totalorder %s83, 1
        %s1418 = scalar_select %p1417, %s83, 1
        %s1419 = smul.addr %s1418, 4
        %s1420 = scalar_lea.vmem %s35, %s1419
        %p1421 = scmp.lt.s32.totalorder %s83, 1
        %s1422 = scalar_select %p1421, %s83, 1
        %s1423 = smul.addr %s1422, 16
        %s1424 = smul.addr %s1423, 8
        %s1425 = scalar_lea.vmem %s37, %s1424
        %p1426 = scmp.lt.s32.totalorder %s83, 1
        %s1427 = scalar_select %p1426, %s83, 1
        %s1428 = smul.addr %s1427, 4
        %s1429 = scalar_lea.vmem %s39, %s1428
        %p1430 = scmp.lt.s32.totalorder %s83, 1
        %s1431 = scalar_select %p1430, %s83, 1
        %s1432 = smul.addr %s1431, 4
        %s1433 = smul.addr %s1432, 8
        %s1434 = scalar_lea.vmem %s41, %s1433
        %p1435 = scmp.lt.s32.totalorder %s83, 1
        %s1436 = scalar_select %p1435, %s83, 1
        %s1437 = scalar_lea.vmem %s43, %s1436
        %p1438 = scmp.lt.s32.totalorder %s83, 1
        %s1439 = scalar_select %p1438, %s83, 1
        %s1440 = scalar_lea.vmem %s45, %s1439
        %p1441 = scmp.lt.s32.totalorder %s83, 1
        %s1442 = scalar_select %p1441, %s83, 1
        %s1443 = scalar_lea.vmem %s47, %s1442
        %p1444 = scmp.lt.s32.totalorder %s83, 1
        %s1445 = scalar_select %p1444, %s83, 1
        %s1446 = smul.addr %s1445, 4
        %s1447 = smul.addr %s1446, 8
        %s1448 = scalar_lea.vmem %s49, %s1447
        %p1449 = scmp.lt.s32.totalorder %s83, 1
        %s1450 = scalar_select %p1449, %s83, 1
        %s1451 = scalar_lea.vmem %s51, %s1450
        %p1452 = scmp.lt.s32.totalorder %s83, 1
        %s1453 = scalar_select %p1452, %s83, 1
        %s1454 = smul.addr %s1453, 8
        %s1455 = smul.addr %s1454, 8
        %s1456 = scalar_lea.vmem %s53, %s1455
        %p1457 = scmp.lt.s32.totalorder %s83, 1
        %s1458 = scalar_select %p1457, %s83, 1
        %s1459 = scalar_lea.vmem %s55, %s1458
        %p1460 = scmp.lt.s32.totalorder %s83, 1
        %s1461 = scalar_select %p1460, %s83, 1
        %s1462 = scalar_lea.vmem %s57, %s1461
        %p1463 = scmp.lt.s32.totalorder %s83, 1
        %s1464 = scalar_select %p1463, %s83, 1
        %s1465 = scalar_lea.vmem %s59, %s1464
        %p1466 = scmp.lt.s32.totalorder %s82, 1
        %s1467 = scalar_select %p1466, %s82, 1
        %s1468 = smul.addr %s1467, 8
        %s1469 = scalar_lea.vmem %s61, %s1468
        %p1470 = scmp.eq.s32.totalorder %s83, 0
        // Predicated region
        $region141: #{decoder_forward.2} parent=139 // pred_check
          %p1471 = pneg %p1470
        $region142: #{decoder_forward.2} parent=139 // pred_check_branch
          %1473 = sbr.rel (%p1471) target = $region144
        $region143: #{decoder_forward.2} parent=139 // pred_region
          %v1474 = vld [vmem:[%s1349] sm:$0xff]
          %vm1475 = vcmask 261120
          %1476 = vst.msk [vmem:[#allocation2] sm:$0xff] %vm1475, %v1474
        $region144: #{decoder_forward.2} parent=139 // pred_fallthru
          _
        %v1477 = vld [vmem:[#allocation2] sm:$0xff]
        %v1478 = vld [vmem:[%s1354] sm:$0xff]
        %v1479 = vld [vmem:[%s1354 + $0x8] sm:$0xff]
        %v1480 = vld [vmem:[%s1354 + $0x10] sm:$0xff]
        %v1481 = vld [vmem:[%s1354 + $0x18] sm:$0xff]
        %v1482 = vld [vmem:[%s1354 + $0x20] sm:$0xff]
        %v1483 = vld [vmem:[%s1354 + $0x28] sm:$0xff]
        %v1484 = vld [vmem:[%s1354 + $0x30] sm:$0xff]
        %v1485 = vld [vmem:[%s1354 + $0x38] sm:$0xff]
        %v1486 = vld [vmem:[%s1354 + $0x40] sm:$0xff]
        %v1487 = vld [vmem:[%s1354 + $0x48] sm:$0xff]
        %v1488 = vld [vmem:[%s1354 + $0x50] sm:$0xff]
        %v1489 = vld [vmem:[%s1354 + $0x58] sm:$0xff]
        %v1490 = vld [vmem:[%s1354 + $0x60] sm:$0xff]
        %v1491 = vld [vmem:[%s1354 + $0x68] sm:$0xff]
        %v1492 = vld [vmem:[%s1354 + $0x70] sm:$0xff]
        %v1493 = vld [vmem:[%s1354 + $0x78] sm:$0xff]
        %v1494 = vld [vmem:[%s1358] sm:$0xff]
        %vm1495 = vcmp.eq.f32.partialorder %v1494, 0.0
        %v1496 = vld [vmem:[%s1361] sm:$0x1]
        %vm1497 = vcmp.eq.f32.partialorder %v1496, 0.0
        %v1498 = vsel %vm1497, 1, 0
        %v1499 = vperm.slane %v1498, 0
        %vm1500 = vcmp.eq.s32.totalorder %v1499, 1
        %v1501 = vld [vmem:[%s1366] sm:$0xff]
        %v1502 = vld [vmem:[%s1366 + $0x8] sm:$0xff]
        %v1503 = vld [vmem:[%s1366 + $0x10] sm:$0xff]
        %v1504 = vld [vmem:[%s1366 + $0x18] sm:$0xff]
        %v1505 = vld [vmem:[%s1370] sm:$0x1]
        %v1507 = vperm.slane %v1505, 0
        %vm1509 = vcmask 261120
        %v1511 = vsel %vm1509, %v1477, 0
        %1513 = vmatpush.msra.mxu0 0.0
        %1514 = vmatpush.msra.mxu0 0.0
        %1515 = vmatpush.msra.mxu0 0.0
        %1516 = vmatpush.msra.mxu0 0.0
        %1517 = vmatpush.msra.mxu0 0.0
        %1518 = vmatpush.msra.mxu0 0.0
        %1519 = vmatpush.msra.mxu0 0.0
        %1520 = vmatpush.msra.mxu0 0.0
        %1521 = vmatpush.msra.mxu0 0.0
        %1522 = vmatpush.msra.mxu0 0.0
        %1523 = vmatpush.msra.mxu0 0.0
        %1524 = vmatpush.msra.mxu0 0.0
        %1525 = vmatpush.msra.mxu0 %v1504
        %1526 = vmatpush.msra.mxu0 %v1503
        %1527 = vmatpush.msra.mxu0 %v1502
        %1528 = vmatpush.msra.mxu0 %v1501
        %1529 = vmatmul.f32.gmra.mxu0 %v1511
        %v1530 = vpop.f32.mrf.mxu0
        %v1531 = vadd.f32 %v1507, %v1530
        %1532 = vdwg.mxu0
        %v1533 = vld [vmem:[%s1375] sm:$0xff]
        %v1534 = vld [vmem:[%s1375 + $0x8] sm:$0xff]
        %v1535 = vld [vmem:[%s1375 + $0x10] sm:$0xff]
        %v1536 = vld [vmem:[%s1375 + $0x18] sm:$0xff]
        %v1537 = vld [vmem:[%s1379] sm:$0x1]
        %v1539 = vperm.slane %v1537, 0
        %1541 = vmatpush.msra.mxu0 0.0
        %1542 = vmatpush.msra.mxu0 0.0
        %1543 = vmatpush.msra.mxu0 0.0
        %1544 = vmatpush.msra.mxu0 0.0
        %1545 = vmatpush.msra.mxu0 0.0
        %1546 = vmatpush.msra.mxu0 0.0
        %1547 = vmatpush.msra.mxu0 0.0
        %1548 = vmatpush.msra.mxu0 0.0
        %1549 = vmatpush.msra.mxu0 0.0
        %1550 = vmatpush.msra.mxu0 0.0
        %1551 = vmatpush.msra.mxu0 0.0
        %1552 = vmatpush.msra.mxu0 0.0
        %1553 = vmatpush.msra.mxu0 %v1536
        %1554 = vmatpush.msra.mxu0 %v1535
        %1555 = vmatpush.msra.mxu0 %v1534
        %1556 = vmatpush.msra.mxu0 %v1533
        %1557 = vmatmul.f32.gmra.mxu0 %v1511
        %v1558 = vpop.f32.mrf.mxu0
        %v1559 = vadd.f32 %v1539, %v1558
        %1560 = vdwg.mxu0
        %v1561 = vld [vmem:[%s1384] sm:$0xff]
        %v1562 = vld [vmem:[%s1384 + $0x8] sm:$0xff]
        %v1563 = vld [vmem:[%s1384 + $0x10] sm:$0xff]
        %v1564 = vld [vmem:[%s1384 + $0x18] sm:$0xff]
        %v1565 = vld [vmem:[%s1388] sm:$0x1]
        %v1567 = vperm.slane %v1565, 0
        %1569 = vmatpush.msra.mxu0 0.0
        %1570 = vmatpush.msra.mxu0 0.0
        %1571 = vmatpush.msra.mxu0 0.0
        %1572 = vmatpush.msra.mxu0 0.0
        %1573 = vmatpush.msra.mxu0 0.0
        %1574 = vmatpush.msra.mxu0 0.0
        %1575 = vmatpush.msra.mxu0 0.0
        %1576 = vmatpush.msra.mxu0 0.0
        %1577 = vmatpush.msra.mxu0 0.0
        %1578 = vmatpush.msra.mxu0 0.0
        %1579 = vmatpush.msra.mxu0 0.0
        %1580 = vmatpush.msra.mxu0 0.0
        %1581 = vmatpush.msra.mxu0 %v1564
        %1582 = vmatpush.msra.mxu0 %v1563
        %1583 = vmatpush.msra.mxu0 %v1562
        %1584 = vmatpush.msra.mxu0 %v1561
        %1585 = vmatmul.f32.gmra.mxu0 %v1511
        %v1586 = vpop.f32.mrf.mxu0
        %v1587 = vadd.f32 %v1567, %v1586
        %1588 = vdwg.mxu0
        %vm1589 = vcmask 64512
        %v1591 = vsel %vm1589, %v1531, 0
        %v1594 = vsel %vm1589, %v1559, 0
        %1596 = vmatpush.xpose.msra.mxu0 0.0
        %1597 = vmatpush.xpose.msra.mxu0 0.0
        %1598 = vmatpush.xpose.msra.mxu0 0.0
        %1599 = vmatpush.xpose.msra.mxu0 0.0
        %1600 = vmatpush.xpose.msra.mxu0 0.0
        %1601 = vmatpush.xpose.msra.mxu0 0.0
        %1602 = vmatpush.xpose.msra.mxu0 0.0
        %1603 = vmatpush.xpose.msra.mxu0 0.0
        %1604 = vmatpush.xpose.msra.mxu0 0.0
        %1605 = vmatpush.xpose.msra.mxu0 0.0
        %1606 = vmatpush.xpose.msra.mxu0 0.0
        %1607 = vmatpush.xpose.msra.mxu0 0.0
        %1608 = vmatpush.xpose.msra.mxu0 0.0
        %1609 = vmatpush.xpose.msra.mxu0 0.0
        %1610 = vmatpush.xpose.msra.mxu0 0.0
        %1611 = vmatpush.xpose.msra.mxu0 %v1594
        %1612 = vmatmul.f32.gmra.mxu0 %v1591
        %v1613 = vpop.f32.mrf.mxu0
        %v1614 = vadd.f32 0.0, %v1613
        %1615 = vdwg.mxu0
        %v1616 = vsel %vm1495, -1e+15, %v1614
        %v1617 = vsel %vm1589, %v1616, -inf
        %1618 = vmax.xlane.f32.xlu0 %v1617
        %v1619 = vpop.xlane.xlu0 %1618
        %v1620 = vsub.f32 %v1616, %v1619
        %v1621 = vmul.f32 %v1620, 1.442695
        %v1622 = vpow.pop %v1621
        %v1623 = vsel %vm1589, %v1622, 0.0
        %1624 = vadd.xlane.f32.xlu0 %v1623
        %v1625 = vpop.xlane.xlu0 %1624
        %v1626 = vrcp.pop %v1625
        %v1627 = vmul.f32 %v1622, %v1626
        %v1629 = vsel %vm1589, %v1627, 0
        %1631 = vmatpush.msra.mxu0 0.0
        %1632 = vmatpush.msra.mxu0 0.0
        %1633 = vmatpush.msra.mxu0 0.0
        %1634 = vmatpush.msra.mxu0 0.0
        %1635 = vmatpush.msra.mxu0 0.0
        %1636 = vmatpush.msra.mxu0 0.0
        %1637 = vmatpush.msra.mxu0 0.0
        %1638 = vmatpush.msra.mxu0 0.0
        %1639 = vmatpush.msra.mxu0 0.0
        %1640 = vmatpush.msra.mxu0 0.0
        %1641 = vmatpush.msra.mxu0 0.0
        %1642 = vmatpush.msra.mxu0 0.0
        %1643 = vmatpush.msra.mxu0 0.0
        %1644 = vmatpush.msra.mxu0 0.0
        %1645 = vmatpush.msra.mxu0 0.0
        %1646 = vmatpush.msra.mxu0 %v1587
        %1647 = vmatmul.f32.gmra.mxu0 %v1629
        %v1648 = vpop.f32.mrf.mxu0
        %v1649 = vadd.f32 0.0, %v1648
        %1650 = vdwg.mxu0
        %v1651 = vld [vmem:[%s1393] sm:$0xff]
        %s1652 = scalar_lea.vmem %s1366, 32
        %v1653 = vld [vmem:[%s1652] sm:$0xff]
        %v1654 = vld [vmem:[%s1652 + $0x8] sm:$0xff]
        %v1655 = vld [vmem:[%s1652 + $0x10] sm:$0xff]
        %v1656 = vld [vmem:[%s1652 + $0x18] sm:$0xff]
        %s1657 = scalar_lea.vmem %s1370, 1
        %v1658 = vld [vmem:[%s1657] sm:$0x1]
        %v1660 = vperm.slane %v1658, 0
        %1662 = vmatpush.msra.mxu0 0.0
        %1663 = vmatpush.msra.mxu0 0.0
        %1664 = vmatpush.msra.mxu0 0.0
        %1665 = vmatpush.msra.mxu0 0.0
        %1666 = vmatpush.msra.mxu0 0.0
        %1667 = vmatpush.msra.mxu0 0.0
        %1668 = vmatpush.msra.mxu0 0.0
        %1669 = vmatpush.msra.mxu0 0.0
        %1670 = vmatpush.msra.mxu0 0.0
        %1671 = vmatpush.msra.mxu0 0.0
        %1672 = vmatpush.msra.mxu0 0.0
        %1673 = vmatpush.msra.mxu0 0.0
        %1674 = vmatpush.msra.mxu0 %v1656
        %1675 = vmatpush.msra.mxu0 %v1655
        %1676 = vmatpush.msra.mxu0 %v1654
        %1677 = vmatpush.msra.mxu0 %v1653
        %1678 = vmatmul.f32.gmra.mxu0 %v1511
        %v1679 = vpop.f32.mrf.mxu0
        %v1680 = vadd.f32 %v1660, %v1679
        %1681 = vdwg.mxu0
        %s1682 = scalar_lea.vmem %s1375, 32
        %v1683 = vld [vmem:[%s1682] sm:$0xff]
        %v1684 = vld [vmem:[%s1682 + $0x8] sm:$0xff]
        %v1685 = vld [vmem:[%s1682 + $0x10] sm:$0xff]
        %v1686 = vld [vmem:[%s1682 + $0x18] sm:$0xff]
        %s1687 = scalar_lea.vmem %s1379, 1
        %v1688 = vld [vmem:[%s1687] sm:$0x1]
        %v1690 = vperm.slane %v1688, 0
        %1692 = vmatpush.msra.mxu0 0.0
        %1693 = vmatpush.msra.mxu0 0.0
        %1694 = vmatpush.msra.mxu0 0.0
        %1695 = vmatpush.msra.mxu0 0.0
        %1696 = vmatpush.msra.mxu0 0.0
        %1697 = vmatpush.msra.mxu0 0.0
        %1698 = vmatpush.msra.mxu0 0.0
        %1699 = vmatpush.msra.mxu0 0.0
        %1700 = vmatpush.msra.mxu0 0.0
        %1701 = vmatpush.msra.mxu0 0.0
        %1702 = vmatpush.msra.mxu0 0.0
        %1703 = vmatpush.msra.mxu0 0.0
        %1704 = vmatpush.msra.mxu0 %v1686
        %1705 = vmatpush.msra.mxu0 %v1685
        %1706 = vmatpush.msra.mxu0 %v1684
        %1707 = vmatpush.msra.mxu0 %v1683
        %1708 = vmatmul.f32.gmra.mxu0 %v1511
        %v1709 = vpop.f32.mrf.mxu0
        %v1710 = vadd.f32 %v1690, %v1709
        %1711 = vdwg.mxu0
        %s1712 = scalar_lea.vmem %s1384, 32
        %v1713 = vld [vmem:[%s1712] sm:$0xff]
        %v1714 = vld [vmem:[%s1712 + $0x8] sm:$0xff]
        %v1715 = vld [vmem:[%s1712 + $0x10] sm:$0xff]
        %v1716 = vld [vmem:[%s1712 + $0x18] sm:$0xff]
        %s1717 = scalar_lea.vmem %s1388, 1
        %v1718 = vld [vmem:[%s1717] sm:$0x1]
        %v1720 = vperm.slane %v1718, 0
        %1722 = vmatpush.msra.mxu0 0.0
        %1723 = vmatpush.msra.mxu0 0.0
        %1724 = vmatpush.msra.mxu0 0.0
        %1725 = vmatpush.msra.mxu0 0.0
        %1726 = vmatpush.msra.mxu0 0.0
        %1727 = vmatpush.msra.mxu0 0.0
        %1728 = vmatpush.msra.mxu0 0.0
        %1729 = vmatpush.msra.mxu0 0.0
        %1730 = vmatpush.msra.mxu0 0.0
        %1731 = vmatpush.msra.mxu0 0.0
        %1732 = vmatpush.msra.mxu0 0.0
        %1733 = vmatpush.msra.mxu0 0.0
        %1734 = vmatpush.msra.mxu0 %v1716
        %1735 = vmatpush.msra.mxu0 %v1715
        %1736 = vmatpush.msra.mxu0 %v1714
        %1737 = vmatpush.msra.mxu0 %v1713
        %1738 = vmatmul.f32.gmra.mxu0 %v1511
        %v1739 = vpop.f32.mrf.mxu0
        %v1740 = vadd.f32 %v1720, %v1739
        %1741 = vdwg.mxu0
        %v1743 = vsel %vm1589, %v1680, 0
        %v1746 = vsel %vm1589, %v1710, 0
        %1748 = vmatpush.xpose.msra.mxu0 0.0
        %1749 = vmatpush.xpose.msra.mxu0 0.0
        %1750 = vmatpush.xpose.msra.mxu0 0.0
        %1751 = vmatpush.xpose.msra.mxu0 0.0
        %1752 = vmatpush.xpose.msra.mxu0 0.0
        %1753 = vmatpush.xpose.msra.mxu0 0.0
        %1754 = vmatpush.xpose.msra.mxu0 0.0
        %1755 = vmatpush.xpose.msra.mxu0 0.0
        %1756 = vmatpush.xpose.msra.mxu0 0.0
        %1757 = vmatpush.xpose.msra.mxu0 0.0
        %1758 = vmatpush.xpose.msra.mxu0 0.0
        %1759 = vmatpush.xpose.msra.mxu0 0.0
        %1760 = vmatpush.xpose.msra.mxu0 0.0
        %1761 = vmatpush.xpose.msra.mxu0 0.0
        %1762 = vmatpush.xpose.msra.mxu0 0.0
        %1763 = vmatpush.xpose.msra.mxu0 %v1746
        %1764 = vmatmul.f32.gmra.mxu0 %v1743
        %v1765 = vpop.f32.mrf.mxu0
        %v1766 = vadd.f32 0.0, %v1765
        %1767 = vdwg.mxu0
        %v1768 = vsel %vm1495, -1e+15, %v1766
        %v1769 = vsel %vm1589, %v1768, -inf
        %1770 = vmax.xlane.f32.xlu0 %v1769
        %v1771 = vpop.xlane.xlu0 %1770
        %v1772 = vsub.f32 %v1768, %v1771
        %v1773 = vmul.f32 %v1772, 1.442695
        %v1774 = vpow.pop %v1773
        %v1775 = vsel %vm1589, %v1774, 0.0
        %1776 = vadd.xlane.f32.xlu0 %v1775
        %v1777 = vpop.xlane.xlu0 %1776
        %v1778 = vrcp.pop %v1777
        %v1779 = vmul.f32 %v1774, %v1778
        %v1781 = vsel %vm1589, %v1779, 0
        %1783 = vmatpush.msra.mxu0 0.0
        %1784 = vmatpush.msra.mxu0 0.0
        %1785 = vmatpush.msra.mxu0 0.0
        %1786 = vmatpush.msra.mxu0 0.0
        %1787 = vmatpush.msra.mxu0 0.0
        %1788 = vmatpush.msra.mxu0 0.0
        %1789 = vmatpush.msra.mxu0 0.0
        %1790 = vmatpush.msra.mxu0 0.0
        %1791 = vmatpush.msra.mxu0 0.0
        %1792 = vmatpush.msra.mxu0 0.0
        %1793 = vmatpush.msra.mxu0 0.0
        %1794 = vmatpush.msra.mxu0 0.0
        %1795 = vmatpush.msra.mxu0 0.0
        %1796 = vmatpush.msra.mxu0 0.0
        %1797 = vmatpush.msra.mxu0 0.0
        %1798 = vmatpush.msra.mxu0 %v1740
        %1799 = vmatmul.f32.gmra.mxu0 %v1781
        %v1800 = vpop.f32.mrf.mxu0
        %v1801 = vadd.f32 0.0, %v1800
        %1802 = vdwg.mxu0
        %s1803 = scalar_lea.vmem %s1393, 8
        %v1804 = vld [vmem:[%s1803] sm:$0xff]
        %v1806 = vsel %vm1589, %v1801, 0
        %1808 = vmatpush.msra.mxu0 0.0
        %1809 = vmatpush.msra.mxu0 0.0
        %1810 = vmatpush.msra.mxu0 0.0
        %1811 = vmatpush.msra.mxu0 0.0
        %1812 = vmatpush.msra.mxu0 0.0
        %1813 = vmatpush.msra.mxu0 0.0
        %1814 = vmatpush.msra.mxu0 0.0
        %1815 = vmatpush.msra.mxu0 0.0
        %1816 = vmatpush.msra.mxu0 0.0
        %1817 = vmatpush.msra.mxu0 0.0
        %1818 = vmatpush.msra.mxu0 0.0
        %1819 = vmatpush.msra.mxu0 0.0
        %1820 = vmatpush.msra.mxu0 0.0
        %1821 = vmatpush.msra.mxu0 0.0
        %1822 = vmatpush.msra.mxu0 0.0
        %1823 = vmatpush.msra.mxu0 %v1804
        %1824 = vmatmul.f32.gmra.mxu0 %v1806
        %v1825 = vpop.f32.mrf.mxu0
        %v1826 = vadd.f32 0.0, %v1825
        %1827 = vdwg.mxu0
        %v1829 = vsel %vm1589, %v1649, 0
        %1831 = vmatpush.msra.mxu0 0.0
        %1832 = vmatpush.msra.mxu0 0.0
        %1833 = vmatpush.msra.mxu0 0.0
        %1834 = vmatpush.msra.mxu0 0.0
        %1835 = vmatpush.msra.mxu0 0.0
        %1836 = vmatpush.msra.mxu0 0.0
        %1837 = vmatpush.msra.mxu0 0.0
        %1838 = vmatpush.msra.mxu0 0.0
        %1839 = vmatpush.msra.mxu0 0.0
        %1840 = vmatpush.msra.mxu0 0.0
        %1841 = vmatpush.msra.mxu0 0.0
        %1842 = vmatpush.msra.mxu0 0.0
        %1843 = vmatpush.msra.mxu0 0.0
        %1844 = vmatpush.msra.mxu0 0.0
        %1845 = vmatpush.msra.mxu0 0.0
        %1846 = vmatpush.msra.mxu0 %v1651
        %1847 = vmatmul.f32.gmra.mxu0 %v1829
        %v1848 = vpop.f32.mrf.mxu0
        %v1849 = vadd.f32 %v1826, %v1848
        %1850 = vdwg.mxu0
        %s1851 = scalar_lea.vmem %s1366, 64
        %v1852 = vld [vmem:[%s1851] sm:$0xff]
        %v1853 = vld [vmem:[%s1851 + $0x8] sm:$0xff]
        %v1854 = vld [vmem:[%s1851 + $0x10] sm:$0xff]
        %v1855 = vld [vmem:[%s1851 + $0x18] sm:$0xff]
        %s1856 = scalar_lea.vmem %s1370, 2
        %v1857 = vld [vmem:[%s1856] sm:$0x1]
        %v1859 = vperm.slane %v1857, 0
        %1861 = vmatpush.msra.mxu0 0.0
        %1862 = vmatpush.msra.mxu0 0.0
        %1863 = vmatpush.msra.mxu0 0.0
        %1864 = vmatpush.msra.mxu0 0.0
        %1865 = vmatpush.msra.mxu0 0.0
        %1866 = vmatpush.msra.mxu0 0.0
        %1867 = vmatpush.msra.mxu0 0.0
        %1868 = vmatpush.msra.mxu0 0.0
        %1869 = vmatpush.msra.mxu0 0.0
        %1870 = vmatpush.msra.mxu0 0.0
        %1871 = vmatpush.msra.mxu0 0.0
        %1872 = vmatpush.msra.mxu0 0.0
        %1873 = vmatpush.msra.mxu0 %v1855
        %1874 = vmatpush.msra.mxu0 %v1854
        %1875 = vmatpush.msra.mxu0 %v1853
        %1876 = vmatpush.msra.mxu0 %v1852
        %1877 = vmatmul.f32.gmra.mxu0 %v1511
        %v1878 = vpop.f32.mrf.mxu0
        %v1879 = vadd.f32 %v1859, %v1878
        %1880 = vdwg.mxu0
        %s1881 = scalar_lea.vmem %s1375, 64
        %v1882 = vld [vmem:[%s1881] sm:$0xff]
        %v1883 = vld [vmem:[%s1881 + $0x8] sm:$0xff]
        %v1884 = vld [vmem:[%s1881 + $0x10] sm:$0xff]
        %v1885 = vld [vmem:[%s1881 + $0x18] sm:$0xff]
        %s1886 = scalar_lea.vmem %s1379, 2
        %v1887 = vld [vmem:[%s1886] sm:$0x1]
        %v1889 = vperm.slane %v1887, 0
        %1891 = vmatpush.msra.mxu0 0.0
        %1892 = vmatpush.msra.mxu0 0.0
        %1893 = vmatpush.msra.mxu0 0.0
        %1894 = vmatpush.msra.mxu0 0.0
        %1895 = vmatpush.msra.mxu0 0.0
        %1896 = vmatpush.msra.mxu0 0.0
        %1897 = vmatpush.msra.mxu0 0.0
        %1898 = vmatpush.msra.mxu0 0.0
        %1899 = vmatpush.msra.mxu0 0.0
        %1900 = vmatpush.msra.mxu0 0.0
        %1901 = vmatpush.msra.mxu0 0.0
        %1902 = vmatpush.msra.mxu0 0.0
        %1903 = vmatpush.msra.mxu0 %v1885
        %1904 = vmatpush.msra.mxu0 %v1884
        %1905 = vmatpush.msra.mxu0 %v1883
        %1906 = vmatpush.msra.mxu0 %v1882
        %1907 = vmatmul.f32.gmra.mxu0 %v1511
        %v1908 = vpop.f32.mrf.mxu0
        %v1909 = vadd.f32 %v1889, %v1908
        %1910 = vdwg.mxu0
        %s1911 = scalar_lea.vmem %s1384, 64
        %v1912 = vld [vmem:[%s1911] sm:$0xff]
        %v1913 = vld [vmem:[%s1911 + $0x8] sm:$0xff]
        %v1914 = vld [vmem:[%s1911 + $0x10] sm:$0xff]
        %v1915 = vld [vmem:[%s1911 + $0x18] sm:$0xff]
        %s1916 = scalar_lea.vmem %s1388, 2
        %v1917 = vld [vmem:[%s1916] sm:$0x1]
        %v1919 = vperm.slane %v1917, 0
        %1921 = vmatpush.msra.mxu0 0.0
        %1922 = vmatpush.msra.mxu0 0.0
        %1923 = vmatpush.msra.mxu0 0.0
        %1924 = vmatpush.msra.mxu0 0.0
        %1925 = vmatpush.msra.mxu0 0.0
        %1926 = vmatpush.msra.mxu0 0.0
        %1927 = vmatpush.msra.mxu0 0.0
        %1928 = vmatpush.msra.mxu0 0.0
        %1929 = vmatpush.msra.mxu0 0.0
        %1930 = vmatpush.msra.mxu0 0.0
        %1931 = vmatpush.msra.mxu0 0.0
        %1932 = vmatpush.msra.mxu0 0.0
        %1933 = vmatpush.msra.mxu0 %v1915
        %1934 = vmatpush.msra.mxu0 %v1914
        %1935 = vmatpush.msra.mxu0 %v1913
        %1936 = vmatpush.msra.mxu0 %v1912
        %1937 = vmatmul.f32.gmra.mxu0 %v1511
        %v1938 = vpop.f32.mrf.mxu0
        %v1939 = vadd.f32 %v1919, %v1938
        %1940 = vdwg.mxu0
        %v1942 = vsel %vm1589, %v1879, 0
        %v1945 = vsel %vm1589, %v1909, 0
        %1947 = vmatpush.xpose.msra.mxu0 0.0
        %1948 = vmatpush.xpose.msra.mxu0 0.0
        %1949 = vmatpush.xpose.msra.mxu0 0.0
        %1950 = vmatpush.xpose.msra.mxu0 0.0
        %1951 = vmatpush.xpose.msra.mxu0 0.0
        %1952 = vmatpush.xpose.msra.mxu0 0.0
        %1953 = vmatpush.xpose.msra.mxu0 0.0
        %1954 = vmatpush.xpose.msra.mxu0 0.0
        %1955 = vmatpush.xpose.msra.mxu0 0.0
        %1956 = vmatpush.xpose.msra.mxu0 0.0
        %1957 = vmatpush.xpose.msra.mxu0 0.0
        %1958 = vmatpush.xpose.msra.mxu0 0.0
        %1959 = vmatpush.xpose.msra.mxu0 0.0
        %1960 = vmatpush.xpose.msra.mxu0 0.0
        %1961 = vmatpush.xpose.msra.mxu0 0.0
        %1962 = vmatpush.xpose.msra.mxu0 %v1945
        %1963 = vmatmul.f32.gmra.mxu0 %v1942
        %v1964 = vpop.f32.mrf.mxu0
        %v1965 = vadd.f32 0.0, %v1964
        %1966 = vdwg.mxu0
        %v1967 = vsel %vm1495, -1e+15, %v1965
        %v1968 = vsel %vm1589, %v1967, -inf
        %1969 = vmax.xlane.f32.xlu0 %v1968
        %v1970 = vpop.xlane.xlu0 %1969
        %v1971 = vsub.f32 %v1967, %v1970
        %v1972 = vmul.f32 %v1971, 1.442695
        %v1973 = vpow.pop %v1972
        %v1974 = vsel %vm1589, %v1973, 0.0
        %1975 = vadd.xlane.f32.xlu0 %v1974
        %v1976 = vpop.xlane.xlu0 %1975
        %v1977 = vrcp.pop %v1976
        %v1978 = vmul.f32 %v1973, %v1977
        %v1980 = vsel %vm1589, %v1978, 0
        %1982 = vmatpush.msra.mxu0 0.0
        %1983 = vmatpush.msra.mxu0 0.0
        %1984 = vmatpush.msra.mxu0 0.0
        %1985 = vmatpush.msra.mxu0 0.0
        %1986 = vmatpush.msra.mxu0 0.0
        %1987 = vmatpush.msra.mxu0 0.0
        %1988 = vmatpush.msra.mxu0 0.0
        %1989 = vmatpush.msra.mxu0 0.0
        %1990 = vmatpush.msra.mxu0 0.0
        %1991 = vmatpush.msra.mxu0 0.0
        %1992 = vmatpush.msra.mxu0 0.0
        %1993 = vmatpush.msra.mxu0 0.0
        %1994 = vmatpush.msra.mxu0 0.0
        %1995 = vmatpush.msra.mxu0 0.0
        %1996 = vmatpush.msra.mxu0 0.0
        %1997 = vmatpush.msra.mxu0 %v1939
        %1998 = vmatmul.f32.gmra.mxu0 %v1980
        %v1999 = vpop.f32.mrf.mxu0
        %v2000 = vadd.f32 0.0, %v1999
        %2001 = vdwg.mxu0
        %s2002 = scalar_lea.vmem %s1393, 16
        %v2003 = vld [vmem:[%s2002] sm:$0xff]
        %v2005 = vsel %vm1589, %v2000, 0
        %2007 = vmatpush.msra.mxu0 0.0
        %2008 = vmatpush.msra.mxu0 0.0
        %2009 = vmatpush.msra.mxu0 0.0
        %2010 = vmatpush.msra.mxu0 0.0
        %2011 = vmatpush.msra.mxu0 0.0
        %2012 = vmatpush.msra.mxu0 0.0
        %2013 = vmatpush.msra.mxu0 0.0
        %2014 = vmatpush.msra.mxu0 0.0
        %2015 = vmatpush.msra.mxu0 0.0
        %2016 = vmatpush.msra.mxu0 0.0
        %2017 = vmatpush.msra.mxu0 0.0
        %2018 = vmatpush.msra.mxu0 0.0
        %2019 = vmatpush.msra.mxu0 0.0
        %2020 = vmatpush.msra.mxu0 0.0
        %2021 = vmatpush.msra.mxu0 0.0
        %2022 = vmatpush.msra.mxu0 %v2003
        %2023 = vmatmul.f32.gmra.mxu0 %v2005
        %v2024 = vpop.f32.mrf.mxu0
        %v2025 = vadd.f32 0.0, %v2024
        %2026 = vdwg.mxu0
        %v2027 = vadd.f32 %v1849, %v2025
        %s2028 = scalar_lea.vmem %s1366, 96
        %v2029 = vld [vmem:[%s2028] sm:$0xff]
        %v2030 = vld [vmem:[%s2028 + $0x8] sm:$0xff]
        %v2031 = vld [vmem:[%s2028 + $0x10] sm:$0xff]
        %v2032 = vld [vmem:[%s2028 + $0x18] sm:$0xff]
        %s2033 = scalar_lea.vmem %s1370, 3
        %v2034 = vld [vmem:[%s2033] sm:$0x1]
        %v2036 = vperm.slane %v2034, 0
        %2038 = vmatpush.msra.mxu0 0.0
        %2039 = vmatpush.msra.mxu0 0.0
        %2040 = vmatpush.msra.mxu0 0.0
        %2041 = vmatpush.msra.mxu0 0.0
        %2042 = vmatpush.msra.mxu0 0.0
        %2043 = vmatpush.msra.mxu0 0.0
        %2044 = vmatpush.msra.mxu0 0.0
        %2045 = vmatpush.msra.mxu0 0.0
        %2046 = vmatpush.msra.mxu0 0.0
        %2047 = vmatpush.msra.mxu0 0.0
        %2048 = vmatpush.msra.mxu0 0.0
        %2049 = vmatpush.msra.mxu0 0.0
        %2050 = vmatpush.msra.mxu0 %v2032
        %2051 = vmatpush.msra.mxu0 %v2031
        %2052 = vmatpush.msra.mxu0 %v2030
        %2053 = vmatpush.msra.mxu0 %v2029
        %2054 = vmatmul.f32.gmra.mxu0 %v1511
        %v2055 = vpop.f32.mrf.mxu0
        %v2056 = vadd.f32 %v2036, %v2055
        %2057 = vdwg.mxu0
        %s2058 = scalar_lea.vmem %s1375, 96
        %v2059 = vld [vmem:[%s2058] sm:$0xff]
        %v2060 = vld [vmem:[%s2058 + $0x8] sm:$0xff]
        %v2061 = vld [vmem:[%s2058 + $0x10] sm:$0xff]
        %v2062 = vld [vmem:[%s2058 + $0x18] sm:$0xff]
        %s2063 = scalar_lea.vmem %s1379, 3
        %v2064 = vld [vmem:[%s2063] sm:$0x1]
        %v2066 = vperm.slane %v2064, 0
        %2068 = vmatpush.msra.mxu0 0.0
        %2069 = vmatpush.msra.mxu0 0.0
        %2070 = vmatpush.msra.mxu0 0.0
        %2071 = vmatpush.msra.mxu0 0.0
        %2072 = vmatpush.msra.mxu0 0.0
        %2073 = vmatpush.msra.mxu0 0.0
        %2074 = vmatpush.msra.mxu0 0.0
        %2075 = vmatpush.msra.mxu0 0.0
        %2076 = vmatpush.msra.mxu0 0.0
        %2077 = vmatpush.msra.mxu0 0.0
        %2078 = vmatpush.msra.mxu0 0.0
        %2079 = vmatpush.msra.mxu0 0.0
        %2080 = vmatpush.msra.mxu0 %v2062
        %2081 = vmatpush.msra.mxu0 %v2061
        %2082 = vmatpush.msra.mxu0 %v2060
        %2083 = vmatpush.msra.mxu0 %v2059
        %2084 = vmatmul.f32.gmra.mxu0 %v1511
        %v2085 = vpop.f32.mrf.mxu0
        %v2086 = vadd.f32 %v2066, %v2085
        %2087 = vdwg.mxu0
        %s2088 = scalar_lea.vmem %s1384, 96
        %v2089 = vld [vmem:[%s2088] sm:$0xff]
        %v2090 = vld [vmem:[%s2088 + $0x8] sm:$0xff]
        %v2091 = vld [vmem:[%s2088 + $0x10] sm:$0xff]
        %v2092 = vld [vmem:[%s2088 + $0x18] sm:$0xff]
        %s2093 = scalar_lea.vmem %s1388, 3
        %v2094 = vld [vmem:[%s2093] sm:$0x1]
        %v2096 = vperm.slane %v2094, 0
        %2098 = vmatpush.msra.mxu0 0.0
        %2099 = vmatpush.msra.mxu0 0.0
        %2100 = vmatpush.msra.mxu0 0.0
        %2101 = vmatpush.msra.mxu0 0.0
        %2102 = vmatpush.msra.mxu0 0.0
        %2103 = vmatpush.msra.mxu0 0.0
        %2104 = vmatpush.msra.mxu0 0.0
        %2105 = vmatpush.msra.mxu0 0.0
        %2106 = vmatpush.msra.mxu0 0.0
        %2107 = vmatpush.msra.mxu0 0.0
        %2108 = vmatpush.msra.mxu0 0.0
        %2109 = vmatpush.msra.mxu0 0.0
        %2110 = vmatpush.msra.mxu0 %v2092
        %2111 = vmatpush.msra.mxu0 %v2091
        %2112 = vmatpush.msra.mxu0 %v2090
        %2113 = vmatpush.msra.mxu0 %v2089
        %2114 = vmatmul.f32.gmra.mxu0 %v1511
        %v2115 = vpop.f32.mrf.mxu0
        %v2116 = vadd.f32 %v2096, %v2115
        %2117 = vdwg.mxu0
        %v2119 = vsel %vm1589, %v2056, 0
        %v2122 = vsel %vm1589, %v2086, 0
        %2124 = vmatpush.xpose.msra.mxu0 0.0
        %2125 = vmatpush.xpose.msra.mxu0 0.0
        %2126 = vmatpush.xpose.msra.mxu0 0.0
        %2127 = vmatpush.xpose.msra.mxu0 0.0
        %2128 = vmatpush.xpose.msra.mxu0 0.0
        %2129 = vmatpush.xpose.msra.mxu0 0.0
        %2130 = vmatpush.xpose.msra.mxu0 0.0
        %2131 = vmatpush.xpose.msra.mxu0 0.0
        %2132 = vmatpush.xpose.msra.mxu0 0.0
        %2133 = vmatpush.xpose.msra.mxu0 0.0
        %2134 = vmatpush.xpose.msra.mxu0 0.0
        %2135 = vmatpush.xpose.msra.mxu0 0.0
        %2136 = vmatpush.xpose.msra.mxu0 0.0
        %2137 = vmatpush.xpose.msra.mxu0 0.0
        %2138 = vmatpush.xpose.msra.mxu0 0.0
        %2139 = vmatpush.xpose.msra.mxu0 %v2122
        %2140 = vmatmul.f32.gmra.mxu0 %v2119
        %v2141 = vpop.f32.mrf.mxu0
        %v2142 = vadd.f32 0.0, %v2141
        %2143 = vdwg.mxu0
        %v2144 = vsel %vm1495, -1e+15, %v2142
        %v2145 = vsel %vm1589, %v2144, -inf
        %2146 = vmax.xlane.f32.xlu0 %v2145
        %v2147 = vpop.xlane.xlu0 %2146
        %v2148 = vsub.f32 %v2144, %v2147
        %v2149 = vmul.f32 %v2148, 1.442695
        %v2150 = vpow.pop %v2149
        %v2151 = vsel %vm1589, %v2150, 0.0
        %2152 = vadd.xlane.f32.xlu0 %v2151
        %v2153 = vpop.xlane.xlu0 %2152
        %v2154 = vrcp.pop %v2153
        %v2155 = vmul.f32 %v2150, %v2154
        %v2157 = vsel %vm1589, %v2155, 0
        %2159 = vmatpush.msra.mxu0 0.0
        %2160 = vmatpush.msra.mxu0 0.0
        %2161 = vmatpush.msra.mxu0 0.0
        %2162 = vmatpush.msra.mxu0 0.0
        %2163 = vmatpush.msra.mxu0 0.0
        %2164 = vmatpush.msra.mxu0 0.0
        %2165 = vmatpush.msra.mxu0 0.0
        %2166 = vmatpush.msra.mxu0 0.0
        %2167 = vmatpush.msra.mxu0 0.0
        %2168 = vmatpush.msra.mxu0 0.0
        %2169 = vmatpush.msra.mxu0 0.0
        %2170 = vmatpush.msra.mxu0 0.0
        %2171 = vmatpush.msra.mxu0 0.0
        %2172 = vmatpush.msra.mxu0 0.0
        %2173 = vmatpush.msra.mxu0 0.0
        %2174 = vmatpush.msra.mxu0 %v2116
        %2175 = vmatmul.f32.gmra.mxu0 %v2157
        %v2176 = vpop.f32.mrf.mxu0
        %v2177 = vadd.f32 0.0, %v2176
        %2178 = vdwg.mxu0
        %s2179 = scalar_lea.vmem %s1393, 24
        %v2180 = vld [vmem:[%s2179] sm:$0xff]
        %v2182 = vsel %vm1589, %v2177, 0
        %2184 = vmatpush.msra.mxu0 0.0
        %2185 = vmatpush.msra.mxu0 0.0
        %2186 = vmatpush.msra.mxu0 0.0
        %2187 = vmatpush.msra.mxu0 0.0
        %2188 = vmatpush.msra.mxu0 0.0
        %2189 = vmatpush.msra.mxu0 0.0
        %2190 = vmatpush.msra.mxu0 0.0
        %2191 = vmatpush.msra.mxu0 0.0
        %2192 = vmatpush.msra.mxu0 0.0
        %2193 = vmatpush.msra.mxu0 0.0
        %2194 = vmatpush.msra.mxu0 0.0
        %2195 = vmatpush.msra.mxu0 0.0
        %2196 = vmatpush.msra.mxu0 0.0
        %2197 = vmatpush.msra.mxu0 0.0
        %2198 = vmatpush.msra.mxu0 0.0
        %2199 = vmatpush.msra.mxu0 %v2180
        %2200 = vmatmul.f32.gmra.mxu0 %v2182
        %v2201 = vpop.f32.mrf.mxu0
        %v2202 = vadd.f32 0.0, %v2201
        %2203 = vdwg.mxu0
        %v2204 = vadd.f32 %v2027, %v2202
        %v2205 = vadd.f32 %v1477, %v2204
        %v2206 = vld [vmem:[%s1396] sm:$0x1]
        %v2208 = vperm.slane %v2206, 0
        %v2210 = vadd.f32 %v2205, %v2208
        %v2211 = vld [vmem:[%s1399] sm:$0x1]
        %v2212 = vld [vmem:[%s1402] sm:$0x1]
        %v2213 = vsel %vm1509, %v2210, 0.0
        %2214 = vadd.xlane.f32.xlu0 %v2213
        %v2215 = vpop.xlane.xlu0 %2214
        %v2216 = vrcp.pop 32.0
        %v2217 = vmul.f32 32.0, %v2216
        %v2218 = vsub.f32 1.0, %v2217
        %v2219 = vmul.f32 %v2216, %v2218
        %v2220 = vadd.f32 %v2216, %v2219
        %vm2221 = vweird.f32 %v2216
        %v2222 = vsel %vm2221, %v2216, %v2220
        %v2223 = vmul.f32 %v2215, %v2222
        %v2224 = vsub.f32 %v2210, %v2223
        %v2225 = vmul.f32 %v2224, %v2224
        %v2226 = vsel %vm1509, %v2225, 0.0
        %2227 = vadd.xlane.f32.xlu0 %v2226
        %v2228 = vpop.xlane.xlu0 %2227
        %v2229 = vmul.f32 %v2228, %v2222
        %v2230 = vadd.f32 %v2229, 1e-05
        %v2231 = vrsqrt.pop %v2230
        %v2232 = vmul.f32 %v2231, %v2230
        %v2233 = vmul.f32 %v2232, %v2231
        %v2234 = vmul.f32 0.5, %v2233
        %v2235 = vsub.f32 1.5, %v2234
        %v2236 = vmul.f32 %v2231, %v2235
        %vm2237 = vweird.f32 %v2230
        %vm2238 = vweird.f32 %v2231
        %vm2239 = vmor %vm2237, %vm2238
        %v2240 = vsel %vm2239, %v2231, %v2236
        %v2241 = vmul.f32 %v2224, %v2240
        %v2243 = vperm.slane %v2211, 0
        %v2245 = vmul.f32 %v2241, %v2243
        %v2247 = vperm.slane %v2212, 0
        %v2249 = vadd.f32 %v2245, %v2247
        %v2250 = vld [vmem:[%s1407] sm:$0xff]
        %v2251 = vld [vmem:[%s1407 + $0x8] sm:$0xff]
        %v2252 = vld [vmem:[%s1407 + $0x10] sm:$0xff]
        %v2253 = vld [vmem:[%s1407 + $0x18] sm:$0xff]
        %v2254 = vld [vmem:[%s1411] sm:$0x1]
        %v2256 = vperm.slane %v2254, 0
        %v2259 = vsel %vm1509, %v2249, 0
        %2261 = vmatpush.msra.mxu0 0.0
        %2262 = vmatpush.msra.mxu0 0.0
        %2263 = vmatpush.msra.mxu0 0.0
        %2264 = vmatpush.msra.mxu0 0.0
        %2265 = vmatpush.msra.mxu0 0.0
        %2266 = vmatpush.msra.mxu0 0.0
        %2267 = vmatpush.msra.mxu0 0.0
        %2268 = vmatpush.msra.mxu0 0.0
        %2269 = vmatpush.msra.mxu0 0.0
        %2270 = vmatpush.msra.mxu0 0.0
        %2271 = vmatpush.msra.mxu0 0.0
        %2272 = vmatpush.msra.mxu0 0.0
        %2273 = vmatpush.msra.mxu0 %v2253
        %2274 = vmatpush.msra.mxu0 %v2252
        %2275 = vmatpush.msra.mxu0 %v2251
        %2276 = vmatpush.msra.mxu0 %v2250
        %2277 = vmatmul.f32.gmra.mxu0 %v2259
        %v2278 = vpop.f32.mrf.mxu0
        %v2279 = vadd.f32 %v2256, %v2278
        %2280 = vdwg.mxu0
        %v2281 = vld [vmem:[%s1416] sm:$0xff]
        %v2282 = vld [vmem:[%s1416 + $0x8] sm:$0xff]
        %v2283 = vld [vmem:[%s1416 + $0x10] sm:$0xff]
        %v2284 = vld [vmem:[%s1416 + $0x18] sm:$0xff]
        %v2285 = vld [vmem:[%s1420] sm:$0x1]
        %v2287 = vperm.slane %v2285, 0
        %v2290 = vsel %vm1509, %v1478, 0
        %v2293 = vsel %vm1509, %v1479, 0
        %v2296 = vsel %vm1509, %v1480, 0
        %v2299 = vsel %vm1509, %v1481, 0
        %v2302 = vsel %vm1509, %v1482, 0
        %v2305 = vsel %vm1509, %v1483, 0
        %v2308 = vsel %vm1509, %v1484, 0
        %v2311 = vsel %vm1509, %v1485, 0
        %v2314 = vsel %vm1509, %v1486, 0
        %v2317 = vsel %vm1509, %v1487, 0
        %v2320 = vsel %vm1509, %v1488, 0
        %v2323 = vsel %vm1509, %v1489, 0
        %v2326 = vsel %vm1509, %v1490, 0
        %v2329 = vsel %vm1509, %v1491, 0
        %v2332 = vsel %vm1509, %v1492, 0
        %v2335 = vsel %vm1509, %v1493, 0
        %2337 = vmatpush.msra.mxu0 0.0
        %2338 = vmatpush.msra.mxu0 0.0
        %2339 = vmatpush.msra.mxu0 0.0
        %2340 = vmatpush.msra.mxu0 0.0
        %2341 = vmatpush.msra.mxu0 0.0
        %2342 = vmatpush.msra.mxu0 0.0
        %2343 = vmatpush.msra.mxu0 0.0
        %2344 = vmatpush.msra.mxu0 0.0
        %2345 = vmatpush.msra.mxu0 0.0
        %2346 = vmatpush.msra.mxu0 0.0
        %2347 = vmatpush.msra.mxu0 0.0
        %2348 = vmatpush.msra.mxu0 0.0
        %2349 = vmatpush.msra.mxu0 %v2284
        %2350 = vmatpush.msra.mxu0 %v2283
        %2351 = vmatpush.msra.mxu0 %v2282
        %2352 = vmatpush.msra.mxu0 %v2281
        %2353 = vmatmul.f32.gmra.mxu0 %v2290
        %v2354 = vpop.f32.mrf.mxu0
        %v2355 = vadd.f32 %v2287, %v2354
        %2356 = vmatmul.f32.gmra.mxu0 %v2293
        %v2357 = vpop.f32.mrf.mxu0
        %v2358 = vadd.f32 %v2287, %v2357
        %2359 = vmatmul.f32.gmra.mxu0 %v2296
        %v2360 = vpop.f32.mrf.mxu0
        %v2361 = vadd.f32 %v2287, %v2360
        %2362 = vmatmul.f32.gmra.mxu0 %v2299
        %v2363 = vpop.f32.mrf.mxu0
        %v2364 = vadd.f32 %v2287, %v2363
        %2365 = vmatmul.f32.gmra.mxu0 %v2302
        %v2366 = vpop.f32.mrf.mxu0
        %v2367 = vadd.f32 %v2287, %v2366
        %2368 = vmatmul.f32.gmra.mxu0 %v2305
        %v2369 = vpop.f32.mrf.mxu0
        %v2370 = vadd.f32 %v2287, %v2369
        %2371 = vmatmul.f32.gmra.mxu0 %v2308
        %v2372 = vpop.f32.mrf.mxu0
        %v2373 = vadd.f32 %v2287, %v2372
        %2374 = vmatmul.f32.gmra.mxu0 %v2311
        %v2375 = vpop.f32.mrf.mxu0
        %v2376 = vadd.f32 %v2287, %v2375
        %2377 = vmatmul.f32.gmra.mxu0 %v2314
        %v2378 = vpop.f32.mrf.mxu0
        %v2379 = vadd.f32 %v2287, %v2378
        %2380 = vmatmul.f32.gmra.mxu0 %v2317
        %v2381 = vpop.f32.mrf.mxu0
        %v2382 = vadd.f32 %v2287, %v2381
        %2383 = vmatmul.f32.gmra.mxu0 %v2320
        %v2384 = vpop.f32.mrf.mxu0
        %v2385 = vadd.f32 %v2287, %v2384
        %2386 = vmatmul.f32.gmra.mxu0 %v2323
        %v2387 = vpop.f32.mrf.mxu0
        %v2388 = vadd.f32 %v2287, %v2387
        %2389 = vmatmul.f32.gmra.mxu0 %v2326
        %v2390 = vpop.f32.mrf.mxu0
        %v2391 = vadd.f32 %v2287, %v2390
        %2392 = vmatmul.f32.gmra.mxu0 %v2329
        %v2393 = vpop.f32.mrf.mxu0
        %v2394 = vadd.f32 %v2287, %v2393
        %2395 = vmatmul.f32.gmra.mxu0 %v2332
        %v2396 = vpop.f32.mrf.mxu0
        %v2397 = vadd.f32 %v2287, %v2396
        %2398 = vmatmul.f32.gmra.mxu0 %v2335
        %v2399 = vpop.f32.mrf.mxu0
        %v2400 = vadd.f32 %v2287, %v2399
        %2401 = vdwg.mxu0
        %v2402 = vld [vmem:[%s1425] sm:$0xff]
        %v2403 = vld [vmem:[%s1425 + $0x8] sm:$0xff]
        %v2404 = vld [vmem:[%s1425 + $0x10] sm:$0xff]
        %v2405 = vld [vmem:[%s1425 + $0x18] sm:$0xff]
        %v2406 = vld [vmem:[%s1429] sm:$0x1]
        %v2408 = vperm.slane %v2406, 0
        %2410 = vmatpush.msra.mxu0 0.0
        %2411 = vmatpush.msra.mxu0 0.0
        %2412 = vmatpush.msra.mxu0 0.0
        %2413 = vmatpush.msra.mxu0 0.0
        %2414 = vmatpush.msra.mxu0 0.0
        %2415 = vmatpush.msra.mxu0 0.0
        %2416 = vmatpush.msra.mxu0 0.0
        %2417 = vmatpush.msra.mxu0 0.0
        %2418 = vmatpush.msra.mxu0 0.0
        %2419 = vmatpush.msra.mxu0 0.0
        %2420 = vmatpush.msra.mxu0 0.0
        %2421 = vmatpush.msra.mxu0 0.0
        %2422 = vmatpush.msra.mxu0 %v2405
        %2423 = vmatpush.msra.mxu0 %v2404
        %2424 = vmatpush.msra.mxu0 %v2403
        %2425 = vmatpush.msra.mxu0 %v2402
        %2426 = vmatmul.f32.gmra.mxu0 %v2290
        %v2427 = vpop.f32.mrf.mxu0
        %v2428 = vadd.f32 %v2408, %v2427
        %2429 = vmatmul.f32.gmra.mxu0 %v2293
        %v2430 = vpop.f32.mrf.mxu0
        %v2431 = vadd.f32 %v2408, %v2430
        %2432 = vmatmul.f32.gmra.mxu0 %v2296
        %v2433 = vpop.f32.mrf.mxu0
        %v2434 = vadd.f32 %v2408, %v2433
        %2435 = vmatmul.f32.gmra.mxu0 %v2299
        %v2436 = vpop.f32.mrf.mxu0
        %v2437 = vadd.f32 %v2408, %v2436
        %2438 = vmatmul.f32.gmra.mxu0 %v2302
        %v2439 = vpop.f32.mrf.mxu0
        %v2440 = vadd.f32 %v2408, %v2439
        %2441 = vmatmul.f32.gmra.mxu0 %v2305
        %v2442 = vpop.f32.mrf.mxu0
        %v2443 = vadd.f32 %v2408, %v2442
        %2444 = vmatmul.f32.gmra.mxu0 %v2308
        %v2445 = vpop.f32.mrf.mxu0
        %v2446 = vadd.f32 %v2408, %v2445
        %2447 = vmatmul.f32.gmra.mxu0 %v2311
        %v2448 = vpop.f32.mrf.mxu0
        %v2449 = vadd.f32 %v2408, %v2448
        %2450 = vmatmul.f32.gmra.mxu0 %v2314
        %v2451 = vpop.f32.mrf.mxu0
        %v2452 = vadd.f32 %v2408, %v2451
        %2453 = vmatmul.f32.gmra.mxu0 %v2317
        %v2454 = vpop.f32.mrf.mxu0
        %v2455 = vadd.f32 %v2408, %v2454
        %2456 = vmatmul.f32.gmra.mxu0 %v2320
        %v2457 = vpop.f32.mrf.mxu0
        %v2458 = vadd.f32 %v2408, %v2457
        %2459 = vmatmul.f32.gmra.mxu0 %v2323
        %v2460 = vpop.f32.mrf.mxu0
        %v2461 = vadd.f32 %v2408, %v2460
        %2462 = vmatmul.f32.gmra.mxu0 %v2326
        %v2463 = vpop.f32.mrf.mxu0
        %v2464 = vadd.f32 %v2408, %v2463
        %2465 = vmatmul.f32.gmra.mxu0 %v2329
        %v2466 = vpop.f32.mrf.mxu0
        %v2467 = vadd.f32 %v2408, %v2466
        %2468 = vmatmul.f32.gmra.mxu0 %v2332
        %v2469 = vpop.f32.mrf.mxu0
        %v2470 = vadd.f32 %v2408, %v2469
        %2471 = vmatmul.f32.gmra.mxu0 %v2335
        %v2472 = vpop.f32.mrf.mxu0
        %v2473 = vadd.f32 %v2408, %v2472
        %2474 = vdwg.mxu0
        %v2476 = vsel %vm1589, %v2279, 0
        %v2479 = vsel %vm1589, %v2355, 0
        %v2482 = vsel %vm1589, %v2358, 0
        %v2485 = vsel %vm1589, %v2361, 0
        %v2488 = vsel %vm1589, %v2364, 0
        %v2491 = vsel %vm1589, %v2367, 0
        %v2494 = vsel %vm1589, %v2370, 0
        %v2497 = vsel %vm1589, %v2373, 0
        %v2500 = vsel %vm1589, %v2376, 0
        %v2503 = vsel %vm1589, %v2379, 0
        %v2506 = vsel %vm1589, %v2382, 0
        %v2509 = vsel %vm1589, %v2385, 0
        %v2512 = vsel %vm1589, %v2388, 0
        %v2515 = vsel %vm1589, %v2391, 0
        %v2518 = vsel %vm1589, %v2394, 0
        %v2521 = vsel %vm1589, %v2397, 0
        %v2524 = vsel %vm1589, %v2400, 0
        %2526 = vmatpush.xpose.msra.mxu0 %v2524
        %2527 = vmatpush.xpose.msra.mxu0 %v2521
        %2528 = vmatpush.xpose.msra.mxu0 %v2518
        %2529 = vmatpush.xpose.msra.mxu0 %v2515
        %2530 = vmatpush.xpose.msra.mxu0 %v2512
        %2531 = vmatpush.xpose.msra.mxu0 %v2509
        %2532 = vmatpush.xpose.msra.mxu0 %v2506
        %2533 = vmatpush.xpose.msra.mxu0 %v2503
        %2534 = vmatpush.xpose.msra.mxu0 %v2500
        %2535 = vmatpush.xpose.msra.mxu0 %v2497
        %2536 = vmatpush.xpose.msra.mxu0 %v2494
        %2537 = vmatpush.xpose.msra.mxu0 %v2491
        %2538 = vmatpush.xpose.msra.mxu0 %v2488
        %2539 = vmatpush.xpose.msra.mxu0 %v2485
        %2540 = vmatpush.xpose.msra.mxu0 %v2482
        %2541 = vmatpush.xpose.msra.mxu0 %v2479
        %2542 = vmatmul.f32.gmra.mxu0 %v2476
        %v2543 = vpop.f32.mrf.mxu0
        %v2544 = vadd.f32 0.0, %v2543
        %2545 = vdwg.mxu0
        %v2546 = vsel %vm1500, -1e+15, %v2544
        %2547 = vmax.xlane.f32.xlu0 %v2546
        %v2548 = vpop.xlane.xlu0 %2547
        %v2549 = vsub.f32 %v2546, %v2548
        %v2550 = vmul.f32 %v2549, 1.442695
        %v2551 = vpow.pop %v2550
        %2552 = vadd.xlane.f32.xlu0 %v2551
        %v2553 = vpop.xlane.xlu0 %2552
        %v2554 = vrcp.pop %v2553
        %v2555 = vmul.f32 %v2553, %v2554
        %v2556 = vsub.f32 1.0, %v2555
        %v2557 = vmul.f32 %v2554, %v2556
        %v2558 = vadd.f32 %v2554, %v2557
        %vm2559 = vweird.f32 %v2553
        %vm2560 = vweird.f32 %v2554
        %vm2561 = vmor %vm2559, %vm2560
        %v2562 = vsel %vm2561, %v2554, %v2558
        %v2563 = vand.u32 2147483647, %v2553
        %vm2564 = vcmp.eq.f32.partialorder %v2563, 8.507059e+37
        %v2565 = vand.u32 %v2553, 2147483648
        %v2566 = vor.u32 1.1754944e-38, %v2565
        %v2567 = vsel %vm2564, %v2566, %v2562
        %v2568 = vmul.f32 %v2551, %v2567
        %p2569 = scmp.eq.s32.totalorder %s83, 1
        // Predicated region
        $region145: #{decoder_forward.2} parent=139 // pred_check
          %p2570 = pneg %p2569
        $region146: #{decoder_forward.2} parent=139 // pred_check_branch
          %2572 = sbr.rel (%p2570) target = $region148
        $region147: #{decoder_forward.2} parent=139 // pred_region
          %2573 = vst [vmem:[%s1345] sm:$0xff] %v2568
        $region148: #{decoder_forward.2} parent=139 // pred_fallthru
          _
        %2574 = vmatpush.msra.mxu0 %v2473
        %2575 = vmatpush.msra.mxu0 %v2470
        %2576 = vmatpush.msra.mxu0 %v2467
        %2577 = vmatpush.msra.mxu0 %v2464
        %2578 = vmatpush.msra.mxu0 %v2461
        %2579 = vmatpush.msra.mxu0 %v2458
        %2580 = vmatpush.msra.mxu0 %v2455
        %2581 = vmatpush.msra.mxu0 %v2452
        %2582 = vmatpush.msra.mxu0 %v2449
        %2583 = vmatpush.msra.mxu0 %v2446
        %2584 = vmatpush.msra.mxu0 %v2443
        %2585 = vmatpush.msra.mxu0 %v2440
        %2586 = vmatpush.msra.mxu0 %v2437
        %2587 = vmatpush.msra.mxu0 %v2434
        %2588 = vmatpush.msra.mxu0 %v2431
        %2589 = vmatpush.msra.mxu0 %v2428
        %2590 = vmatmul.f32.gmra.mxu0 %v2568
        %v2591 = vpop.f32.mrf.mxu0
        %v2592 = vadd.f32 0.0, %v2591
        %2593 = vdwg.mxu0
        %v2594 = vld [vmem:[%s1434] sm:$0xff]
        %s2595 = scalar_lea.vmem %s1407, 32
        %v2596 = vld [vmem:[%s2595] sm:$0xff]
        %v2597 = vld [vmem:[%s2595 + $0x8] sm:$0xff]
        %v2598 = vld [vmem:[%s2595 + $0x10] sm:$0xff]
        %v2599 = vld [vmem:[%s2595 + $0x18] sm:$0xff]
        %s2600 = scalar_lea.vmem %s1411, 1
        %v2601 = vld [vmem:[%s2600] sm:$0x1]
        %v2603 = vperm.slane %v2601, 0
        %2605 = vmatpush.msra.mxu0 0.0
        %2606 = vmatpush.msra.mxu0 0.0
        %2607 = vmatpush.msra.mxu0 0.0
        %2608 = vmatpush.msra.mxu0 0.0
        %2609 = vmatpush.msra.mxu0 0.0
        %2610 = vmatpush.msra.mxu0 0.0
        %2611 = vmatpush.msra.mxu0 0.0
        %2612 = vmatpush.msra.mxu0 0.0
        %2613 = vmatpush.msra.mxu0 0.0
        %2614 = vmatpush.msra.mxu0 0.0
        %2615 = vmatpush.msra.mxu0 0.0
        %2616 = vmatpush.msra.mxu0 0.0
        %2617 = vmatpush.msra.mxu0 %v2599
        %2618 = vmatpush.msra.mxu0 %v2598
        %2619 = vmatpush.msra.mxu0 %v2597
        %2620 = vmatpush.msra.mxu0 %v2596
        %2621 = vmatmul.f32.gmra.mxu0 %v2259
        %v2622 = vpop.f32.mrf.mxu0
        %v2623 = vadd.f32 %v2603, %v2622
        %2624 = vdwg.mxu0
        %s2625 = scalar_lea.vmem %s1416, 32
        %v2626 = vld [vmem:[%s2625] sm:$0xff]
        %v2627 = vld [vmem:[%s2625 + $0x8] sm:$0xff]
        %v2628 = vld [vmem:[%s2625 + $0x10] sm:$0xff]
        %v2629 = vld [vmem:[%s2625 + $0x18] sm:$0xff]
        %s2630 = scalar_lea.vmem %s1420, 1
        %v2631 = vld [vmem:[%s2630] sm:$0x1]
        %v2633 = vperm.slane %v2631, 0
        %2635 = vmatpush.msra.mxu0 0.0
        %2636 = vmatpush.msra.mxu0 0.0
        %2637 = vmatpush.msra.mxu0 0.0
        %2638 = vmatpush.msra.mxu0 0.0
        %2639 = vmatpush.msra.mxu0 0.0
        %2640 = vmatpush.msra.mxu0 0.0
        %2641 = vmatpush.msra.mxu0 0.0
        %2642 = vmatpush.msra.mxu0 0.0
        %2643 = vmatpush.msra.mxu0 0.0
        %2644 = vmatpush.msra.mxu0 0.0
        %2645 = vmatpush.msra.mxu0 0.0
        %2646 = vmatpush.msra.mxu0 0.0
        %2647 = vmatpush.msra.mxu0 %v2629
        %2648 = vmatpush.msra.mxu0 %v2628
        %2649 = vmatpush.msra.mxu0 %v2627
        %2650 = vmatpush.msra.mxu0 %v2626
        %2651 = vmatmul.f32.gmra.mxu0 %v2290
        %v2652 = vpop.f32.mrf.mxu0
        %v2653 = vadd.f32 %v2633, %v2652
        %2654 = vmatmul.f32.gmra.mxu0 %v2293
        %v2655 = vpop.f32.mrf.mxu0
        %v2656 = vadd.f32 %v2633, %v2655
        %2657 = vmatmul.f32.gmra.mxu0 %v2296
        %v2658 = vpop.f32.mrf.mxu0
        %v2659 = vadd.f32 %v2633, %v2658
        %2660 = vmatmul.f32.gmra.mxu0 %v2299
        %v2661 = vpop.f32.mrf.mxu0
        %v2662 = vadd.f32 %v2633, %v2661
        %2663 = vmatmul.f32.gmra.mxu0 %v2302
        %v2664 = vpop.f32.mrf.mxu0
        %v2665 = vadd.f32 %v2633, %v2664
        %2666 = vmatmul.f32.gmra.mxu0 %v2305
        %v2667 = vpop.f32.mrf.mxu0
        %v2668 = vadd.f32 %v2633, %v2667
        %2669 = vmatmul.f32.gmra.mxu0 %v2308
        %v2670 = vpop.f32.mrf.mxu0
        %v2671 = vadd.f32 %v2633, %v2670
        %2672 = vmatmul.f32.gmra.mxu0 %v2311
        %v2673 = vpop.f32.mrf.mxu0
        %v2674 = vadd.f32 %v2633, %v2673
        %2675 = vmatmul.f32.gmra.mxu0 %v2314
        %v2676 = vpop.f32.mrf.mxu0
        %v2677 = vadd.f32 %v2633, %v2676
        %2678 = vmatmul.f32.gmra.mxu0 %v2317
        %v2679 = vpop.f32.mrf.mxu0
        %v2680 = vadd.f32 %v2633, %v2679
        %2681 = vmatmul.f32.gmra.mxu0 %v2320
        %v2682 = vpop.f32.mrf.mxu0
        %v2683 = vadd.f32 %v2633, %v2682
        %2684 = vmatmul.f32.gmra.mxu0 %v2323
        %v2685 = vpop.f32.mrf.mxu0
        %v2686 = vadd.f32 %v2633, %v2685
        %2687 = vmatmul.f32.gmra.mxu0 %v2326
        %v2688 = vpop.f32.mrf.mxu0
        %v2689 = vadd.f32 %v2633, %v2688
        %2690 = vmatmul.f32.gmra.mxu0 %v2329
        %v2691 = vpop.f32.mrf.mxu0
        %v2692 = vadd.f32 %v2633, %v2691
        %2693 = vmatmul.f32.gmra.mxu0 %v2332
        %v2694 = vpop.f32.mrf.mxu0
        %v2695 = vadd.f32 %v2633, %v2694
        %2696 = vmatmul.f32.gmra.mxu0 %v2335
        %v2697 = vpop.f32.mrf.mxu0
        %v2698 = vadd.f32 %v2633, %v2697
        %2699 = vdwg.mxu0
        %s2700 = scalar_lea.vmem %s1425, 32
        %v2701 = vld [vmem:[%s2700] sm:$0xff]
        %v2702 = vld [vmem:[%s2700 + $0x8] sm:$0xff]
        %v2703 = vld [vmem:[%s2700 + $0x10] sm:$0xff]
        %v2704 = vld [vmem:[%s2700 + $0x18] sm:$0xff]
        %s2705 = scalar_lea.vmem %s1429, 1
        %v2706 = vld [vmem:[%s2705] sm:$0x1]
        %v2708 = vperm.slane %v2706, 0
        %2710 = vmatpush.msra.mxu0 0.0
        %2711 = vmatpush.msra.mxu0 0.0
        %2712 = vmatpush.msra.mxu0 0.0
        %2713 = vmatpush.msra.mxu0 0.0
        %2714 = vmatpush.msra.mxu0 0.0
        %2715 = vmatpush.msra.mxu0 0.0
        %2716 = vmatpush.msra.mxu0 0.0
        %2717 = vmatpush.msra.mxu0 0.0
        %2718 = vmatpush.msra.mxu0 0.0
        %2719 = vmatpush.msra.mxu0 0.0
        %2720 = vmatpush.msra.mxu0 0.0
        %2721 = vmatpush.msra.mxu0 0.0
        %2722 = vmatpush.msra.mxu0 %v2704
        %2723 = vmatpush.msra.mxu0 %v2703
        %2724 = vmatpush.msra.mxu0 %v2702
        %2725 = vmatpush.msra.mxu0 %v2701
        %2726 = vmatmul.f32.gmra.mxu0 %v2290
        %v2727 = vpop.f32.mrf.mxu0
        %v2728 = vadd.f32 %v2708, %v2727
        %2729 = vmatmul.f32.gmra.mxu0 %v2293
        %v2730 = vpop.f32.mrf.mxu0
        %v2731 = vadd.f32 %v2708, %v2730
        %2732 = vmatmul.f32.gmra.mxu0 %v2296
        %v2733 = vpop.f32.mrf.mxu0
        %v2734 = vadd.f32 %v2708, %v2733
        %2735 = vmatmul.f32.gmra.mxu0 %v2299
        %v2736 = vpop.f32.mrf.mxu0
        %v2737 = vadd.f32 %v2708, %v2736
        %2738 = vmatmul.f32.gmra.mxu0 %v2302
        %v2739 = vpop.f32.mrf.mxu0
        %v2740 = vadd.f32 %v2708, %v2739
        %2741 = vmatmul.f32.gmra.mxu0 %v2305
        %v2742 = vpop.f32.mrf.mxu0
        %v2743 = vadd.f32 %v2708, %v2742
        %2744 = vmatmul.f32.gmra.mxu0 %v2308
        %v2745 = vpop.f32.mrf.mxu0
        %v2746 = vadd.f32 %v2708, %v2745
        %2747 = vmatmul.f32.gmra.mxu0 %v2311
        %v2748 = vpop.f32.mrf.mxu0
        %v2749 = vadd.f32 %v2708, %v2748
        %2750 = vmatmul.f32.gmra.mxu0 %v2314
        %v2751 = vpop.f32.mrf.mxu0
        %v2752 = vadd.f32 %v2708, %v2751
        %2753 = vmatmul.f32.gmra.mxu0 %v2317
        %v2754 = vpop.f32.mrf.mxu0
        %v2755 = vadd.f32 %v2708, %v2754
        %2756 = vmatmul.f32.gmra.mxu0 %v2320
        %v2757 = vpop.f32.mrf.mxu0
        %v2758 = vadd.f32 %v2708, %v2757
        %2759 = vmatmul.f32.gmra.mxu0 %v2323
        %v2760 = vpop.f32.mrf.mxu0
        %v2761 = vadd.f32 %v2708, %v2760
        %2762 = vmatmul.f32.gmra.mxu0 %v2326
        %v2763 = vpop.f32.mrf.mxu0
        %v2764 = vadd.f32 %v2708, %v2763
        %2765 = vmatmul.f32.gmra.mxu0 %v2329
        %v2766 = vpop.f32.mrf.mxu0
        %v2767 = vadd.f32 %v2708, %v2766
        %2768 = vmatmul.f32.gmra.mxu0 %v2332
        %v2769 = vpop.f32.mrf.mxu0
        %v2770 = vadd.f32 %v2708, %v2769
        %2771 = vmatmul.f32.gmra.mxu0 %v2335
        %v2772 = vpop.f32.mrf.mxu0
        %v2773 = vadd.f32 %v2708, %v2772
        %2774 = vdwg.mxu0
        %v2776 = vsel %vm1589, %v2623, 0
        %v2779 = vsel %vm1589, %v2653, 0
        %v2782 = vsel %vm1589, %v2656, 0
        %v2785 = vsel %vm1589, %v2659, 0
        %v2788 = vsel %vm1589, %v2662, 0
        %v2791 = vsel %vm1589, %v2665, 0
        %v2794 = vsel %vm1589, %v2668, 0
        %v2797 = vsel %vm1589, %v2671, 0
        %v2800 = vsel %vm1589, %v2674, 0
        %v2803 = vsel %vm1589, %v2677, 0
        %v2806 = vsel %vm1589, %v2680, 0
        %v2809 = vsel %vm1589, %v2683, 0
        %v2812 = vsel %vm1589, %v2686, 0
        %v2815 = vsel %vm1589, %v2689, 0
        %v2818 = vsel %vm1589, %v2692, 0
        %v2821 = vsel %vm1589, %v2695, 0
        %v2824 = vsel %vm1589, %v2698, 0
        %2826 = vmatpush.xpose.msra.mxu0 %v2824
        %2827 = vmatpush.xpose.msra.mxu0 %v2821
        %2828 = vmatpush.xpose.msra.mxu0 %v2818
        %2829 = vmatpush.xpose.msra.mxu0 %v2815
        %2830 = vmatpush.xpose.msra.mxu0 %v2812
        %2831 = vmatpush.xpose.msra.mxu0 %v2809
        %2832 = vmatpush.xpose.msra.mxu0 %v2806
        %2833 = vmatpush.xpose.msra.mxu0 %v2803
        %2834 = vmatpush.xpose.msra.mxu0 %v2800
        %2835 = vmatpush.xpose.msra.mxu0 %v2797
        %2836 = vmatpush.xpose.msra.mxu0 %v2794
        %2837 = vmatpush.xpose.msra.mxu0 %v2791
        %2838 = vmatpush.xpose.msra.mxu0 %v2788
        %2839 = vmatpush.xpose.msra.mxu0 %v2785
        %2840 = vmatpush.xpose.msra.mxu0 %v2782
        %2841 = vmatpush.xpose.msra.mxu0 %v2779
        %2842 = vmatmul.f32.gmra.mxu0 %v2776
        %v2843 = vpop.f32.mrf.mxu0
        %v2844 = vadd.f32 0.0, %v2843
        %2845 = vdwg.mxu0
        %v2846 = vsel %vm1500, -1e+15, %v2844
        %2847 = vmax.xlane.f32.xlu0 %v2846
        %v2848 = vpop.xlane.xlu0 %2847
        %v2849 = vsub.f32 %v2846, %v2848
        %v2850 = vmul.f32 %v2849, 1.442695
        %v2851 = vpow.pop %v2850
        %2852 = vadd.xlane.f32.xlu0 %v2851
        %v2853 = vpop.xlane.xlu0 %2852
        %v2854 = vrcp.pop %v2853
        %v2855 = vmul.f32 %v2853, %v2854
        %v2856 = vsub.f32 1.0, %v2855
        %v2857 = vmul.f32 %v2854, %v2856
        %v2858 = vadd.f32 %v2854, %v2857
        %vm2859 = vweird.f32 %v2853
        %vm2860 = vweird.f32 %v2854
        %vm2861 = vmor %vm2859, %vm2860
        %v2862 = vsel %vm2861, %v2854, %v2858
        %v2863 = vand.u32 2147483647, %v2853
        %vm2864 = vcmp.eq.f32.partialorder %v2863, 8.507059e+37
        %v2865 = vand.u32 %v2853, 2147483648
        %v2866 = vor.u32 1.1754944e-38, %v2865
        %v2867 = vsel %vm2864, %v2866, %v2862
        %v2868 = vmul.f32 %v2851, %v2867
        // Predicated region
        $region149: #{decoder_forward.2} parent=139 // pred_check
          %p2869 = pneg %p2569
        $region150: #{decoder_forward.2} parent=139 // pred_check_branch
          %2871 = sbr.rel (%p2869) target = $region152
        $region151: #{decoder_forward.2} parent=139 // pred_region
          %s2872 = scalar_lea.vmem %s1345, 8 [#allocation3]
          %2873 = vst [vmem:[%s2872] sm:$0xff] %v2868
        $region152: #{decoder_forward.2} parent=139 // pred_fallthru
          _
        %2874 = vmatpush.msra.mxu0 %v2773
        %2875 = vmatpush.msra.mxu0 %v2770
        %2876 = vmatpush.msra.mxu0 %v2767
        %2877 = vmatpush.msra.mxu0 %v2764
        %2878 = vmatpush.msra.mxu0 %v2761
        %2879 = vmatpush.msra.mxu0 %v2758
        %2880 = vmatpush.msra.mxu0 %v2755
        %2881 = vmatpush.msra.mxu0 %v2752
        %2882 = vmatpush.msra.mxu0 %v2749
        %2883 = vmatpush.msra.mxu0 %v2746
        %2884 = vmatpush.msra.mxu0 %v2743
        %2885 = vmatpush.msra.mxu0 %v2740
        %2886 = vmatpush.msra.mxu0 %v2737
        %2887 = vmatpush.msra.mxu0 %v2734
        %2888 = vmatpush.msra.mxu0 %v2731
        %2889 = vmatpush.msra.mxu0 %v2728
        %2890 = vmatmul.f32.gmra.mxu0 %v2868
        %v2891 = vpop.f32.mrf.mxu0
        %v2892 = vadd.f32 0.0, %v2891
        %2893 = vdwg.mxu0
        %s2894 = scalar_lea.vmem %s1434, 8
        %v2895 = vld [vmem:[%s2894] sm:$0xff]
        %v2897 = vsel %vm1589, %v2892, 0
        %2899 = vmatpush.msra.mxu0 0.0
        %2900 = vmatpush.msra.mxu0 0.0
        %2901 = vmatpush.msra.mxu0 0.0
        %2902 = vmatpush.msra.mxu0 0.0
        %2903 = vmatpush.msra.mxu0 0.0
        %2904 = vmatpush.msra.mxu0 0.0
        %2905 = vmatpush.msra.mxu0 0.0
        %2906 = vmatpush.msra.mxu0 0.0
        %2907 = vmatpush.msra.mxu0 0.0
        %2908 = vmatpush.msra.mxu0 0.0
        %2909 = vmatpush.msra.mxu0 0.0
        %2910 = vmatpush.msra.mxu0 0.0
        %2911 = vmatpush.msra.mxu0 0.0
        %2912 = vmatpush.msra.mxu0 0.0
        %2913 = vmatpush.msra.mxu0 0.0
        %2914 = vmatpush.msra.mxu0 %v2895
        %2915 = vmatmul.f32.gmra.mxu0 %v2897
        %v2916 = vpop.f32.mrf.mxu0
        %v2917 = vadd.f32 0.0, %v2916
        %2918 = vdwg.mxu0
        %v2920 = vsel %vm1589, %v2592, 0
        %2922 = vmatpush.msra.mxu0 0.0
        %2923 = vmatpush.msra.mxu0 0.0
        %2924 = vmatpush.msra.mxu0 0.0
        %2925 = vmatpush.msra.mxu0 0.0
        %2926 = vmatpush.msra.mxu0 0.0
        %2927 = vmatpush.msra.mxu0 0.0
        %2928 = vmatpush.msra.mxu0 0.0
        %2929 = vmatpush.msra.mxu0 0.0
        %2930 = vmatpush.msra.mxu0 0.0
        %2931 = vmatpush.msra.mxu0 0.0
        %2932 = vmatpush.msra.mxu0 0.0
        %2933 = vmatpush.msra.mxu0 0.0
        %2934 = vmatpush.msra.mxu0 0.0
        %2935 = vmatpush.msra.mxu0 0.0
        %2936 = vmatpush.msra.mxu0 0.0
        %2937 = vmatpush.msra.mxu0 %v2594
        %2938 = vmatmul.f32.gmra.mxu0 %v2920
        %v2939 = vpop.f32.mrf.mxu0
        %v2940 = vadd.f32 %v2917, %v2939
        %2941 = vdwg.mxu0
        %s2942 = scalar_lea.vmem %s1407, 64
        %v2943 = vld [vmem:[%s2942] sm:$0xff]
        %v2944 = vld [vmem:[%s2942 + $0x8] sm:$0xff]
        %v2945 = vld [vmem:[%s2942 + $0x10] sm:$0xff]
        %v2946 = vld [vmem:[%s2942 + $0x18] sm:$0xff]
        %s2947 = scalar_lea.vmem %s1411, 2
        %v2948 = vld [vmem:[%s2947] sm:$0x1]
        %v2950 = vperm.slane %v2948, 0
        %2952 = vmatpush.msra.mxu0 0.0
        %2953 = vmatpush.msra.mxu0 0.0
        %2954 = vmatpush.msra.mxu0 0.0
        %2955 = vmatpush.msra.mxu0 0.0
        %2956 = vmatpush.msra.mxu0 0.0
        %2957 = vmatpush.msra.mxu0 0.0
        %2958 = vmatpush.msra.mxu0 0.0
        %2959 = vmatpush.msra.mxu0 0.0
        %2960 = vmatpush.msra.mxu0 0.0
        %2961 = vmatpush.msra.mxu0 0.0
        %2962 = vmatpush.msra.mxu0 0.0
        %2963 = vmatpush.msra.mxu0 0.0
        %2964 = vmatpush.msra.mxu0 %v2946
        %2965 = vmatpush.msra.mxu0 %v2945
        %2966 = vmatpush.msra.mxu0 %v2944
        %2967 = vmatpush.msra.mxu0 %v2943
        %2968 = vmatmul.f32.gmra.mxu0 %v2259
        %v2969 = vpop.f32.mrf.mxu0
        %v2970 = vadd.f32 %v2950, %v2969
        %2971 = vdwg.mxu0
        %s2972 = scalar_lea.vmem %s1416, 64
        %v2973 = vld [vmem:[%s2972] sm:$0xff]
        %v2974 = vld [vmem:[%s2972 + $0x8] sm:$0xff]
        %v2975 = vld [vmem:[%s2972 + $0x10] sm:$0xff]
        %v2976 = vld [vmem:[%s2972 + $0x18] sm:$0xff]
        %s2977 = scalar_lea.vmem %s1420, 2
        %v2978 = vld [vmem:[%s2977] sm:$0x1]
        %v2980 = vperm.slane %v2978, 0
        %2982 = vmatpush.msra.mxu0 0.0
        %2983 = vmatpush.msra.mxu0 0.0
        %2984 = vmatpush.msra.mxu0 0.0
        %2985 = vmatpush.msra.mxu0 0.0
        %2986 = vmatpush.msra.mxu0 0.0
        %2987 = vmatpush.msra.mxu0 0.0
        %2988 = vmatpush.msra.mxu0 0.0
        %2989 = vmatpush.msra.mxu0 0.0
        %2990 = vmatpush.msra.mxu0 0.0
        %2991 = vmatpush.msra.mxu0 0.0
        %2992 = vmatpush.msra.mxu0 0.0
        %2993 = vmatpush.msra.mxu0 0.0
        %2994 = vmatpush.msra.mxu0 %v2976
        %2995 = vmatpush.msra.mxu0 %v2975
        %2996 = vmatpush.msra.mxu0 %v2974
        %2997 = vmatpush.msra.mxu0 %v2973
        %2998 = vmatmul.f32.gmra.mxu0 %v2290
        %v2999 = vpop.f32.mrf.mxu0
        %v3000 = vadd.f32 %v2980, %v2999
        %3001 = vmatmul.f32.gmra.mxu0 %v2293
        %v3002 = vpop.f32.mrf.mxu0
        %v3003 = vadd.f32 %v2980, %v3002
        %3004 = vmatmul.f32.gmra.mxu0 %v2296
        %v3005 = vpop.f32.mrf.mxu0
        %v3006 = vadd.f32 %v2980, %v3005
        %3007 = vmatmul.f32.gmra.mxu0 %v2299
        %v3008 = vpop.f32.mrf.mxu0
        %v3009 = vadd.f32 %v2980, %v3008
        %3010 = vmatmul.f32.gmra.mxu0 %v2302
        %v3011 = vpop.f32.mrf.mxu0
        %v3012 = vadd.f32 %v2980, %v3011
        %3013 = vmatmul.f32.gmra.mxu0 %v2305
        %v3014 = vpop.f32.mrf.mxu0
        %v3015 = vadd.f32 %v2980, %v3014
        %3016 = vmatmul.f32.gmra.mxu0 %v2308
        %v3017 = vpop.f32.mrf.mxu0
        %v3018 = vadd.f32 %v2980, %v3017
        %3019 = vmatmul.f32.gmra.mxu0 %v2311
        %v3020 = vpop.f32.mrf.mxu0
        %v3021 = vadd.f32 %v2980, %v3020
        %3022 = vmatmul.f32.gmra.mxu0 %v2314
        %v3023 = vpop.f32.mrf.mxu0
        %v3024 = vadd.f32 %v2980, %v3023
        %3025 = vmatmul.f32.gmra.mxu0 %v2317
        %v3026 = vpop.f32.mrf.mxu0
        %v3027 = vadd.f32 %v2980, %v3026
        %3028 = vmatmul.f32.gmra.mxu0 %v2320
        %v3029 = vpop.f32.mrf.mxu0
        %v3030 = vadd.f32 %v2980, %v3029
        %3031 = vmatmul.f32.gmra.mxu0 %v2323
        %v3032 = vpop.f32.mrf.mxu0
        %v3033 = vadd.f32 %v2980, %v3032
        %3034 = vmatmul.f32.gmra.mxu0 %v2326
        %v3035 = vpop.f32.mrf.mxu0
        %v3036 = vadd.f32 %v2980, %v3035
        %3037 = vmatmul.f32.gmra.mxu0 %v2329
        %v3038 = vpop.f32.mrf.mxu0
        %v3039 = vadd.f32 %v2980, %v3038
        %3040 = vmatmul.f32.gmra.mxu0 %v2332
        %v3041 = vpop.f32.mrf.mxu0
        %v3042 = vadd.f32 %v2980, %v3041
        %3043 = vmatmul.f32.gmra.mxu0 %v2335
        %v3044 = vpop.f32.mrf.mxu0
        %v3045 = vadd.f32 %v2980, %v3044
        %3046 = vdwg.mxu0
        %s3047 = scalar_lea.vmem %s1425, 64
        %v3048 = vld [vmem:[%s3047] sm:$0xff]
        %v3049 = vld [vmem:[%s3047 + $0x8] sm:$0xff]
        %v3050 = vld [vmem:[%s3047 + $0x10] sm:$0xff]
        %v3051 = vld [vmem:[%s3047 + $0x18] sm:$0xff]
        %s3052 = scalar_lea.vmem %s1429, 2
        %v3053 = vld [vmem:[%s3052] sm:$0x1]
        %v3055 = vperm.slane %v3053, 0
        %3057 = vmatpush.msra.mxu0 0.0
        %3058 = vmatpush.msra.mxu0 0.0
        %3059 = vmatpush.msra.mxu0 0.0
        %3060 = vmatpush.msra.mxu0 0.0
        %3061 = vmatpush.msra.mxu0 0.0
        %3062 = vmatpush.msra.mxu0 0.0
        %3063 = vmatpush.msra.mxu0 0.0
        %3064 = vmatpush.msra.mxu0 0.0
        %3065 = vmatpush.msra.mxu0 0.0
        %3066 = vmatpush.msra.mxu0 0.0
        %3067 = vmatpush.msra.mxu0 0.0
        %3068 = vmatpush.msra.mxu0 0.0
        %3069 = vmatpush.msra.mxu0 %v3051
        %3070 = vmatpush.msra.mxu0 %v3050
        %3071 = vmatpush.msra.mxu0 %v3049
        %3072 = vmatpush.msra.mxu0 %v3048
        %3073 = vmatmul.f32.gmra.mxu0 %v2290
        %v3074 = vpop.f32.mrf.mxu0
        %v3075 = vadd.f32 %v3055, %v3074
        %3076 = vmatmul.f32.gmra.mxu0 %v2293
        %v3077 = vpop.f32.mrf.mxu0
        %v3078 = vadd.f32 %v3055, %v3077
        %3079 = vmatmul.f32.gmra.mxu0 %v2296
        %v3080 = vpop.f32.mrf.mxu0
        %v3081 = vadd.f32 %v3055, %v3080
        %3082 = vmatmul.f32.gmra.mxu0 %v2299
        %v3083 = vpop.f32.mrf.mxu0
        %v3084 = vadd.f32 %v3055, %v3083
        %3085 = vmatmul.f32.gmra.mxu0 %v2302
        %v3086 = vpop.f32.mrf.mxu0
        %v3087 = vadd.f32 %v3055, %v3086
        %3088 = vmatmul.f32.gmra.mxu0 %v2305
        %v3089 = vpop.f32.mrf.mxu0
        %v3090 = vadd.f32 %v3055, %v3089
        %3091 = vmatmul.f32.gmra.mxu0 %v2308
        %v3092 = vpop.f32.mrf.mxu0
        %v3093 = vadd.f32 %v3055, %v3092
        %3094 = vmatmul.f32.gmra.mxu0 %v2311
        %v3095 = vpop.f32.mrf.mxu0
        %v3096 = vadd.f32 %v3055, %v3095
        %3097 = vmatmul.f32.gmra.mxu0 %v2314
        %v3098 = vpop.f32.mrf.mxu0
        %v3099 = vadd.f32 %v3055, %v3098
        %3100 = vmatmul.f32.gmra.mxu0 %v2317
        %v3101 = vpop.f32.mrf.mxu0
        %v3102 = vadd.f32 %v3055, %v3101
        %3103 = vmatmul.f32.gmra.mxu0 %v2320
        %v3104 = vpop.f32.mrf.mxu0
        %v3105 = vadd.f32 %v3055, %v3104
        %3106 = vmatmul.f32.gmra.mxu0 %v2323
        %v3107 = vpop.f32.mrf.mxu0
        %v3108 = vadd.f32 %v3055, %v3107
        %3109 = vmatmul.f32.gmra.mxu0 %v2326
        %v3110 = vpop.f32.mrf.mxu0
        %v3111 = vadd.f32 %v3055, %v3110
        %3112 = vmatmul.f32.gmra.mxu0 %v2329
        %v3113 = vpop.f32.mrf.mxu0
        %v3114 = vadd.f32 %v3055, %v3113
        %3115 = vmatmul.f32.gmra.mxu0 %v2332
        %v3116 = vpop.f32.mrf.mxu0
        %v3117 = vadd.f32 %v3055, %v3116
        %3118 = vmatmul.f32.gmra.mxu0 %v2335
        %v3119 = vpop.f32.mrf.mxu0
        %v3120 = vadd.f32 %v3055, %v3119
        %3121 = vdwg.mxu0
        %v3123 = vsel %vm1589, %v2970, 0
        %v3126 = vsel %vm1589, %v3000, 0
        %v3129 = vsel %vm1589, %v3003, 0
        %v3132 = vsel %vm1589, %v3006, 0
        %v3135 = vsel %vm1589, %v3009, 0
        %v3138 = vsel %vm1589, %v3012, 0
        %v3141 = vsel %vm1589, %v3015, 0
        %v3144 = vsel %vm1589, %v3018, 0
        %v3147 = vsel %vm1589, %v3021, 0
        %v3150 = vsel %vm1589, %v3024, 0
        %v3153 = vsel %vm1589, %v3027, 0
        %v3156 = vsel %vm1589, %v3030, 0
        %v3159 = vsel %vm1589, %v3033, 0
        %v3162 = vsel %vm1589, %v3036, 0
        %v3165 = vsel %vm1589, %v3039, 0
        %v3168 = vsel %vm1589, %v3042, 0
        %v3171 = vsel %vm1589, %v3045, 0
        %3173 = vmatpush.xpose.msra.mxu0 %v3171
        %3174 = vmatpush.xpose.msra.mxu0 %v3168
        %3175 = vmatpush.xpose.msra.mxu0 %v3165
        %3176 = vmatpush.xpose.msra.mxu0 %v3162
        %3177 = vmatpush.xpose.msra.mxu0 %v3159
        %3178 = vmatpush.xpose.msra.mxu0 %v3156
        %3179 = vmatpush.xpose.msra.mxu0 %v3153
        %3180 = vmatpush.xpose.msra.mxu0 %v3150
        %3181 = vmatpush.xpose.msra.mxu0 %v3147
        %3182 = vmatpush.xpose.msra.mxu0 %v3144
        %3183 = vmatpush.xpose.msra.mxu0 %v3141
        %3184 = vmatpush.xpose.msra.mxu0 %v3138
        %3185 = vmatpush.xpose.msra.mxu0 %v3135
        %3186 = vmatpush.xpose.msra.mxu0 %v3132
        %3187 = vmatpush.xpose.msra.mxu0 %v3129
        %3188 = vmatpush.xpose.msra.mxu0 %v3126
        %3189 = vmatmul.f32.gmra.mxu0 %v3123
        %v3190 = vpop.f32.mrf.mxu0
        %v3191 = vadd.f32 0.0, %v3190
        %3192 = vdwg.mxu0
        %v3193 = vsel %vm1500, -1e+15, %v3191
        %3194 = vmax.xlane.f32.xlu0 %v3193
        %v3195 = vpop.xlane.xlu0 %3194
        %v3196 = vsub.f32 %v3193, %v3195
        %v3197 = vmul.f32 %v3196, 1.442695
        %v3198 = vpow.pop %v3197
        %3199 = vadd.xlane.f32.xlu0 %v3198
        %v3200 = vpop.xlane.xlu0 %3199
        %v3201 = vrcp.pop %v3200
        %v3202 = vmul.f32 %v3200, %v3201
        %v3203 = vsub.f32 1.0, %v3202
        %v3204 = vmul.f32 %v3201, %v3203
        %v3205 = vadd.f32 %v3201, %v3204
        %vm3206 = vweird.f32 %v3200
        %vm3207 = vweird.f32 %v3201
        %vm3208 = vmor %vm3206, %vm3207
        %v3209 = vsel %vm3208, %v3201, %v3205
        %v3210 = vand.u32 2147483647, %v3200
        %vm3211 = vcmp.eq.f32.partialorder %v3210, 8.507059e+37
        %v3212 = vand.u32 %v3200, 2147483648
        %v3213 = vor.u32 1.1754944e-38, %v3212
        %v3214 = vsel %vm3211, %v3213, %v3209
        %v3215 = vmul.f32 %v3198, %v3214
        // Predicated region
        $region153: #{decoder_forward.2} parent=139 // pred_check
          %p3216 = pneg %p2569
        $region154: #{decoder_forward.2} parent=139 // pred_check_branch
          %3218 = sbr.rel (%p3216) target = $region156
        $region155: #{decoder_forward.2} parent=139 // pred_region
          %s3219 = scalar_lea.vmem %s1345, 16 [#allocation3]
          %3220 = vst [vmem:[%s3219] sm:$0xff] %v3215
        $region156: #{decoder_forward.2} parent=139 // pred_fallthru
          _
        %3221 = vmatpush.msra.mxu0 %v3120
        %3222 = vmatpush.msra.mxu0 %v3117
        %3223 = vmatpush.msra.mxu0 %v3114
        %3224 = vmatpush.msra.mxu0 %v3111
        %3225 = vmatpush.msra.mxu0 %v3108
        %3226 = vmatpush.msra.mxu0 %v3105
        %3227 = vmatpush.msra.mxu0 %v3102
        %3228 = vmatpush.msra.mxu0 %v3099
        %3229 = vmatpush.msra.mxu0 %v3096
        %3230 = vmatpush.msra.mxu0 %v3093
        %3231 = vmatpush.msra.mxu0 %v3090
        %3232 = vmatpush.msra.mxu0 %v3087
        %3233 = vmatpush.msra.mxu0 %v3084
        %3234 = vmatpush.msra.mxu0 %v3081
        %3235 = vmatpush.msra.mxu0 %v3078
        %3236 = vmatpush.msra.mxu0 %v3075
        %3237 = vmatmul.f32.gmra.mxu0 %v3215
        %v3238 = vpop.f32.mrf.mxu0
        %v3239 = vadd.f32 0.0, %v3238
        %3240 = vdwg.mxu0
        %s3241 = scalar_lea.vmem %s1434, 16
        %v3242 = vld [vmem:[%s3241] sm:$0xff]
        %v3244 = vsel %vm1589, %v3239, 0
        %3246 = vmatpush.msra.mxu0 0.0
        %3247 = vmatpush.msra.mxu0 0.0
        %3248 = vmatpush.msra.mxu0 0.0
        %3249 = vmatpush.msra.mxu0 0.0
        %3250 = vmatpush.msra.mxu0 0.0
        %3251 = vmatpush.msra.mxu0 0.0
        %3252 = vmatpush.msra.mxu0 0.0
        %3253 = vmatpush.msra.mxu0 0.0
        %3254 = vmatpush.msra.mxu0 0.0
        %3255 = vmatpush.msra.mxu0 0.0
        %3256 = vmatpush.msra.mxu0 0.0
        %3257 = vmatpush.msra.mxu0 0.0
        %3258 = vmatpush.msra.mxu0 0.0
        %3259 = vmatpush.msra.mxu0 0.0
        %3260 = vmatpush.msra.mxu0 0.0
        %3261 = vmatpush.msra.mxu0 %v3242
        %3262 = vmatmul.f32.gmra.mxu0 %v3244
        %v3263 = vpop.f32.mrf.mxu0
        %v3264 = vadd.f32 0.0, %v3263
        %3265 = vdwg.mxu0
        %v3266 = vadd.f32 %v2940, %v3264
        %s3267 = scalar_lea.vmem %s1407, 96
        %v3268 = vld [vmem:[%s3267] sm:$0xff]
        %v3269 = vld [vmem:[%s3267 + $0x8] sm:$0xff]
        %v3270 = vld [vmem:[%s3267 + $0x10] sm:$0xff]
        %v3271 = vld [vmem:[%s3267 + $0x18] sm:$0xff]
        %s3272 = scalar_lea.vmem %s1411, 3
        %v3273 = vld [vmem:[%s3272] sm:$0x1]
        %v3275 = vperm.slane %v3273, 0
        %3277 = vmatpush.msra.mxu0 0.0
        %3278 = vmatpush.msra.mxu0 0.0
        %3279 = vmatpush.msra.mxu0 0.0
        %3280 = vmatpush.msra.mxu0 0.0
        %3281 = vmatpush.msra.mxu0 0.0
        %3282 = vmatpush.msra.mxu0 0.0
        %3283 = vmatpush.msra.mxu0 0.0
        %3284 = vmatpush.msra.mxu0 0.0
        %3285 = vmatpush.msra.mxu0 0.0
        %3286 = vmatpush.msra.mxu0 0.0
        %3287 = vmatpush.msra.mxu0 0.0
        %3288 = vmatpush.msra.mxu0 0.0
        %3289 = vmatpush.msra.mxu0 %v3271
        %3290 = vmatpush.msra.mxu0 %v3270
        %3291 = vmatpush.msra.mxu0 %v3269
        %3292 = vmatpush.msra.mxu0 %v3268
        %3293 = vmatmul.f32.gmra.mxu0 %v2259
        %v3294 = vpop.f32.mrf.mxu0
        %v3295 = vadd.f32 %v3275, %v3294
        %3296 = vdwg.mxu0
        %s3297 = scalar_lea.vmem %s1416, 96
        %v3298 = vld [vmem:[%s3297] sm:$0xff]
        %v3299 = vld [vmem:[%s3297 + $0x8] sm:$0xff]
        %v3300 = vld [vmem:[%s3297 + $0x10] sm:$0xff]
        %v3301 = vld [vmem:[%s3297 + $0x18] sm:$0xff]
        %s3302 = scalar_lea.vmem %s1420, 3
        %v3303 = vld [vmem:[%s3302] sm:$0x1]
        %v3305 = vperm.slane %v3303, 0
        %3307 = vmatpush.msra.mxu0 0.0
        %3308 = vmatpush.msra.mxu0 0.0
        %3309 = vmatpush.msra.mxu0 0.0
        %3310 = vmatpush.msra.mxu0 0.0
        %3311 = vmatpush.msra.mxu0 0.0
        %3312 = vmatpush.msra.mxu0 0.0
        %3313 = vmatpush.msra.mxu0 0.0
        %3314 = vmatpush.msra.mxu0 0.0
        %3315 = vmatpush.msra.mxu0 0.0
        %3316 = vmatpush.msra.mxu0 0.0
        %3317 = vmatpush.msra.mxu0 0.0
        %3318 = vmatpush.msra.mxu0 0.0
        %3319 = vmatpush.msra.mxu0 %v3301
        %3320 = vmatpush.msra.mxu0 %v3300
        %3321 = vmatpush.msra.mxu0 %v3299
        %3322 = vmatpush.msra.mxu0 %v3298
        %3323 = vmatmul.f32.gmra.mxu0 %v2290
        %v3324 = vpop.f32.mrf.mxu0
        %v3325 = vadd.f32 %v3305, %v3324
        %3326 = vmatmul.f32.gmra.mxu0 %v2293
        %v3327 = vpop.f32.mrf.mxu0
        %v3328 = vadd.f32 %v3305, %v3327
        %3329 = vmatmul.f32.gmra.mxu0 %v2296
        %v3330 = vpop.f32.mrf.mxu0
        %v3331 = vadd.f32 %v3305, %v3330
        %3332 = vmatmul.f32.gmra.mxu0 %v2299
        %v3333 = vpop.f32.mrf.mxu0
        %v3334 = vadd.f32 %v3305, %v3333
        %3335 = vmatmul.f32.gmra.mxu0 %v2302
        %v3336 = vpop.f32.mrf.mxu0
        %v3337 = vadd.f32 %v3305, %v3336
        %3338 = vmatmul.f32.gmra.mxu0 %v2305
        %v3339 = vpop.f32.mrf.mxu0
        %v3340 = vadd.f32 %v3305, %v3339
        %3341 = vmatmul.f32.gmra.mxu0 %v2308
        %v3342 = vpop.f32.mrf.mxu0
        %v3343 = vadd.f32 %v3305, %v3342
        %3344 = vmatmul.f32.gmra.mxu0 %v2311
        %v3345 = vpop.f32.mrf.mxu0
        %v3346 = vadd.f32 %v3305, %v3345
        %3347 = vmatmul.f32.gmra.mxu0 %v2314
        %v3348 = vpop.f32.mrf.mxu0
        %v3349 = vadd.f32 %v3305, %v3348
        %3350 = vmatmul.f32.gmra.mxu0 %v2317
        %v3351 = vpop.f32.mrf.mxu0
        %v3352 = vadd.f32 %v3305, %v3351
        %3353 = vmatmul.f32.gmra.mxu0 %v2320
        %v3354 = vpop.f32.mrf.mxu0
        %v3355 = vadd.f32 %v3305, %v3354
        %3356 = vmatmul.f32.gmra.mxu0 %v2323
        %v3357 = vpop.f32.mrf.mxu0
        %v3358 = vadd.f32 %v3305, %v3357
        %3359 = vmatmul.f32.gmra.mxu0 %v2326
        %v3360 = vpop.f32.mrf.mxu0
        %v3361 = vadd.f32 %v3305, %v3360
        %3362 = vmatmul.f32.gmra.mxu0 %v2329
        %v3363 = vpop.f32.mrf.mxu0
        %v3364 = vadd.f32 %v3305, %v3363
        %3365 = vmatmul.f32.gmra.mxu0 %v2332
        %v3366 = vpop.f32.mrf.mxu0
        %v3367 = vadd.f32 %v3305, %v3366
        %3368 = vmatmul.f32.gmra.mxu0 %v2335
        %v3369 = vpop.f32.mrf.mxu0
        %v3370 = vadd.f32 %v3305, %v3369
        %3371 = vdwg.mxu0
        %s3372 = scalar_lea.vmem %s1425, 96
        %v3373 = vld [vmem:[%s3372] sm:$0xff]
        %v3374 = vld [vmem:[%s3372 + $0x8] sm:$0xff]
        %v3375 = vld [vmem:[%s3372 + $0x10] sm:$0xff]
        %v3376 = vld [vmem:[%s3372 + $0x18] sm:$0xff]
        %s3377 = scalar_lea.vmem %s1429, 3
        %v3378 = vld [vmem:[%s3377] sm:$0x1]
        %v3380 = vperm.slane %v3378, 0
        %3382 = vmatpush.msra.mxu0 0.0
        %3383 = vmatpush.msra.mxu0 0.0
        %3384 = vmatpush.msra.mxu0 0.0
        %3385 = vmatpush.msra.mxu0 0.0
        %3386 = vmatpush.msra.mxu0 0.0
        %3387 = vmatpush.msra.mxu0 0.0
        %3388 = vmatpush.msra.mxu0 0.0
        %3389 = vmatpush.msra.mxu0 0.0
        %3390 = vmatpush.msra.mxu0 0.0
        %3391 = vmatpush.msra.mxu0 0.0
        %3392 = vmatpush.msra.mxu0 0.0
        %3393 = vmatpush.msra.mxu0 0.0
        %3394 = vmatpush.msra.mxu0 %v3376
        %3395 = vmatpush.msra.mxu0 %v3375
        %3396 = vmatpush.msra.mxu0 %v3374
        %3397 = vmatpush.msra.mxu0 %v3373
        %3398 = vmatmul.f32.gmra.mxu0 %v2290
        %v3399 = vpop.f32.mrf.mxu0
        %v3400 = vadd.f32 %v3380, %v3399
        %3401 = vmatmul.f32.gmra.mxu0 %v2293
        %v3402 = vpop.f32.mrf.mxu0
        %v3403 = vadd.f32 %v3380, %v3402
        %3404 = vmatmul.f32.gmra.mxu0 %v2296
        %v3405 = vpop.f32.mrf.mxu0
        %v3406 = vadd.f32 %v3380, %v3405
        %3407 = vmatmul.f32.gmra.mxu0 %v2299
        %v3408 = vpop.f32.mrf.mxu0
        %v3409 = vadd.f32 %v3380, %v3408
        %3410 = vmatmul.f32.gmra.mxu0 %v2302
        %v3411 = vpop.f32.mrf.mxu0
        %v3412 = vadd.f32 %v3380, %v3411
        %3413 = vmatmul.f32.gmra.mxu0 %v2305
        %v3414 = vpop.f32.mrf.mxu0
        %v3415 = vadd.f32 %v3380, %v3414
        %3416 = vmatmul.f32.gmra.mxu0 %v2308
        %v3417 = vpop.f32.mrf.mxu0
        %v3418 = vadd.f32 %v3380, %v3417
        %3419 = vmatmul.f32.gmra.mxu0 %v2311
        %v3420 = vpop.f32.mrf.mxu0
        %v3421 = vadd.f32 %v3380, %v3420
        %3422 = vmatmul.f32.gmra.mxu0 %v2314
        %v3423 = vpop.f32.mrf.mxu0
        %v3424 = vadd.f32 %v3380, %v3423
        %3425 = vmatmul.f32.gmra.mxu0 %v2317
        %v3426 = vpop.f32.mrf.mxu0
        %v3427 = vadd.f32 %v3380, %v3426
        %3428 = vmatmul.f32.gmra.mxu0 %v2320
        %v3429 = vpop.f32.mrf.mxu0
        %v3430 = vadd.f32 %v3380, %v3429
        %3431 = vmatmul.f32.gmra.mxu0 %v2323
        %v3432 = vpop.f32.mrf.mxu0
        %v3433 = vadd.f32 %v3380, %v3432
        %3434 = vmatmul.f32.gmra.mxu0 %v2326
        %v3435 = vpop.f32.mrf.mxu0
        %v3436 = vadd.f32 %v3380, %v3435
        %3437 = vmatmul.f32.gmra.mxu0 %v2329
        %v3438 = vpop.f32.mrf.mxu0
        %v3439 = vadd.f32 %v3380, %v3438
        %3440 = vmatmul.f32.gmra.mxu0 %v2332
        %v3441 = vpop.f32.mrf.mxu0
        %v3442 = vadd.f32 %v3380, %v3441
        %3443 = vmatmul.f32.gmra.mxu0 %v2335
        %v3444 = vpop.f32.mrf.mxu0
        %v3445 = vadd.f32 %v3380, %v3444
        %3446 = vdwg.mxu0
        %v3448 = vsel %vm1589, %v3295, 0
        %v3451 = vsel %vm1589, %v3325, 0
        %v3454 = vsel %vm1589, %v3328, 0
        %v3457 = vsel %vm1589, %v3331, 0
        %v3460 = vsel %vm1589, %v3334, 0
        %v3463 = vsel %vm1589, %v3337, 0
        %v3466 = vsel %vm1589, %v3340, 0
        %v3469 = vsel %vm1589, %v3343, 0
        %v3472 = vsel %vm1589, %v3346, 0
        %v3475 = vsel %vm1589, %v3349, 0
        %v3478 = vsel %vm1589, %v3352, 0
        %v3481 = vsel %vm1589, %v3355, 0
        %v3484 = vsel %vm1589, %v3358, 0
        %v3487 = vsel %vm1589, %v3361, 0
        %v3490 = vsel %vm1589, %v3364, 0
        %v3493 = vsel %vm1589, %v3367, 0
        %v3496 = vsel %vm1589, %v3370, 0
        %3498 = vmatpush.xpose.msra.mxu0 %v3496
        %3499 = vmatpush.xpose.msra.mxu0 %v3493
        %3500 = vmatpush.xpose.msra.mxu0 %v3490
        %3501 = vmatpush.xpose.msra.mxu0 %v3487
        %3502 = vmatpush.xpose.msra.mxu0 %v3484
        %3503 = vmatpush.xpose.msra.mxu0 %v3481
        %3504 = vmatpush.xpose.msra.mxu0 %v3478
        %3505 = vmatpush.xpose.msra.mxu0 %v3475
        %3506 = vmatpush.xpose.msra.mxu0 %v3472
        %3507 = vmatpush.xpose.msra.mxu0 %v3469
        %3508 = vmatpush.xpose.msra.mxu0 %v3466
        %3509 = vmatpush.xpose.msra.mxu0 %v3463
        %3510 = vmatpush.xpose.msra.mxu0 %v3460
        %3511 = vmatpush.xpose.msra.mxu0 %v3457
        %3512 = vmatpush.xpose.msra.mxu0 %v3454
        %3513 = vmatpush.xpose.msra.mxu0 %v3451
        %3514 = vmatmul.f32.gmra.mxu0 %v3448
        %v3515 = vpop.f32.mrf.mxu0
        %v3516 = vadd.f32 0.0, %v3515
        %3517 = vdwg.mxu0
        %v3518 = vsel %vm1500, -1e+15, %v3516
        %3519 = vmax.xlane.f32.xlu0 %v3518
        %v3520 = vpop.xlane.xlu0 %3519
        %v3521 = vsub.f32 %v3518, %v3520
        %v3522 = vmul.f32 %v3521, 1.442695
        %v3523 = vpow.pop %v3522
        %3524 = vadd.xlane.f32.xlu0 %v3523
        %v3525 = vpop.xlane.xlu0 %3524
        %v3526 = vrcp.pop %v3525
        %v3527 = vmul.f32 %v3525, %v3526
        %v3528 = vsub.f32 1.0, %v3527
        %v3529 = vmul.f32 %v3526, %v3528
        %v3530 = vadd.f32 %v3526, %v3529
        %vm3531 = vweird.f32 %v3525
        %vm3532 = vweird.f32 %v3526
        %vm3533 = vmor %vm3531, %vm3532
        %v3534 = vsel %vm3533, %v3526, %v3530
        %v3535 = vand.u32 2147483647, %v3525
        %vm3536 = vcmp.eq.f32.partialorder %v3535, 8.507059e+37
        %v3537 = vand.u32 %v3525, 2147483648
        %v3538 = vor.u32 1.1754944e-38, %v3537
        %v3539 = vsel %vm3536, %v3538, %v3534
        %v3540 = vmul.f32 %v3523, %v3539
        // Predicated region
        $region157: #{decoder_forward.2} parent=139 // pred_check
          %p3541 = pneg %p2569
        $region158: #{decoder_forward.2} parent=139 // pred_check_branch
          %3543 = sbr.rel (%p3541) target = $region160
        $region159: #{decoder_forward.2} parent=139 // pred_region
          %s3544 = scalar_lea.vmem %s1345, 24 [#allocation3]
          %3545 = vst [vmem:[%s3544] sm:$0xff] %v3540
        $region160: #{decoder_forward.2} parent=139 // pred_fallthru
          _
        %3546 = vmatpush.msra.mxu0 %v3445
        %3547 = vmatpush.msra.mxu0 %v3442
        %3548 = vmatpush.msra.mxu0 %v3439
        %3549 = vmatpush.msra.mxu0 %v3436
        %3550 = vmatpush.msra.mxu0 %v3433
        %3551 = vmatpush.msra.mxu0 %v3430
        %3552 = vmatpush.msra.mxu0 %v3427
        %3553 = vmatpush.msra.mxu0 %v3424
        %3554 = vmatpush.msra.mxu0 %v3421
        %3555 = vmatpush.msra.mxu0 %v3418
        %3556 = vmatpush.msra.mxu0 %v3415
        %3557 = vmatpush.msra.mxu0 %v3412
        %3558 = vmatpush.msra.mxu0 %v3409
        %3559 = vmatpush.msra.mxu0 %v3406
        %3560 = vmatpush.msra.mxu0 %v3403
        %3561 = vmatpush.msra.mxu0 %v3400
        %3562 = vmatmul.f32.gmra.mxu0 %v3540
        %v3563 = vpop.f32.mrf.mxu0
        %v3564 = vadd.f32 0.0, %v3563
        %3565 = vdwg.mxu0
        %s3566 = scalar_lea.vmem %s1434, 24
        %v3567 = vld [vmem:[%s3566] sm:$0xff]
        %v3569 = vsel %vm1589, %v3564, 0
        %3571 = vmatpush.msra.mxu0 0.0
        %3572 = vmatpush.msra.mxu0 0.0
        %3573 = vmatpush.msra.mxu0 0.0
        %3574 = vmatpush.msra.mxu0 0.0
        %3575 = vmatpush.msra.mxu0 0.0
        %3576 = vmatpush.msra.mxu0 0.0
        %3577 = vmatpush.msra.mxu0 0.0
        %3578 = vmatpush.msra.mxu0 0.0
        %3579 = vmatpush.msra.mxu0 0.0
        %3580 = vmatpush.msra.mxu0 0.0
        %3581 = vmatpush.msra.mxu0 0.0
        %3582 = vmatpush.msra.mxu0 0.0
        %3583 = vmatpush.msra.mxu0 0.0
        %3584 = vmatpush.msra.mxu0 0.0
        %3585 = vmatpush.msra.mxu0 0.0
        %3586 = vmatpush.msra.mxu0 %v3567
        %3587 = vmatmul.f32.gmra.mxu0 %v3569
        %v3588 = vpop.f32.mrf.mxu0
        %v3589 = vadd.f32 0.0, %v3588
        %3590 = vdwg.mxu0
        %v3591 = vadd.f32 %v3266, %v3589
        %v3592 = vadd.f32 %v2249, %v3591
        %v3593 = vld [vmem:[%s1437] sm:$0x1]
        %v3595 = vperm.slane %v3593, 0
        %v3597 = vadd.f32 %v3592, %v3595
        %v3598 = vld [vmem:[%s1440] sm:$0x1]
        %v3599 = vld [vmem:[%s1443] sm:$0x1]
        %v3600 = vsel %vm1509, %v3597, 0.0
        %3601 = vadd.xlane.f32.xlu0 %v3600
        %v3602 = vpop.xlane.xlu0 %3601
        %v3603 = vmul.f32 %v3602, %v2222
        %v3604 = vsub.f32 %v3597, %v3603
        %v3605 = vmul.f32 %v3604, %v3604
        %v3606 = vsel %vm1509, %v3605, 0.0
        %3607 = vadd.xlane.f32.xlu0 %v3606
        %v3608 = vpop.xlane.xlu0 %3607
        %v3609 = vmul.f32 %v3608, %v2222
        %v3610 = vadd.f32 %v3609, 1e-05
        %v3611 = vrsqrt.pop %v3610
        %v3612 = vmul.f32 %v3611, %v3610
        %v3613 = vmul.f32 %v3612, %v3611
        %v3614 = vmul.f32 0.5, %v3613
        %v3615 = vsub.f32 1.5, %v3614
        %v3616 = vmul.f32 %v3611, %v3615
        %vm3617 = vweird.f32 %v3610
        %vm3618 = vweird.f32 %v3611
        %vm3619 = vmor %vm3617, %vm3618
        %v3620 = vsel %vm3619, %v3611, %v3616
        %v3621 = vmul.f32 %v3604, %v3620
        %v3623 = vperm.slane %v3598, 0
        %v3625 = vmul.f32 %v3621, %v3623
        %v3627 = vperm.slane %v3599, 0
        %v3629 = vadd.f32 %v3625, %v3627
        %v3630 = vld [vmem:[%s1448] sm:$0xff]
        %v3631 = vld [vmem:[%s1448 + $0x8] sm:$0xff]
        %v3632 = vld [vmem:[%s1448 + $0x10] sm:$0xff]
        %v3633 = vld [vmem:[%s1448 + $0x18] sm:$0xff]
        %v3634 = vld [vmem:[%s1451] sm:$0x1]
        %v3636 = vperm.slane %v3634, 0
        %v3639 = vsel %vm1509, %v3629, 0
        %3641 = vmatpush.msra.mxu0 0.0
        %3642 = vmatpush.msra.mxu0 0.0
        %3643 = vmatpush.msra.mxu0 0.0
        %3644 = vmatpush.msra.mxu0 0.0
        %3645 = vmatpush.msra.mxu0 0.0
        %3646 = vmatpush.msra.mxu0 0.0
        %3647 = vmatpush.msra.mxu0 0.0
        %3648 = vmatpush.msra.mxu0 0.0
        %3649 = vmatpush.msra.mxu0 0.0
        %3650 = vmatpush.msra.mxu0 0.0
        %3651 = vmatpush.msra.mxu0 0.0
        %3652 = vmatpush.msra.mxu0 0.0
        %3653 = vmatpush.msra.mxu0 %v3633
        %3654 = vmatpush.msra.mxu0 %v3632
        %3655 = vmatpush.msra.mxu0 %v3631
        %3656 = vmatpush.msra.mxu0 %v3630
        %3657 = vmatmul.f32.gmra.mxu0 %v3639
        %v3658 = vpop.f32.mrf.mxu0
        %v3659 = vadd.f32 %v3636, %v3658
        %3660 = vdwg.mxu0
        %v3661 = vmax.f32 %v3659, 0.0
        %v3662 = vld [vmem:[%s1456] sm:$0xff]
        %v3663 = vld [vmem:[%s1456 + $0x8] sm:$0xff]
        %v3664 = vld [vmem:[%s1456 + $0x10] sm:$0xff]
        %v3665 = vld [vmem:[%s1456 + $0x18] sm:$0xff]
        %v3666 = vld [vmem:[%s1456 + $0x20] sm:$0xff]
        %v3667 = vld [vmem:[%s1456 + $0x28] sm:$0xff]
        %v3668 = vld [vmem:[%s1456 + $0x30] sm:$0xff]
        %v3669 = vld [vmem:[%s1456 + $0x38] sm:$0xff]
        %v3670 = vld [vmem:[%s1459] sm:$0x1]
        %v3672 = vperm.slane %v3670, 0
        %vm3674 = vcmask 523264
        %v3676 = vsel %vm3674, %v3661, 0
        %3678 = vmatpush.msra.mxu0 0.0
        %3679 = vmatpush.msra.mxu0 0.0
        %3680 = vmatpush.msra.mxu0 0.0
        %3681 = vmatpush.msra.mxu0 0.0
        %3682 = vmatpush.msra.mxu0 0.0
        %3683 = vmatpush.msra.mxu0 0.0
        %3684 = vmatpush.msra.mxu0 0.0
        %3685 = vmatpush.msra.mxu0 0.0
        %3686 = vmatpush.msra.mxu0 %v3669
        %3687 = vmatpush.msra.mxu0 %v3668
        %3688 = vmatpush.msra.mxu0 %v3667
        %3689 = vmatpush.msra.mxu0 %v3666
        %3690 = vmatpush.msra.mxu0 %v3665
        %3691 = vmatpush.msra.mxu0 %v3664
        %3692 = vmatpush.msra.mxu0 %v3663
        %3693 = vmatpush.msra.mxu0 %v3662
        %3694 = vmatmul.f32.gmra.mxu0 %v3676
        %v3695 = vpop.f32.mrf.mxu0
        %v3696 = vadd.f32 %v3672, %v3695
        %3697 = vdwg.mxu0
        %v3698 = vadd.f32 %v3629, %v3696
        %v3699 = vld [vmem:[%s1462] sm:$0x1]
        %v3700 = vld [vmem:[%s1465] sm:$0x1]
        %v3701 = vsel %vm1509, %v3698, 0.0
        %3702 = vadd.xlane.f32.xlu0 %v3701
        %v3703 = vpop.xlane.xlu0 %3702
        %v3704 = vmul.f32 %v3703, %v2222
        %v3705 = vsub.f32 %v3698, %v3704
        %v3706 = vmul.f32 %v3705, %v3705
        %v3707 = vsel %vm1509, %v3706, 0.0
        %3708 = vadd.xlane.f32.xlu0 %v3707
        %v3709 = vpop.xlane.xlu0 %3708
        %v3710 = vmul.f32 %v3709, %v2222
        %v3711 = vadd.f32 %v3710, 1e-05
        %v3712 = vrsqrt.pop %v3711
        %v3713 = vmul.f32 %v3712, %v3711
        %v3714 = vmul.f32 %v3713, %v3712
        %v3715 = vmul.f32 0.5, %v3714
        %v3716 = vsub.f32 1.5, %v3715
        %v3717 = vmul.f32 %v3712, %v3716
        %vm3718 = vweird.f32 %v3711
        %vm3719 = vweird.f32 %v3712
        %vm3720 = vmor %vm3718, %vm3719
        %v3721 = vsel %vm3720, %v3712, %v3717
        %v3722 = vmul.f32 %v3705, %v3721
        %v3724 = vperm.slane %v3699, 0
        %v3726 = vmul.f32 %v3722, %v3724
        %v3728 = vperm.slane %v3700, 0
        %v3730 = vadd.f32 %v3726, %v3728
        %3731 = vst.msk [vmem:[#allocation2] sm:$0xff] %vm1509, %v3730
        // Predicated region
        $region161: #{decoder_forward.2} parent=139 // pred_check
          %p3732 = pneg %p2569
        $region162: #{decoder_forward.2} parent=139 // pred_check_branch
          %3734 = sbr.rel (%p3732) target = $region164
        $region163: #{decoder_forward.2} parent=139 // pred_region
          %3735 = vst.msk [vmem:[%s1469] sm:$0xff] %vm1509, %v3730
        $region164: #{decoder_forward.2} parent=139 // pred_fallthru
          _
        %p3736 = scmp.lt.s32.totalorder %s82, 1
        %s3737 = scalar_select %p3736, %s82, 1
        %s3738 = smul.addr %s3737, 8
        %s3739 = scalar_lea.vmem %s61, %s3738
        %s3740 = sand.u32 %s904, 1
        %s3741 = scalar_lea.sflag [#allocation4], %s3740
        %s3742 = sand.u32 %s904, 1
        %s3743 = smul.addr %s3742, 32
        %s3744 = scalar_lea.vmem [#allocation3], %s3743
        // Predicated region
        $region165: #{decoder_forward.2} parent=139 // pred_check
          %p3745 = pneg %p888
        $region166: #{decoder_forward.2} parent=139 // pred_check_branch
          %3747 = sbr.rel (%p3745) target = $region168
        $region167: #{decoder_forward.2} parent=139 // pred_region
          _
        $region168: #{decoder_forward.2} parent=139 // pred_fallthru
          _
        // Predicated region
        $region169: #{decoder_forward.2} parent=139 // pred_check
          %p3748 = pneg %p914
        $region170: #{decoder_forward.2} parent=139 // pred_check_branch
          %3750 = sbr.rel (%p3748) target = $region172
        $region171: #{decoder_forward.2} parent=139 // pred_region
          %3752 = vsyncadd %s3741, 0
          %s3753 = smul.addr %s82, 4
          %s3754 = smul.addr %s3753, 8
          %s3755 = scalar_lea.hbm %s63, %s3754
          %s3756 = sshll.u32 %s3744, 4
          %s3757 = int_to_ptr.vmem [resolvable:$true] %s3756
          %s3758 = sshll.u32 %s3755, 4
          %s3759 = int_to_ptr.hbm [resolvable:$true] %s3758
          %3764 = dma.vmem_to_hbm [thread:$0]  %s3757, 512, %s3759, %s3741, 128, 128, 8
        $region172: #{decoder_forward.2} parent=139 // pred_fallthru
          _
      $region140: #{decoder_forward.2} parent=5 // pred_fallthru
        _
      %p3765 = scmp.le.s32.totalorder 2, %s73
      // Predicated region
      $region173: #{decoder_forward.2} parent=5 // pred_check
        %p3766 = pneg %p3765
      $region174: #{decoder_forward.2} parent=5 // pred_check_branch
        %3768 = sbr.rel (%p3766) target = $region176
      $region175: #{decoder_forward.2} parent=5 // pred_region
        %s3769 = ssub.s32 %s73, 2
        // Predicated region
        $region177: #{decoder_forward.2} parent=175 // pred_check
          %p3770 = pneg %p894
        $region178: #{decoder_forward.2} parent=175 // pred_check_branch
          %3772 = sbr.rel (%p3770) target = $region180
        $region179: #{decoder_forward.2} parent=175 // pred_region
          %p3773 = scmp.lt.s32.totalorder %s84, 1
          %s3774 = scalar_select %p3773, %s84, 1
          %s3775 = smul.addr %s3774, 8
          %s3776 = scalar_lea.vmem %s61, %s3775
        $region180: #{decoder_forward.2} parent=175 // pred_fallthru
          _
        // Predicated region
        $region181: #{decoder_forward.2} parent=175 // pred_check
          %p3777 = pneg %p920
        $region182: #{decoder_forward.2} parent=175 // pred_check_branch
          %3779 = sbr.rel (%p3777) target = $region184
        $region183: #{decoder_forward.2} parent=175 // pred_region
          %s3780 = sand.u32 %s905, 1
          %s3781 = scalar_lea.sflag [#allocation4], %s3780
          %s3782 = sand.u32 %s905, 1
          %s3783 = smul.addr %s3782, 32
          %s3784 = scalar_lea.vmem [#allocation3], %s3783
          %3786 = dma.done %s3781, 512
        $region184: #{decoder_forward.2} parent=175 // pred_fallthru
          _
      $region176: #{decoder_forward.2} parent=5 // pred_fallthru
        _
    $region6: #{decoder_forward.2} parent=1 // loop_footer
      %s77 = sadd.s32 1, %s73
    $region7: #{decoder_forward.2} parent=1 // loop_footer_branch
      %72 = sbr.rel target = $region3
    $region8: #{decoder_forward.2} parent=1 // loop_exit
      _
    %3787 = vsyncpa [#allocation4], 1
    %s3788 = scalar_lea.sflag [#allocation4], 1
    %3789 = vsyncpa %s3788, 1

</llo_original>
